<compile_context>
chip_gen: v7x
topology: tpu7x:2x2x1
jax: 0.10.0
libtpu: 0.0.40
codegen_flags: <defaults>
</compile_context>

<pallas_src>
import functools
import math

import numpy as np

import jax
import jax.numpy as jnp
from jax.experimental import pallas as pl
from jax.experimental.pallas import tpu as pltpu  # noqa: F401 (no TPU-specific API needed)


# --------------------------------------------------------------------------
# The single fused kernel
# --------------------------------------------------------------------------
def _encoder_kernel(vis_ref, rs_ref,
                    m1_ref, c1_ref, m2_ref, c2_ref, m3_ref, c3_ref,
                    m4_ref, c4_ref, m5_ref, c5_ref,
                    rw_ref, rb_ref,
                    wattn_ref, battn_ref, eexp_ref,
                    ln2g_ref, ln2b_ref, wf1_ref, bf1_ref, wf2_ref, bf2_ref,
                    lnfg_ref, lnfb_ref,
                    vcat_ref, headb_ref, mask_ref, rsum_ref, esum_ref,
                    o_ref, *, num_layers, model_dim, eps):
    # Default MXU precision (explicit choice; see header comment).
    def dot(a, b):
        return jnp.dot(a, b, preferred_element_type=jnp.float32)

    # ---- Vision path: ResNet([C,8,16,32,64,D]) as 5 exact dense operators ----
    # Each operator already contains the 3x3 stride-2 conv, the folded 1x1
    # stride-2 shortcut, and the summed biases; ReLU closes each block.
    h = vis_ref[...]                                             # (B, 16*16*C)
    h = jnp.maximum(dot(h, m1_ref[...]) + c1_ref[...], 0.0)      # (B, 8*8*8)
    h = jnp.maximum(dot(h, m2_ref[...]) + c2_ref[...], 0.0)      # (B, 4*4*16)
    h = jnp.maximum(dot(h, m3_ref[...]) + c3_ref[...], 0.0)      # (B, 2*2*32)
    h = jnp.maximum(dot(h, m4_ref[...]) + c4_ref[...], 0.0)      # (B, 64)
    kv = jnp.maximum(dot(h, m5_ref[...]) + c5_ref[...], 0.0)     # (B, D)

    # ---- All layers' cross-attention adds in one matmul (1-token softmax == 1) ----
    attn_all = dot(kv, wattn_ref[...]) + battn_ref[...]          # (B, num_layers*D)
    attn_rows = dot(eexp_ref[...], attn_all)                     # (B*L, num_layers*D)

    # ---- Robot-state embedding (Dropout = identity at eval) ----
    x = dot(rs_ref[...], rw_ref[...]) + rb_ref[...]              # (B*L, D)

    def layer_norm(v, g, b):
        mu = jnp.mean(v, axis=-1, keepdims=True)
        vc = v - mu
        var = jnp.mean(vc * vc, axis=-1, keepdims=True)
        return vc * jax.lax.rsqrt(var + eps) * g + b

    for l in range(num_layers):
        # attention residual (same add for every query row of a batch item)
        x = x + attn_rows[:, l * model_dim:(l + 1) * model_dim]
        # pre-LN feed-forward block
        hN = layer_norm(x, ln2g_ref[l], ln2b_ref[l])
        f = jnp.maximum(dot(hN, wf1_ref[l]) + bf1_ref[l], 0.0)
        x = x + dot(f, wf2_ref[l]) + bf2_ref[l]

    xf = layer_norm(x, lnfg_ref[...], lnfb_ref[...])             # final LN (B*L, D)

    # ---- Token head + final Linear, precomposed into V_cat (D, L*Z) ----
    # c[r, l*Z:(l+1)*Z] = xf[r] @ (W_token @ W_out[l]); the row-dependent block
    # is picked with a constant 0/1 mask, summed over blocks with a constant
    # (L*Z, Z) stack of identities, and rows are summed per batch item with a
    # constant (B, B*L) selector: three lane-dense matmuls, no in-kernel reshape.
    c = dot(xf, vcat_ref[...])                                   # (B*L, L*Z)
    s = dot(c * mask_ref[...], rsum_ref[...])                    # (B*L, Z)
    z = dot(esum_ref[...], s) + headb_ref[...]                   # (B, Z)
    o_ref[...] = z.astype(o_ref.dtype)


def _full_spec(shape):
    n = len(shape)
    return pl.BlockSpec(shape, lambda i, n=n: (0,) * n)


# --------------------------------------------------------------------------
# Forward pass wrapper: one pallas_call, a couple of reshape/transpose HLOs.
# --------------------------------------------------------------------------
def robot_state_vision_encoder(params, robot_state, vision):
    """robot_state: (B, L, robot_state_dim); vision: (B, C, H, W) NCHW -> (B, Z)."""
    B, L, rsd = robot_state.shape
    D = params["rw"].shape[1]
    Z = params["head_b"].shape[1]
    num_layers = params["wf1"].shape[0]

    # Layout plumbing outside the kernel (constant-shape, 3 HLOs total).
    vis_flat = jnp.transpose(vision, (0, 2, 3, 1)).reshape(B, -1)   # NHWC rows
    rs_flat = robot_state.reshape(B * L, rsd)                       # b-major rows

    # Constant 0/1 selector / mask matrices (constant-folded under jit).
    r = jnp.arange(B * L)
    eexp = (r[:, None] // L == jnp.arange(B)[None, :]).astype(jnp.float32)       # (B*L, B)
    esum = jnp.transpose(eexp)                                                   # (B, B*L)
    mask = ((jnp.arange(L * Z)[None, :] // Z) == (r % L)[:, None]).astype(jnp.float32)   # (B*L, L*Z)
    rsum = ((jnp.arange(L * Z)[:, None] % Z) == jnp.arange(Z)[None, :]).astype(jnp.float32)  # (L*Z, Z)

    args = [
        vis_flat, rs_flat,
        params["m1"], params["c1"], params["m2"], params["c2"],
        params["m3"], params["c3"], params["m4"], params["c4"],
        params["m5"], params["c5"],
        params["rw"], params["rb"],
        params["w_attn"], params["b_attn"], eexp,
        params["ln2_g"], params["ln2_b"], params["wf1"], params["bf1"],
        params["wf2"], params["bf2"],
        params["lnf_g"], params["lnf_b"],
        params["v_cat"], params["head_b"], mask, rsum, esum,
    ]

    kern = functools.partial(_encoder_kernel, num_layers=num_layers,
                             model_dim=D, eps=1e-5)
    return pl.pallas_call(
        kern,
        out_shape=jax.ShapeDtypeStruct((B, Z), jnp.float32),
        grid=(1,),                                   # one program; B is row-flattened
        in_specs=[_full_spec(a.shape) for a in args],
        out_specs=pl.BlockSpec((B, Z), lambda i: (0, 0)),
    )(*args)


# --------------------------------------------------------------------------
# Deterministic parameter initialization (synthetic, not a checkpoint).
# Conv weights are materialized as exact dense per-block operators and the
# 1x1 stride-2 shortcut / biases are folded in here (bit-equivalent up to f32
# summation order).
# --------------------------------------------------------------------------
def _conv_block_dense(key, H, W, cin, cout):
    k1, k2, k3, k4 = jax.random.split(key, 4)
    wk = np.asarray(jax.random.normal(k1, (3, 3, cin, cout), jnp.float32)) / math.sqrt(9 * cin)
    bm = 0.01 * np.asarray(jax.random.normal(k2, (cout,), jnp.float32))
    ws = np.asarray(jax.random.normal(k3, (cin, cout), jnp.float32)) / math.sqrt(cin)
    bs = 0.01 * np.asarray(jax.random.normal(k4, (cout,), jnp.float32))

    Ho = (H + 2 - 3) // 2 + 1
    Wo = (W + 2 - 3) // 2 + 1
    M = np.zeros((H * W * cin, Ho * Wo * cout), np.float32)
    for ho in range(Ho):
        for wo in range(Wo):
            out0 = (ho * Wo + wo) * cout
            # 3x3 stride-2 pad-1 taps
            for ki in range(3):
                hi = 2 * ho + ki - 1
                if hi < 0 or hi >= H:
                    continue
                for kj in range(3):
                    wi = 2 * wo + kj - 1
                    if wi < 0 or wi >= W:
                        continue
                    in0 = (hi * W + wi) * cin
                    M[in0:in0 + cin, out0:out0 + cout] += wk[ki, kj]
            # folded 1x1 stride-2 shortcut (reads pixel (2*ho, 2*wo))
            in0 = (2 * ho * W + 2 * wo) * cin
            M[in0:in0 + cin, out0:out0 + cout] += ws
    bias = np.tile(bm + bs, Ho * Wo).reshape(1, Ho * Wo * cout).astype(np.float32)
    return jnp.asarray(M), jnp.asarray(bias), Ho, Wo


def init_params(seed, *, robot_state_dim, vision_dim, vision_hw, robot_state_len,
                model_dim, trans_out_dim, z_dim, num_layers):
    key = jax.random.PRNGKey(seed)

    def nk():
        nonlocal key
        key, sub = jax.random.split(key)
        return sub

    def dense(fi, fo):
        w = jax.random.normal(nk(), (fi, fo), jnp.float32) / math.sqrt(fi)
        b = 0.01 * jax.random.normal(nk(), (fo,), jnp.float32)
        return w, b

    p = {}

    # Robot-state embedding (Dropout is identity at eval).
    w, b = dense(robot_state_dim, model_dim)
    p["rw"], p["rb"] = w, b.reshape(1, model_dim)

    # Vision ResNet([vision_dim, 8, 16, 32, 64, model_dim]) as dense operators.
    chans = [vision_dim, 8, 16, 32, 64, model_dim]
    H = W = vision_hw
    for i, (cin, cout) in enumerate(zip(chans[:-1], chans[1:]), start=1):
        M, c, H, W = _conv_block_dense(nk(), H, W, cin, cout)
        p[f"m{i}"], p[f"c{i}"] = M, c
    assert H == 1 and W == 1, "vision path must collapse to 1x1 spatial"

    # Transformer layers.  With a single K/V token the q/k projections and the
    # pre-attention LayerNorm cancel (softmax over one key == 1); Wv@Wo and the
    # biases are precomposed and lane-concatenated across layers.
    ff = 4 * model_dim
    wattn_blocks, battn_blocks = [], []
    ln2g, ln2b, wf1, bf1, wf2, bf2 = [], [], [], [], [], []
    for _ in range(num_layers):
        wv, bv = dense(model_dim, model_dim)
        wo_, bo_ = dense(model_dim, model_dim)
        wattn_blocks.append(wv @ wo_)
        battn_blocks.append(bv[None, :] @ wo_ + bo_[None, :])
        ln2g.append(jnp.ones((1, model_dim), jnp.float32))
        ln2b.append(jnp.zeros((1, model_dim), jnp.float32))
        w1, b1 = dense(model_dim, ff)
        w2, b2 = dense(ff, model_dim)
        wf1.append(w1); bf1.append(b1.reshape(1, ff))
        wf2.append(w2); bf2.append(b2.reshape(1, model_dim))
    p["w_attn"] = jnp.concatenate(wattn_blocks, axis=1)        # (D, num_layers*D)
    p["b_attn"] = jnp.concatenate(battn_blocks, axis=1)        # (1, num_layers*D)
    p["ln2_g"], p["ln2_b"] = jnp.stack(ln2g), jnp.stack(ln2b)  # (num_layers, 1, D)
    p["wf1"], p["bf1"] = jnp.stack(wf1), jnp.stack(bf1)        # (num_layers, D, F) / (num_layers, 1, F)
    p["wf2"], p["bf2"] = jnp.stack(wf2), jnp.stack(bf2)        # (num_layers, F, D) / (num_layers, 1, D)

    p["lnf_g"] = jnp.ones((1, model_dim), jnp.float32)
    p["lnf_b"] = jnp.zeros((1, model_dim), jnp.float32)

    # Token head Linear(D -> T) and final Linear(L*T -> Z), precomposed.
    tow, tob = dense(model_dim, trans_out_dim)
    ow, ob = dense(robot_state_len * trans_out_dim, z_dim)
    w3 = ow.reshape(robot_state_len, trans_out_dim, z_dim)     # (L, T, Z)
    v_blocks = [tow @ w3[l] for l in range(robot_state_len)]
    p["v_cat"] = jnp.concatenate(v_blocks, axis=1)             # (D, L*Z)
    p["head_b"] = ob[None, :] + tob[None, :] @ jnp.sum(w3, axis=0)   # (1, Z)
    return p


# --------------------------------------------------------------------------
if __name__ == "__main__":
    B = 2
    robot_state_dim = 8
    robot_state_len = 8
    vision_dim = 4
    H = W = 16
    model_dim = 32
    trans_out_dim = 16
    z_dim = 32
    num_layers = 4          # num_heads has no numerical effect with a single K/V token

    params = init_params(
        42,
        robot_state_dim=robot_state_dim,
        vision_dim=vision_dim,
        vision_hw=H,
        robot_state_len=robot_state_len,
        model_dim=model_dim,
        trans_out_dim=trans_out_dim,
        z_dim=z_dim,
        num_layers=num_layers,
    )

    key = jax.random.PRNGKey(0)
    k1, k2 = jax.random.split(key)
    robot_state = jax.random.normal(k1, (B, robot_state_len, robot_state_dim), jnp.float32)
    vision = jax.random.normal(k2, (B, vision_dim, H, W), jnp.float32)

    fwd = jax.jit(robot_state_vision_encoder)
    z = fwd(params, robot_state, vision)
    jax.block_until_ready(z)
    assert z.shape == (B, z_dim), z.shape
    assert bool(jnp.all(jnp.isfinite(z)))
    print("KERNEL_OK")
</pallas_src>

<mosaic_0001>
module attributes {stable_mosaic.version = 11 : i64} {
  func.func @_encoder_kernel(%arg0: i32, %arg1: memref<2x1024xf32, #tpu.memory_space<vmem>>, %arg2: memref<16x8xf32, #tpu.memory_space<vmem>>, %arg3: memref<1024x512xf32, #tpu.memory_space<vmem>>, %arg4: memref<1x512xf32, #tpu.memory_space<vmem>>, %arg5: memref<512x256xf32, #tpu.memory_space<vmem>>, %arg6: memref<1x256xf32, #tpu.memory_space<vmem>>, %arg7: memref<256x128xf32, #tpu.memory_space<vmem>>, %arg8: memref<1x128xf32, #tpu.memory_space<vmem>>, %arg9: memref<128x64xf32, #tpu.memory_space<vmem>>, %arg10: memref<1x64xf32, #tpu.memory_space<vmem>>, %arg11: memref<64x32xf32, #tpu.memory_space<vmem>>, %arg12: memref<1x32xf32, #tpu.memory_space<vmem>>, %arg13: memref<8x32xf32, #tpu.memory_space<vmem>>, %arg14: memref<1x32xf32, #tpu.memory_space<vmem>>, %arg15: memref<32x128xf32, #tpu.memory_space<vmem>>, %arg16: memref<1x128xf32, #tpu.memory_space<vmem>>, %arg17: memref<16x2xf32, #tpu.memory_space<vmem>>, %arg18: memref<4x1x32xf32, #tpu.memory_space<vmem>>, %arg19: memref<4x1x32xf32, #tpu.memory_space<vmem>>, %arg20: memref<4x32x128xf32, #tpu.memory_space<vmem>>, %arg21: memref<4x1x128xf32, #tpu.memory_space<vmem>>, %arg22: memref<4x128x32xf32, #tpu.memory_space<vmem>>, %arg23: memref<4x1x32xf32, #tpu.memory_space<vmem>>, %arg24: memref<1x32xf32, #tpu.memory_space<vmem>>, %arg25: memref<1x32xf32, #tpu.memory_space<vmem>>, %arg26: memref<32x256xf32, #tpu.memory_space<vmem>>, %arg27: memref<1x32xf32, #tpu.memory_space<vmem>>, %arg28: memref<16x256xf32, #tpu.memory_space<vmem>>, %arg29: memref<256x32xf32, #tpu.memory_space<vmem>>, %arg30: memref<2x16xf32, #tpu.memory_space<vmem>>, %arg31: memref<2x32xf32, #tpu.memory_space<vmem>>) attributes {dimension_semantics = [#tpu.dimension_semantics<arbitrary>], iteration_bounds = array<i64: 1>, scalar_prefetch = 0 : i64, scratch_operands = 0 : i64, tpu.core_type = #tpu.core_type<tc>, window_params = [{pipeline_mode = #tpu.pipeline_mode<synchronous>, transform_indices = @transform_0, window_bounds = array<i64: 2, 1024>}, {pipeline_mode = #tpu.pipeline_mode<synchronous>, transform_indices = @transform_1, window_bounds = array<i64: 16, 8>}, {pipeline_mode = #tpu.pipeline_mode<synchronous>, transform_indices = @transform_2, window_bounds = array<i64: 1024, 512>}, {pipeline_mode = #tpu.pipeline_mode<synchronous>, transform_indices = @transform_3, window_bounds = array<i64: 1, 512>}, {pipeline_mode = #tpu.pipeline_mode<synchronous>, transform_indices = @transform_4, window_bounds = array<i64: 512, 256>}, {pipeline_mode = #tpu.pipeline_mode<synchronous>, transform_indices = @transform_5, window_bounds = array<i64: 1, 256>}, {pipeline_mode = #tpu.pipeline_mode<synchronous>, transform_indices = @transform_6, window_bounds = array<i64: 256, 128>}, {pipeline_mode = #tpu.pipeline_mode<synchronous>, transform_indices = @transform_7, window_bounds = array<i64: 1, 128>}, {pipeline_mode = #tpu.pipeline_mode<synchronous>, transform_indices = @transform_8, window_bounds = array<i64: 128, 64>}, {pipeline_mode = #tpu.pipeline_mode<synchronous>, transform_indices = @transform_9, window_bounds = array<i64: 1, 64>}, {pipeline_mode = #tpu.pipeline_mode<synchronous>, transform_indices = @transform_10, window_bounds = array<i64: 64, 32>}, {pipeline_mode = #tpu.pipeline_mode<synchronous>, transform_indices = @transform_11, window_bounds = array<i64: 1, 32>}, {pipeline_mode = #tpu.pipeline_mode<synchronous>, transform_indices = @transform_12, window_bounds = array<i64: 8, 32>}, {pipeline_mode = #tpu.pipeline_mode<synchronous>, transform_indices = @transform_13, window_bounds = array<i64: 1, 32>}, {pipeline_mode = #tpu.pipeline_mode<synchronous>, transform_indices = @transform_14, window_bounds = array<i64: 32, 128>}, {pipeline_mode = #tpu.pipeline_mode<synchronous>, transform_indices = @transform_15, window_bounds = array<i64: 1, 128>}, {pipeline_mode = #tpu.pipeline_mode<synchronous>, transform_indices = @transform_16, window_bounds = array<i64: 16, 2>}, {pipeline_mode = #tpu.pipeline_mode<synchronous>, transform_indices = @transform_17, window_bounds = array<i64: 4, 1, 32>}, {pipeline_mode = #tpu.pipeline_mode<synchronous>, transform_indices = @transform_18, window_bounds = array<i64: 4, 1, 32>}, {pipeline_mode = #tpu.pipeline_mode<synchronous>, transform_indices = @transform_19, window_bounds = array<i64: 4, 32, 128>}, {pipeline_mode = #tpu.pipeline_mode<synchronous>, transform_indices = @transform_20, window_bounds = array<i64: 4, 1, 128>}, {pipeline_mode = #tpu.pipeline_mode<synchronous>, transform_indices = @transform_21, window_bounds = array<i64: 4, 128, 32>}, {pipeline_mode = #tpu.pipeline_mode<synchronous>, transform_indices = @transform_22, window_bounds = array<i64: 4, 1, 32>}, {pipeline_mode = #tpu.pipeline_mode<synchronous>, transform_indices = @transform_23, window_bounds = array<i64: 1, 32>}, {pipeline_mode = #tpu.pipeline_mode<synchronous>, transform_indices = @transform_24, window_bounds = array<i64: 1, 32>}, {pipeline_mode = #tpu.pipeline_mode<synchronous>, transform_indices = @transform_25, window_bounds = array<i64: 32, 256>}, {pipeline_mode = #tpu.pipeline_mode<synchronous>, transform_indices = @transform_26, window_bounds = array<i64: 1, 32>}, {pipeline_mode = #tpu.pipeline_mode<synchronous>, transform_indices = @transform_27, window_bounds = array<i64: 16, 256>}, {pipeline_mode = #tpu.pipeline_mode<synchronous>, transform_indices = @transform_28, window_bounds = array<i64: 256, 32>}, {pipeline_mode = #tpu.pipeline_mode<synchronous>, transform_indices = @transform_29, window_bounds = array<i64: 2, 16>}, {pipeline_mode = #tpu.pipeline_mode<synchronous>, transform_indices = @transform_30, window_bounds = array<i64: 2, 32>}]} {
    %c0 = arith.constant 0 : index
    %c0_0 = arith.constant 0 : index
    %0 = vector.load %arg1[%c0, %c0_0] : memref<2x1024xf32, #tpu.memory_space<vmem>>, vector<2x1024xf32>
    %c0_1 = arith.constant 0 : index
    %c0_2 = arith.constant 0 : index
    %1 = vector.load %arg3[%c0_1, %c0_2] : memref<1024x512xf32, #tpu.memory_space<vmem>>, vector<1024x512xf32>
    %cst = arith.constant dense<0.000000e+00> : vector<2x512xf32>
    %2 = tpu.matmul %0, %1, %cst {dimension_numbers = #tpu.dot_dimension_numbers<[1], [0], [0], [1], [0, 0, 1, 1], [], []>} : vector<2x1024xf32>, vector<1024x512xf32>, vector<2x512xf32> -> vector<2x512xf32>
    %c0_3 = arith.constant 0 : index
    %c0_4 = arith.constant 0 : index
    %3 = vector.load %arg4[%c0_3, %c0_4] : memref<1x512xf32, #tpu.memory_space<vmem>>, vector<1x512xf32>
    %4 = vector.broadcast %3 : vector<1x512xf32> to vector<2x512xf32>
    %5 = arith.addf %2, %4 : vector<2x512xf32>
    %cst_5 = arith.constant 0.000000e+00 : f32
    %6 = vector.broadcast %cst_5 : f32 to vector<2x512xf32>
    %7 = arith.maximumf %5, %6 : vector<2x512xf32>
    %c0_6 = arith.constant 0 : index
    %c0_7 = arith.constant 0 : index
    %8 = vector.load %arg5[%c0_6, %c0_7] : memref<512x256xf32, #tpu.memory_space<vmem>>, vector<512x256xf32>
    %cst_8 = arith.constant dense<0.000000e+00> : vector<2x256xf32>
    %9 = tpu.matmul %7, %8, %cst_8 {dimension_numbers = #tpu.dot_dimension_numbers<[1], [0], [0], [1], [0, 0, 1, 1], [], []>} : vector<2x512xf32>, vector<512x256xf32>, vector<2x256xf32> -> vector<2x256xf32>
    %c0_9 = arith.constant 0 : index
    %c0_10 = arith.constant 0 : index
    %10 = vector.load %arg6[%c0_9, %c0_10] : memref<1x256xf32, #tpu.memory_space<vmem>>, vector<1x256xf32>
    %11 = vector.broadcast %10 : vector<1x256xf32> to vector<2x256xf32>
    %12 = arith.addf %9, %11 : vector<2x256xf32>
    %cst_11 = arith.constant 0.000000e+00 : f32
    %13 = vector.broadcast %cst_11 : f32 to vector<2x256xf32>
    %14 = arith.maximumf %12, %13 : vector<2x256xf32>
    %c0_12 = arith.constant 0 : index
    %c0_13 = arith.constant 0 : index
    %15 = vector.load %arg7[%c0_12, %c0_13] : memref<256x128xf32, #tpu.memory_space<vmem>>, vector<256x128xf32>
    %cst_14 = arith.constant dense<0.000000e+00> : vector<2x128xf32>
    %16 = tpu.matmul %14, %15, %cst_14 {dimension_numbers = #tpu.dot_dimension_numbers<[1], [0], [0], [1], [0, 0, 1, 1], [], []>} : vector<2x256xf32>, vector<256x128xf32>, vector<2x128xf32> -> vector<2x128xf32>
    %c0_15 = arith.constant 0 : index
    %c0_16 = arith.constant 0 : index
    %17 = vector.load %arg8[%c0_15, %c0_16] : memref<1x128xf32, #tpu.memory_space<vmem>>, vector<1x128xf32>
    %18 = vector.broadcast %17 : vector<1x128xf32> to vector<2x128xf32>
    %19 = arith.addf %16, %18 : vector<2x128xf32>
    %cst_17 = arith.constant 0.000000e+00 : f32
    %20 = vector.broadcast %cst_17 : f32 to vector<2x128xf32>
    %21 = arith.maximumf %19, %20 : vector<2x128xf32>
    %c0_18 = arith.constant 0 : index
    %c0_19 = arith.constant 0 : index
    %22 = vector.load %arg9[%c0_18, %c0_19] : memref<128x64xf32, #tpu.memory_space<vmem>>, vector<128x64xf32>
    %cst_20 = arith.constant dense<0.000000e+00> : vector<2x64xf32>
    %23 = tpu.matmul %21, %22, %cst_20 {dimension_numbers = #tpu.dot_dimension_numbers<[1], [0], [0], [1], [0, 0, 1, 1], [], []>} : vector<2x128xf32>, vector<128x64xf32>, vector<2x64xf32> -> vector<2x64xf32>
    %c0_21 = arith.constant 0 : index
    %c0_22 = arith.constant 0 : index
    %24 = vector.load %arg10[%c0_21, %c0_22] : memref<1x64xf32, #tpu.memory_space<vmem>>, vector<1x64xf32>
    %25 = vector.broadcast %24 : vector<1x64xf32> to vector<2x64xf32>
    %26 = arith.addf %23, %25 : vector<2x64xf32>
    %cst_23 = arith.constant 0.000000e+00 : f32
    %27 = vector.broadcast %cst_23 : f32 to vector<2x64xf32>
    %28 = arith.maximumf %26, %27 : vector<2x64xf32>
    %c0_24 = arith.constant 0 : index
    %c0_25 = arith.constant 0 : index
    %29 = vector.load %arg11[%c0_24, %c0_25] : memref<64x32xf32, #tpu.memory_space<vmem>>, vector<64x32xf32>
    %cst_26 = arith.constant dense<0.000000e+00> : vector<2x32xf32>
    %30 = tpu.matmul %28, %29, %cst_26 {dimension_numbers = #tpu.dot_dimension_numbers<[1], [0], [0], [1], [0, 0, 1, 1], [], []>} : vector<2x64xf32>, vector<64x32xf32>, vector<2x32xf32> -> vector<2x32xf32>
    %c0_27 = arith.constant 0 : index
    %c0_28 = arith.constant 0 : index
    %31 = vector.load %arg12[%c0_27, %c0_28] : memref<1x32xf32, #tpu.memory_space<vmem>>, vector<1x32xf32>
    %32 = vector.broadcast %31 : vector<1x32xf32> to vector<2x32xf32>
    %33 = arith.addf %30, %32 : vector<2x32xf32>
    %cst_29 = arith.constant 0.000000e+00 : f32
    %34 = vector.broadcast %cst_29 : f32 to vector<2x32xf32>
    %35 = arith.maximumf %33, %34 : vector<2x32xf32>
    %c0_30 = arith.constant 0 : index
    %c0_31 = arith.constant 0 : index
    %36 = vector.load %arg15[%c0_30, %c0_31] : memref<32x128xf32, #tpu.memory_space<vmem>>, vector<32x128xf32>
    %cst_32 = arith.constant dense<0.000000e+00> : vector<2x128xf32>
    %37 = tpu.matmul %35, %36, %cst_32 {dimension_numbers = #tpu.dot_dimension_numbers<[1], [0], [0], [1], [0, 0, 1, 1], [], []>} : vector<2x32xf32>, vector<32x128xf32>, vector<2x128xf32> -> vector<2x128xf32>
    %c0_33 = arith.constant 0 : index
    %c0_34 = arith.constant 0 : index
    %38 = vector.load %arg16[%c0_33, %c0_34] : memref<1x128xf32, #tpu.memory_space<vmem>>, vector<1x128xf32>
    %39 = vector.broadcast %38 : vector<1x128xf32> to vector<2x128xf32>
    %40 = arith.addf %37, %39 : vector<2x128xf32>
    %c0_35 = arith.constant 0 : index
    %c0_36 = arith.constant 0 : index
    %41 = vector.load %arg17[%c0_35, %c0_36] : memref<16x2xf32, #tpu.memory_space<vmem>>, vector<16x2xf32>
    %cst_37 = arith.constant dense<0.000000e+00> : vector<16x128xf32>
    %42 = tpu.matmul %41, %40, %cst_37 {dimension_numbers = #tpu.dot_dimension_numbers<[1], [0], [0], [1], [0, 0, 1, 1], [], []>} : vector<16x2xf32>, vector<2x128xf32>, vector<16x128xf32> -> vector<16x128xf32>
    %c0_38 = arith.constant 0 : index
    %c0_39 = arith.constant 0 : index
    %43 = vector.load %arg2[%c0_38, %c0_39] : memref<16x8xf32, #tpu.memory_space<vmem>>, vector<16x8xf32>
    %c0_40 = arith.constant 0 : index
    %c0_41 = arith.constant 0 : index
    %44 = vector.load %arg13[%c0_40, %c0_41] : memref<8x32xf32, #tpu.memory_space<vmem>>, vector<8x32xf32>
    %cst_42 = arith.constant dense<0.000000e+00> : vector<16x32xf32>
    %45 = tpu.matmul %43, %44, %cst_42 {dimension_numbers = #tpu.dot_dimension_numbers<[1], [0], [0], [1], [0, 0, 1, 1], [], []>} : vector<16x8xf32>, vector<8x32xf32>, vector<16x32xf32> -> vector<16x32xf32>
    %c0_43 = arith.constant 0 : index
    %c0_44 = arith.constant 0 : index
    %46 = vector.load %arg14[%c0_43, %c0_44] : memref<1x32xf32, #tpu.memory_space<vmem>>, vector<1x32xf32>
    %47 = vector.broadcast %46 : vector<1x32xf32> to vector<16x32xf32>
    %48 = arith.addf %45, %47 : vector<16x32xf32>
    %49 = vector.extract_strided_slice %42 {offsets = [0, 0], sizes = [16, 32], strides = [1, 1]} : vector<16x128xf32> to vector<16x32xf32>
    %50 = arith.addf %48, %49 : vector<16x32xf32>
    %c0_45 = arith.constant 0 : index
    %c0_46 = arith.constant 0 : index
    %c0_47 = arith.constant 0 : index
    %51 = vector.load %arg18[%c0_45, %c0_46, %c0_47] : memref<4x1x32xf32, #tpu.memory_space<vmem>>, vector<1x1x32xf32>
    %52 = vector.shape_cast %51 : vector<1x1x32xf32> to vector<1x32xf32>
    %c0_48 = arith.constant 0 : index
    %c0_49 = arith.constant 0 : index
    %c0_50 = arith.constant 0 : index
    %53 = vector.load %arg19[%c0_48, %c0_49, %c0_50] : memref<4x1x32xf32, #tpu.memory_space<vmem>>, vector<1x1x32xf32>
    %54 = vector.shape_cast %53 : vector<1x1x32xf32> to vector<1x32xf32>
    %cst_51 = arith.constant dense<0.000000e+00> : vector<16xf32>
    %55 = vector.multi_reduction <add>, %50, %cst_51 [1] : vector<16x32xf32> to vector<16xf32>
    %56 = vector.shape_cast %55 : vector<16xf32> to vector<16x1xf32>
    %cst_52 = arith.constant 3.200000e+01 : f32
    %57 = vector.broadcast %cst_52 : f32 to vector<16x1xf32>
    %58 = arith.divf %56, %57 : vector<16x1xf32>
    %59 = vector.broadcast %58 : vector<16x1xf32> to vector<16x32xf32>
    %60 = arith.subf %50, %59 : vector<16x32xf32>
    %61 = arith.mulf %60, %60 : vector<16x32xf32>
    %cst_53 = arith.constant dense<0.000000e+00> : vector<16xf32>
    %62 = vector.multi_reduction <add>, %61, %cst_53 [1] : vector<16x32xf32> to vector<16xf32>
    %63 = vector.shape_cast %62 : vector<16xf32> to vector<16x1xf32>
    %cst_54 = arith.constant 3.200000e+01 : f32
    %64 = vector.broadcast %cst_54 : f32 to vector<16x1xf32>
    %65 = arith.divf %63, %64 : vector<16x1xf32>
    %cst_55 = arith.constant 9.99999974E-6 : f32
    %66 = vector.broadcast %cst_55 : f32 to vector<16x1xf32>
    %67 = arith.addf %65, %66 : vector<16x1xf32>
    %68 = math.rsqrt %67 : vector<16x1xf32>
    %69 = vector.broadcast %68 : vector<16x1xf32> to vector<16x32xf32>
    %70 = arith.mulf %60, %69 : vector<16x32xf32>
    %71 = vector.broadcast %52 : vector<1x32xf32> to vector<16x32xf32>
    %72 = arith.mulf %70, %71 : vector<16x32xf32>
    %73 = vector.broadcast %54 : vector<1x32xf32> to vector<16x32xf32>
    %74 = arith.addf %72, %73 : vector<16x32xf32>
    %c0_56 = arith.constant 0 : index
    %c0_57 = arith.constant 0 : index
    %c0_58 = arith.constant 0 : index
    %75 = vector.load %arg20[%c0_56, %c0_57, %c0_58] : memref<4x32x128xf32, #tpu.memory_space<vmem>>, vector<1x32x128xf32>
    %76 = vector.shape_cast %75 : vector<1x32x128xf32> to vector<32x128xf32>
    %cst_59 = arith.constant dense<0.000000e+00> : vector<16x128xf32>
    %77 = tpu.matmul %74, %76, %cst_59 {dimension_numbers = #tpu.dot_dimension_numbers<[1], [0], [0], [1], [0, 0, 1, 1], [], []>} : vector<16x32xf32>, vector<32x128xf32>, vector<16x128xf32> -> vector<16x128xf32>
    %c0_60 = arith.constant 0 : index
    %c0_61 = arith.constant 0 : index
    %c0_62 = arith.constant 0 : index
    %78 = vector.load %arg21[%c0_60, %c0_61, %c0_62] : memref<4x1x128xf32, #tpu.memory_space<vmem>>, vector<1x1x128xf32>
    %79 = vector.shape_cast %78 : vector<1x1x128xf32> to vector<1x128xf32>
    %80 = vector.broadcast %79 : vector<1x128xf32> to vector<16x128xf32>
    %81 = arith.addf %77, %80 : vector<16x128xf32>
    %cst_63 = arith.constant 0.000000e+00 : f32
    %82 = vector.broadcast %cst_63 : f32 to vector<16x128xf32>
    %83 = arith.maximumf %81, %82 : vector<16x128xf32>
    %c0_64 = arith.constant 0 : index
    %c0_65 = arith.constant 0 : index
    %c0_66 = arith.constant 0 : index
    %84 = vector.load %arg22[%c0_64, %c0_65, %c0_66] : memref<4x128x32xf32, #tpu.memory_space<vmem>>, vector<1x128x32xf32>
    %85 = vector.shape_cast %84 : vector<1x128x32xf32> to vector<128x32xf32>
    %cst_67 = arith.constant dense<0.000000e+00> : vector<16x32xf32>
    %86 = tpu.matmul %83, %85, %cst_67 {dimension_numbers = #tpu.dot_dimension_numbers<[1], [0], [0], [1], [0, 0, 1, 1], [], []>} : vector<16x128xf32>, vector<128x32xf32>, vector<16x32xf32> -> vector<16x32xf32>
    %87 = arith.addf %50, %86 : vector<16x32xf32>
    %c0_68 = arith.constant 0 : index
    %c0_69 = arith.constant 0 : index
    %c0_70 = arith.constant 0 : index
    %88 = vector.load %arg23[%c0_68, %c0_69, %c0_70] : memref<4x1x32xf32, #tpu.memory_space<vmem>>, vector<1x1x32xf32>
    %89 = vector.shape_cast %88 : vector<1x1x32xf32> to vector<1x32xf32>
    %90 = vector.broadcast %89 : vector<1x32xf32> to vector<16x32xf32>
    %91 = arith.addf %87, %90 : vector<16x32xf32>
    %92 = vector.extract_strided_slice %42 {offsets = [0, 32], sizes = [16, 32], strides = [1, 1]} : vector<16x128xf32> to vector<16x32xf32>
    %93 = arith.addf %91, %92 : vector<16x32xf32>
    %c1 = arith.constant 1 : index
    %c0_71 = arith.constant 0 : index
    %c0_72 = arith.constant 0 : index
    %94 = vector.load %arg18[%c1, %c0_71, %c0_72] : memref<4x1x32xf32, #tpu.memory_space<vmem>>, vector<1x1x32xf32>
    %95 = vector.shape_cast %94 : vector<1x1x32xf32> to vector<1x32xf32>
    %c1_73 = arith.constant 1 : index
    %c0_74 = arith.constant 0 : index
    %c0_75 = arith.constant 0 : index
    %96 = vector.load %arg19[%c1_73, %c0_74, %c0_75] : memref<4x1x32xf32, #tpu.memory_space<vmem>>, vector<1x1x32xf32>
    %97 = vector.shape_cast %96 : vector<1x1x32xf32> to vector<1x32xf32>
    %cst_76 = arith.constant dense<0.000000e+00> : vector<16xf32>
    %98 = vector.multi_reduction <add>, %93, %cst_76 [1] : vector<16x32xf32> to vector<16xf32>
    %99 = vector.shape_cast %98 : vector<16xf32> to vector<16x1xf32>
    %cst_77 = arith.constant 3.200000e+01 : f32
    %100 = vector.broadcast %cst_77 : f32 to vector<16x1xf32>
    %101 = arith.divf %99, %100 : vector<16x1xf32>
    %102 = vector.broadcast %101 : vector<16x1xf32> to vector<16x32xf32>
    %103 = arith.subf %93, %102 : vector<16x32xf32>
    %104 = arith.mulf %103, %103 : vector<16x32xf32>
    %cst_78 = arith.constant dense<0.000000e+00> : vector<16xf32>
    %105 = vector.multi_reduction <add>, %104, %cst_78 [1] : vector<16x32xf32> to vector<16xf32>
    %106 = vector.shape_cast %105 : vector<16xf32> to vector<16x1xf32>
    %cst_79 = arith.constant 3.200000e+01 : f32
    %107 = vector.broadcast %cst_79 : f32 to vector<16x1xf32>
    %108 = arith.divf %106, %107 : vector<16x1xf32>
    %cst_80 = arith.constant 9.99999974E-6 : f32
    %109 = vector.broadcast %cst_80 : f32 to vector<16x1xf32>
    %110 = arith.addf %108, %109 : vector<16x1xf32>
    %111 = math.rsqrt %110 : vector<16x1xf32>
    %112 = vector.broadcast %111 : vector<16x1xf32> to vector<16x32xf32>
    %113 = arith.mulf %103, %112 : vector<16x32xf32>
    %114 = vector.broadcast %95 : vector<1x32xf32> to vector<16x32xf32>
    %115 = arith.mulf %113, %114 : vector<16x32xf32>
    %116 = vector.broadcast %97 : vector<1x32xf32> to vector<16x32xf32>
    %117 = arith.addf %115, %116 : vector<16x32xf32>
    %c1_81 = arith.constant 1 : index
    %c0_82 = arith.constant 0 : index
    %c0_83 = arith.constant 0 : index
    %118 = vector.load %arg20[%c1_81, %c0_82, %c0_83] : memref<4x32x128xf32, #tpu.memory_space<vmem>>, vector<1x32x128xf32>
    %119 = vector.shape_cast %118 : vector<1x32x128xf32> to vector<32x128xf32>
    %cst_84 = arith.constant dense<0.000000e+00> : vector<16x128xf32>
    %120 = tpu.matmul %117, %119, %cst_84 {dimension_numbers = #tpu.dot_dimension_numbers<[1], [0], [0], [1], [0, 0, 1, 1], [], []>} : vector<16x32xf32>, vector<32x128xf32>, vector<16x128xf32> -> vector<16x128xf32>
    %c1_85 = arith.constant 1 : index
    %c0_86 = arith.constant 0 : index
    %c0_87 = arith.constant 0 : index
    %121 = vector.load %arg21[%c1_85, %c0_86, %c0_87] : memref<4x1x128xf32, #tpu.memory_space<vmem>>, vector<1x1x128xf32>
    %122 = vector.shape_cast %121 : vector<1x1x128xf32> to vector<1x128xf32>
    %123 = vector.broadcast %122 : vector<1x128xf32> to vector<16x128xf32>
    %124 = arith.addf %120, %123 : vector<16x128xf32>
    %cst_88 = arith.constant 0.000000e+00 : f32
    %125 = vector.broadcast %cst_88 : f32 to vector<16x128xf32>
    %126 = arith.maximumf %124, %125 : vector<16x128xf32>
    %c1_89 = arith.constant 1 : index
    %c0_90 = arith.constant 0 : index
    %c0_91 = arith.constant 0 : index
    %127 = vector.load %arg22[%c1_89, %c0_90, %c0_91] : memref<4x128x32xf32, #tpu.memory_space<vmem>>, vector<1x128x32xf32>
    %128 = vector.shape_cast %127 : vector<1x128x32xf32> to vector<128x32xf32>
    %cst_92 = arith.constant dense<0.000000e+00> : vector<16x32xf32>
    %129 = tpu.matmul %126, %128, %cst_92 {dimension_numbers = #tpu.dot_dimension_numbers<[1], [0], [0], [1], [0, 0, 1, 1], [], []>} : vector<16x128xf32>, vector<128x32xf32>, vector<16x32xf32> -> vector<16x32xf32>
    %130 = arith.addf %93, %129 : vector<16x32xf32>
    %c1_93 = arith.constant 1 : index
    %c0_94 = arith.constant 0 : index
    %c0_95 = arith.constant 0 : index
    %131 = vector.load %arg23[%c1_93, %c0_94, %c0_95] : memref<4x1x32xf32, #tpu.memory_space<vmem>>, vector<1x1x32xf32>
    %132 = vector.shape_cast %131 : vector<1x1x32xf32> to vector<1x32xf32>
    %133 = vector.broadcast %132 : vector<1x32xf32> to vector<16x32xf32>
    %134 = arith.addf %130, %133 : vector<16x32xf32>
    %135 = vector.extract_strided_slice %42 {offsets = [0, 64], sizes = [16, 32], strides = [1, 1]} : vector<16x128xf32> to vector<16x32xf32>
    %136 = arith.addf %134, %135 : vector<16x32xf32>
    %c2 = arith.constant 2 : index
    %c0_96 = arith.constant 0 : index
    %c0_97 = arith.constant 0 : index
    %137 = vector.load %arg18[%c2, %c0_96, %c0_97] : memref<4x1x32xf32, #tpu.memory_space<vmem>>, vector<1x1x32xf32>
    %138 = vector.shape_cast %137 : vector<1x1x32xf32> to vector<1x32xf32>
    %c2_98 = arith.constant 2 : index
    %c0_99 = arith.constant 0 : index
    %c0_100 = arith.constant 0 : index
    %139 = vector.load %arg19[%c2_98, %c0_99, %c0_100] : memref<4x1x32xf32, #tpu.memory_space<vmem>>, vector<1x1x32xf32>
    %140 = vector.shape_cast %139 : vector<1x1x32xf32> to vector<1x32xf32>
    %cst_101 = arith.constant dense<0.000000e+00> : vector<16xf32>
    %141 = vector.multi_reduction <add>, %136, %cst_101 [1] : vector<16x32xf32> to vector<16xf32>
    %142 = vector.shape_cast %141 : vector<16xf32> to vector<16x1xf32>
    %cst_102 = arith.constant 3.200000e+01 : f32
    %143 = vector.broadcast %cst_102 : f32 to vector<16x1xf32>
    %144 = arith.divf %142, %143 : vector<16x1xf32>
    %145 = vector.broadcast %144 : vector<16x1xf32> to vector<16x32xf32>
    %146 = arith.subf %136, %145 : vector<16x32xf32>
    %147 = arith.mulf %146, %146 : vector<16x32xf32>
    %cst_103 = arith.constant dense<0.000000e+00> : vector<16xf32>
    %148 = vector.multi_reduction <add>, %147, %cst_103 [1] : vector<16x32xf32> to vector<16xf32>
    %149 = vector.shape_cast %148 : vector<16xf32> to vector<16x1xf32>
    %cst_104 = arith.constant 3.200000e+01 : f32
    %150 = vector.broadcast %cst_104 : f32 to vector<16x1xf32>
    %151 = arith.divf %149, %150 : vector<16x1xf32>
    %cst_105 = arith.constant 9.99999974E-6 : f32
    %152 = vector.broadcast %cst_105 : f32 to vector<16x1xf32>
    %153 = arith.addf %151, %152 : vector<16x1xf32>
    %154 = math.rsqrt %153 : vector<16x1xf32>
    %155 = vector.broadcast %154 : vector<16x1xf32> to vector<16x32xf32>
    %156 = arith.mulf %146, %155 : vector<16x32xf32>
    %157 = vector.broadcast %138 : vector<1x32xf32> to vector<16x32xf32>
    %158 = arith.mulf %156, %157 : vector<16x32xf32>
    %159 = vector.broadcast %140 : vector<1x32xf32> to vector<16x32xf32>
    %160 = arith.addf %158, %159 : vector<16x32xf32>
    %c2_106 = arith.constant 2 : index
    %c0_107 = arith.constant 0 : index
    %c0_108 = arith.constant 0 : index
    %161 = vector.load %arg20[%c2_106, %c0_107, %c0_108] : memref<4x32x128xf32, #tpu.memory_space<vmem>>, vector<1x32x128xf32>
    %162 = vector.shape_cast %161 : vector<1x32x128xf32> to vector<32x128xf32>
    %cst_109 = arith.constant dense<0.000000e+00> : vector<16x128xf32>
    %163 = tpu.matmul %160, %162, %cst_109 {dimension_numbers = #tpu.dot_dimension_numbers<[1], [0], [0], [1], [0, 0, 1, 1], [], []>} : vector<16x32xf32>, vector<32x128xf32>, vector<16x128xf32> -> vector<16x128xf32>
    %c2_110 = arith.constant 2 : index
    %c0_111 = arith.constant 0 : index
    %c0_112 = arith.constant 0 : index
    %164 = vector.load %arg21[%c2_110, %c0_111, %c0_112] : memref<4x1x128xf32, #tpu.memory_space<vmem>>, vector<1x1x128xf32>
    %165 = vector.shape_cast %164 : vector<1x1x128xf32> to vector<1x128xf32>
    %166 = vector.broadcast %165 : vector<1x128xf32> to vector<16x128xf32>
    %167 = arith.addf %163, %166 : vector<16x128xf32>
    %cst_113 = arith.constant 0.000000e+00 : f32
    %168 = vector.broadcast %cst_113 : f32 to vector<16x128xf32>
    %169 = arith.maximumf %167, %168 : vector<16x128xf32>
    %c2_114 = arith.constant 2 : index
    %c0_115 = arith.constant 0 : index
    %c0_116 = arith.constant 0 : index
    %170 = vector.load %arg22[%c2_114, %c0_115, %c0_116] : memref<4x128x32xf32, #tpu.memory_space<vmem>>, vector<1x128x32xf32>
    %171 = vector.shape_cast %170 : vector<1x128x32xf32> to vector<128x32xf32>
    %cst_117 = arith.constant dense<0.000000e+00> : vector<16x32xf32>
    %172 = tpu.matmul %169, %171, %cst_117 {dimension_numbers = #tpu.dot_dimension_numbers<[1], [0], [0], [1], [0, 0, 1, 1], [], []>} : vector<16x128xf32>, vector<128x32xf32>, vector<16x32xf32> -> vector<16x32xf32>
    %173 = arith.addf %136, %172 : vector<16x32xf32>
    %c2_118 = arith.constant 2 : index
    %c0_119 = arith.constant 0 : index
    %c0_120 = arith.constant 0 : index
    %174 = vector.load %arg23[%c2_118, %c0_119, %c0_120] : memref<4x1x32xf32, #tpu.memory_space<vmem>>, vector<1x1x32xf32>
    %175 = vector.shape_cast %174 : vector<1x1x32xf32> to vector<1x32xf32>
    %176 = vector.broadcast %175 : vector<1x32xf32> to vector<16x32xf32>
    %177 = arith.addf %173, %176 : vector<16x32xf32>
    %178 = vector.extract_strided_slice %42 {offsets = [0, 96], sizes = [16, 32], strides = [1, 1]} : vector<16x128xf32> to vector<16x32xf32>
    %179 = arith.addf %177, %178 : vector<16x32xf32>
    %c3 = arith.constant 3 : index
    %c0_121 = arith.constant 0 : index
    %c0_122 = arith.constant 0 : index
    %180 = vector.load %arg18[%c3, %c0_121, %c0_122] : memref<4x1x32xf32, #tpu.memory_space<vmem>>, vector<1x1x32xf32>
    %181 = vector.shape_cast %180 : vector<1x1x32xf32> to vector<1x32xf32>
    %c3_123 = arith.constant 3 : index
    %c0_124 = arith.constant 0 : index
    %c0_125 = arith.constant 0 : index
    %182 = vector.load %arg19[%c3_123, %c0_124, %c0_125] : memref<4x1x32xf32, #tpu.memory_space<vmem>>, vector<1x1x32xf32>
    %183 = vector.shape_cast %182 : vector<1x1x32xf32> to vector<1x32xf32>
    %cst_126 = arith.constant dense<0.000000e+00> : vector<16xf32>
    %184 = vector.multi_reduction <add>, %179, %cst_126 [1] : vector<16x32xf32> to vector<16xf32>
    %185 = vector.shape_cast %184 : vector<16xf32> to vector<16x1xf32>
    %cst_127 = arith.constant 3.200000e+01 : f32
    %186 = vector.broadcast %cst_127 : f32 to vector<16x1xf32>
    %187 = arith.divf %185, %186 : vector<16x1xf32>
    %188 = vector.broadcast %187 : vector<16x1xf32> to vector<16x32xf32>
    %189 = arith.subf %179, %188 : vector<16x32xf32>
    %190 = arith.mulf %189, %189 : vector<16x32xf32>
    %cst_128 = arith.constant dense<0.000000e+00> : vector<16xf32>
    %191 = vector.multi_reduction <add>, %190, %cst_128 [1] : vector<16x32xf32> to vector<16xf32>
    %192 = vector.shape_cast %191 : vector<16xf32> to vector<16x1xf32>
    %cst_129 = arith.constant 3.200000e+01 : f32
    %193 = vector.broadcast %cst_129 : f32 to vector<16x1xf32>
    %194 = arith.divf %192, %193 : vector<16x1xf32>
    %cst_130 = arith.constant 9.99999974E-6 : f32
    %195 = vector.broadcast %cst_130 : f32 to vector<16x1xf32>
    %196 = arith.addf %194, %195 : vector<16x1xf32>
    %197 = math.rsqrt %196 : vector<16x1xf32>
    %198 = vector.broadcast %197 : vector<16x1xf32> to vector<16x32xf32>
    %199 = arith.mulf %189, %198 : vector<16x32xf32>
    %200 = vector.broadcast %181 : vector<1x32xf32> to vector<16x32xf32>
    %201 = arith.mulf %199, %200 : vector<16x32xf32>
    %202 = vector.broadcast %183 : vector<1x32xf32> to vector<16x32xf32>
    %203 = arith.addf %201, %202 : vector<16x32xf32>
    %c3_131 = arith.constant 3 : index
    %c0_132 = arith.constant 0 : index
    %c0_133 = arith.constant 0 : index
    %204 = vector.load %arg20[%c3_131, %c0_132, %c0_133] : memref<4x32x128xf32, #tpu.memory_space<vmem>>, vector<1x32x128xf32>
    %205 = vector.shape_cast %204 : vector<1x32x128xf32> to vector<32x128xf32>
    %cst_134 = arith.constant dense<0.000000e+00> : vector<16x128xf32>
    %206 = tpu.matmul %203, %205, %cst_134 {dimension_numbers = #tpu.dot_dimension_numbers<[1], [0], [0], [1], [0, 0, 1, 1], [], []>} : vector<16x32xf32>, vector<32x128xf32>, vector<16x128xf32> -> vector<16x128xf32>
    %c3_135 = arith.constant 3 : index
    %c0_136 = arith.constant 0 : index
    %c0_137 = arith.constant 0 : index
    %207 = vector.load %arg21[%c3_135, %c0_136, %c0_137] : memref<4x1x128xf32, #tpu.memory_space<vmem>>, vector<1x1x128xf32>
    %208 = vector.shape_cast %207 : vector<1x1x128xf32> to vector<1x128xf32>
    %209 = vector.broadcast %208 : vector<1x128xf32> to vector<16x128xf32>
    %210 = arith.addf %206, %209 : vector<16x128xf32>
    %cst_138 = arith.constant 0.000000e+00 : f32
    %211 = vector.broadcast %cst_138 : f32 to vector<16x128xf32>
    %212 = arith.maximumf %210, %211 : vector<16x128xf32>
    %c3_139 = arith.constant 3 : index
    %c0_140 = arith.constant 0 : index
    %c0_141 = arith.constant 0 : index
    %213 = vector.load %arg22[%c3_139, %c0_140, %c0_141] : memref<4x128x32xf32, #tpu.memory_space<vmem>>, vector<1x128x32xf32>
    %214 = vector.shape_cast %213 : vector<1x128x32xf32> to vector<128x32xf32>
    %cst_142 = arith.constant dense<0.000000e+00> : vector<16x32xf32>
    %215 = tpu.matmul %212, %214, %cst_142 {dimension_numbers = #tpu.dot_dimension_numbers<[1], [0], [0], [1], [0, 0, 1, 1], [], []>} : vector<16x128xf32>, vector<128x32xf32>, vector<16x32xf32> -> vector<16x32xf32>
    %216 = arith.addf %179, %215 : vector<16x32xf32>
    %c3_143 = arith.constant 3 : index
    %c0_144 = arith.constant 0 : index
    %c0_145 = arith.constant 0 : index
    %217 = vector.load %arg23[%c3_143, %c0_144, %c0_145] : memref<4x1x32xf32, #tpu.memory_space<vmem>>, vector<1x1x32xf32>
    %218 = vector.shape_cast %217 : vector<1x1x32xf32> to vector<1x32xf32>
    %219 = vector.broadcast %218 : vector<1x32xf32> to vector<16x32xf32>
    %220 = arith.addf %216, %219 : vector<16x32xf32>
    %c0_146 = arith.constant 0 : index
    %c0_147 = arith.constant 0 : index
    %221 = vector.load %arg24[%c0_146, %c0_147] : memref<1x32xf32, #tpu.memory_space<vmem>>, vector<1x32xf32>
    %c0_148 = arith.constant 0 : index
    %c0_149 = arith.constant 0 : index
    %222 = vector.load %arg25[%c0_148, %c0_149] : memref<1x32xf32, #tpu.memory_space<vmem>>, vector<1x32xf32>
    %cst_150 = arith.constant dense<0.000000e+00> : vector<16xf32>
    %223 = vector.multi_reduction <add>, %220, %cst_150 [1] : vector<16x32xf32> to vector<16xf32>
    %224 = vector.shape_cast %223 : vector<16xf32> to vector<16x1xf32>
    %cst_151 = arith.constant 3.200000e+01 : f32
    %225 = vector.broadcast %cst_151 : f32 to vector<16x1xf32>
    %226 = arith.divf %224, %225 : vector<16x1xf32>
    %227 = vector.broadcast %226 : vector<16x1xf32> to vector<16x32xf32>
    %228 = arith.subf %220, %227 : vector<16x32xf32>
    %229 = arith.mulf %228, %228 : vector<16x32xf32>
    %cst_152 = arith.constant dense<0.000000e+00> : vector<16xf32>
    %230 = vector.multi_reduction <add>, %229, %cst_152 [1] : vector<16x32xf32> to vector<16xf32>
    %231 = vector.shape_cast %230 : vector<16xf32> to vector<16x1xf32>
    %cst_153 = arith.constant 3.200000e+01 : f32
    %232 = vector.broadcast %cst_153 : f32 to vector<16x1xf32>
    %233 = arith.divf %231, %232 : vector<16x1xf32>
    %cst_154 = arith.constant 9.99999974E-6 : f32
    %234 = vector.broadcast %cst_154 : f32 to vector<16x1xf32>
    %235 = arith.addf %233, %234 : vector<16x1xf32>
    %236 = math.rsqrt %235 : vector<16x1xf32>
    %237 = vector.broadcast %236 : vector<16x1xf32> to vector<16x32xf32>
    %238 = arith.mulf %228, %237 : vector<16x32xf32>
    %239 = vector.broadcast %221 : vector<1x32xf32> to vector<16x32xf32>
    %240 = arith.mulf %238, %239 : vector<16x32xf32>
    %241 = vector.broadcast %222 : vector<1x32xf32> to vector<16x32xf32>
    %242 = arith.addf %240, %241 : vector<16x32xf32>
    %c0_155 = arith.constant 0 : index
    %c0_156 = arith.constant 0 : index
    %243 = vector.load %arg26[%c0_155, %c0_156] : memref<32x256xf32, #tpu.memory_space<vmem>>, vector<32x256xf32>
    %cst_157 = arith.constant dense<0.000000e+00> : vector<16x256xf32>
    %244 = tpu.matmul %242, %243, %cst_157 {dimension_numbers = #tpu.dot_dimension_numbers<[1], [0], [0], [1], [0, 0, 1, 1], [], []>} : vector<16x32xf32>, vector<32x256xf32>, vector<16x256xf32> -> vector<16x256xf32>
    %c0_158 = arith.constant 0 : index
    %c0_159 = arith.constant 0 : index
    %245 = vector.load %arg28[%c0_158, %c0_159] : memref<16x256xf32, #tpu.memory_space<vmem>>, vector<16x256xf32>
    %246 = arith.mulf %244, %245 : vector<16x256xf32>
    %c0_160 = arith.constant 0 : index
    %c0_161 = arith.constant 0 : index
    %247 = vector.load %arg29[%c0_160, %c0_161] : memref<256x32xf32, #tpu.memory_space<vmem>>, vector<256x32xf32>
    %cst_162 = arith.constant dense<0.000000e+00> : vector<16x32xf32>
    %248 = tpu.matmul %246, %247, %cst_162 {dimension_numbers = #tpu.dot_dimension_numbers<[1], [0], [0], [1], [0, 0, 1, 1], [], []>} : vector<16x256xf32>, vector<256x32xf32>, vector<16x32xf32> -> vector<16x32xf32>
    %c0_163 = arith.constant 0 : index
    %c0_164 = arith.constant 0 : index
    %249 = vector.load %arg30[%c0_163, %c0_164] : memref<2x16xf32, #tpu.memory_space<vmem>>, vector<2x16xf32>
    %cst_165 = arith.constant dense<0.000000e+00> : vector<2x32xf32>
    %250 = tpu.matmul %249, %248, %cst_165 {dimension_numbers = #tpu.dot_dimension_numbers<[1], [0], [0], [1], [0, 0, 1, 1], [], []>} : vector<2x16xf32>, vector<16x32xf32>, vector<2x32xf32> -> vector<2x32xf32>
    %c0_166 = arith.constant 0 : index
    %c0_167 = arith.constant 0 : index
    %251 = vector.load %arg27[%c0_166, %c0_167] : memref<1x32xf32, #tpu.memory_space<vmem>>, vector<1x32xf32>
    %252 = vector.broadcast %251 : vector<1x32xf32> to vector<2x32xf32>
    %253 = arith.addf %250, %252 : vector<2x32xf32>
    %c0_168 = arith.constant 0 : index
    %c0_169 = arith.constant 0 : index
    %254 = vector.load %arg31[%c0_168, %c0_169] : memref<2x32xf32, #tpu.memory_space<vmem>>, vector<2x32xf32>
    tpu.vector_store %arg31[%c0_168, %c0_169], %253 {strides = array<i32>} : memref<2x32xf32, #tpu.memory_space<vmem>>, vector<2x32xf32>,
    return
  }
  func.func @transform_0(%arg0: i32) -> (i32, i32) {
    %c0_i32 = arith.constant 0 : i32
    %c0_i32_0 = arith.constant 0 : i32
    %c0_i32_1 = arith.constant 0 : i32
    return %c0_i32, %c0_i32_0 : i32, i32
  }
  func.func @transform_1(%arg0: i32) -> (i32, i32) {
    %c0_i32 = arith.constant 0 : i32
    %c0_i32_0 = arith.constant 0 : i32
    %c0_i32_1 = arith.constant 0 : i32
    return %c0_i32, %c0_i32_0 : i32, i32
  }
  func.func @transform_2(%arg0: i32) -> (i32, i32) {
    %c0_i32 = arith.constant 0 : i32
    %c0_i32_0 = arith.constant 0 : i32
    %c0_i32_1 = arith.constant 0 : i32
    return %c0_i32, %c0_i32_0 : i32, i32
  }
  func.func @transform_3(%arg0: i32) -> (i32, i32) {
    %c0_i32 = arith.constant 0 : i32
    %c0_i32_0 = arith.constant 0 : i32
    %c0_i32_1 = arith.constant 0 : i32
    return %c0_i32, %c0_i32_0 : i32, i32
  }
  func.func @transform_4(%arg0: i32) -> (i32, i32) {
    %c0_i32 = arith.constant 0 : i32
    %c0_i32_0 = arith.constant 0 : i32
    %c0_i32_1 = arith.constant 0 : i32
    return %c0_i32, %c0_i32_0 : i32, i32
  }
  func.func @transform_5(%arg0: i32) -> (i32, i32) {
    %c0_i32 = arith.constant 0 : i32
    %c0_i32_0 = arith.constant 0 : i32
    %c0_i32_1 = arith.constant 0 : i32
    return %c0_i32, %c0_i32_0 : i32, i32
  }
  func.func @transform_6(%arg0: i32) -> (i32, i32) {
    %c0_i32 = arith.constant 0 : i32
    %c0_i32_0 = arith.constant 0 : i32
    %c0_i32_1 = arith.constant 0 : i32
    return %c0_i32, %c0_i32_0 : i32, i32
  }
  func.func @transform_7(%arg0: i32) -> (i32, i32) {
    %c0_i32 = arith.constant 0 : i32
    %c0_i32_0 = arith.constant 0 : i32
    %c0_i32_1 = arith.constant 0 : i32
    return %c0_i32, %c0_i32_0 : i32, i32
  }
  func.func @transform_8(%arg0: i32) -> (i32, i32) {
    %c0_i32 = arith.constant 0 : i32
    %c0_i32_0 = arith.constant 0 : i32
    %c0_i32_1 = arith.constant 0 : i32
    return %c0_i32, %c0_i32_0 : i32, i32
  }
  func.func @transform_9(%arg0: i32) -> (i32, i32) {
    %c0_i32 = arith.constant 0 : i32
    %c0_i32_0 = arith.constant 0 : i32
    %c0_i32_1 = arith.constant 0 : i32
    return %c0_i32, %c0_i32_0 : i32, i32
  }
  func.func @transform_10(%arg0: i32) -> (i32, i32) {
    %c0_i32 = arith.constant 0 : i32
    %c0_i32_0 = arith.constant 0 : i32
    %c0_i32_1 = arith.constant 0 : i32
    return %c0_i32, %c0_i32_0 : i32, i32
  }
  func.func @transform_11(%arg0: i32) -> (i32, i32) {
    %c0_i32 = arith.constant 0 : i32
    %c0_i32_0 = arith.constant 0 : i32
    %c0_i32_1 = arith.constant 0 : i32
    return %c0_i32, %c0_i32_0 : i32, i32
  }
  func.func @transform_12(%arg0: i32) -> (i32, i32) {
    %c0_i32 = arith.constant 0 : i32
    %c0_i32_0 = arith.constant 0 : i32
    %c0_i32_1 = arith.constant 0 : i32
    return %c0_i32, %c0_i32_0 : i32, i32
  }
  func.func @transform_13(%arg0: i32) -> (i32, i32) {
    %c0_i32 = arith.constant 0 : i32
    %c0_i32_0 = arith.constant 0 : i32
    %c0_i32_1 = arith.constant 0 : i32
    return %c0_i32, %c0_i32_0 : i32, i32
  }
  func.func @transform_14(%arg0: i32) -> (i32, i32) {
    %c0_i32 = arith.constant 0 : i32
    %c0_i32_0 = arith.constant 0 : i32
    %c0_i32_1 = arith.constant 0 : i32
    return %c0_i32, %c0_i32_0 : i32, i32
  }
  func.func @transform_15(%arg0: i32) -> (i32, i32) {
    %c0_i32 = arith.constant 0 : i32
    %c0_i32_0 = arith.constant 0 : i32
    %c0_i32_1 = arith.constant 0 : i32
    return %c0_i32, %c0_i32_0 : i32, i32
  }
  func.func @transform_16(%arg0: i32) -> (i32, i32) {
    %c0_i32 = arith.constant 0 : i32
    %c0_i32_0 = arith.constant 0 : i32
    %c0_i32_1 = arith.constant 0 : i32
    return %c0_i32, %c0_i32_0 : i32, i32
  }
  func.func @transform_17(%arg0: i32) -> (i32, i32, i32) {
    %c0_i32 = arith.constant 0 : i32
    %c0_i32_0 = arith.constant 0 : i32
    %c0_i32_1 = arith.constant 0 : i32
    %c0_i32_2 = arith.constant 0 : i32
    return %c0_i32, %c0_i32_0, %c0_i32_1 : i32, i32, i32
  }
  func.func @transform_18(%arg0: i32) -> (i32, i32, i32) {
    %c0_i32 = arith.constant 0 : i32
    %c0_i32_0 = arith.constant 0 : i32
    %c0_i32_1 = arith.constant 0 : i32
    %c0_i32_2 = arith.constant 0 : i32
    return %c0_i32, %c0_i32_0, %c0_i32_1 : i32, i32, i32
  }
  func.func @transform_19(%arg0: i32) -> (i32, i32, i32) {
    %c0_i32 = arith.constant 0 : i32
    %c0_i32_0 = arith.constant 0 : i32
    %c0_i32_1 = arith.constant 0 : i32
    %c0_i32_2 = arith.constant 0 : i32
    return %c0_i32, %c0_i32_0, %c0_i32_1 : i32, i32, i32
  }
  func.func @transform_20(%arg0: i32) -> (i32, i32, i32) {
    %c0_i32 = arith.constant 0 : i32
    %c0_i32_0 = arith.constant 0 : i32
    %c0_i32_1 = arith.constant 0 : i32
    %c0_i32_2 = arith.constant 0 : i32
    return %c0_i32, %c0_i32_0, %c0_i32_1 : i32, i32, i32
  }
  func.func @transform_21(%arg0: i32) -> (i32, i32, i32) {
    %c0_i32 = arith.constant 0 : i32
    %c0_i32_0 = arith.constant 0 : i32
    %c0_i32_1 = arith.constant 0 : i32
    %c0_i32_2 = arith.constant 0 : i32
    return %c0_i32, %c0_i32_0, %c0_i32_1 : i32, i32, i32
  }
  func.func @transform_22(%arg0: i32) -> (i32, i32, i32) {
    %c0_i32 = arith.constant 0 : i32
    %c0_i32_0 = arith.constant 0 : i32
    %c0_i32_1 = arith.constant 0 : i32
    %c0_i32_2 = arith.constant 0 : i32
    return %c0_i32, %c0_i32_0, %c0_i32_1 : i32, i32, i32
  }
  func.func @transform_23(%arg0: i32) -> (i32, i32) {
    %c0_i32 = arith.constant 0 : i32
    %c0_i32_0 = arith.constant 0 : i32
    %c0_i32_1 = arith.constant 0 : i32
    return %c0_i32, %c0_i32_0 : i32, i32
  }
  func.func @transform_24(%arg0: i32) -> (i32, i32) {
    %c0_i32 = arith.constant 0 : i32
    %c0_i32_0 = arith.constant 0 : i32
    %c0_i32_1 = arith.constant 0 : i32
    return %c0_i32, %c0_i32_0 : i32, i32
  }
  func.func @transform_25(%arg0: i32) -> (i32, i32) {
    %c0_i32 = arith.constant 0 : i32
    %c0_i32_0 = arith.constant 0 : i32
    %c0_i32_1 = arith.constant 0 : i32
    return %c0_i32, %c0_i32_0 : i32, i32
  }
  func.func @transform_26(%arg0: i32) -> (i32, i32) {
    %c0_i32 = arith.constant 0 : i32
    %c0_i32_0 = arith.constant 0 : i32
    %c0_i32_1 = arith.constant 0 : i32
    return %c0_i32, %c0_i32_0 : i32, i32
  }
  func.func @transform_27(%arg0: i32) -> (i32, i32) {
    %c0_i32 = arith.constant 0 : i32
    %c0_i32_0 = arith.constant 0 : i32
    %c0_i32_1 = arith.constant 0 : i32
    return %c0_i32, %c0_i32_0 : i32, i32
  }
  func.func @transform_28(%arg0: i32) -> (i32, i32) {
    %c0_i32 = arith.constant 0 : i32
    %c0_i32_0 = arith.constant 0 : i32
    %c0_i32_1 = arith.constant 0 : i32
    return %c0_i32, %c0_i32_0 : i32, i32
  }
  func.func @transform_29(%arg0: i32) -> (i32, i32) {
    %c0_i32 = arith.constant 0 : i32
    %c0_i32_0 = arith.constant 0 : i32
    %c0_i32_1 = arith.constant 0 : i32
    return %c0_i32, %c0_i32_0 : i32, i32
  }
  func.func @transform_30(%arg0: i32) -> (i32, i32) {
    %c0_i32 = arith.constant 0 : i32
    %c0_i32_0 = arith.constant 0 : i32
    %c0_i32_1 = arith.constant 0 : i32
    return %c0_i32, %c0_i32_0 : i32, i32
  }
}

</mosaic_0001>

<llo_original>
// kernel: robot_state_vision_encoder.1
$region0: #{robot_state_vision_encoder.1}
  #allocation0 [shape = 'u32[]', space=smem, size = 0x4, offset = 0x4, fixed_abs, tag = 'smem constant byte address 0x4 - core index']
  #allocation1 [shape = 'u32[144,128]{1,0:T(1,128)}', space=vmem, size = 0x12000, scoped, tag = 'internal scratch']
  %s0 = inlined_call_operand.smem [shape: u32[31], index: -1, kind: input, shape index: {}]
  %s1 = sld [smem:[%s0]]
  %s2 = scalar_lea.smem %s0, 1
  %s3 = sld [smem:[%s2]]
  %s4 = scalar_lea.smem %s0, 2
  %s5 = sld [smem:[%s4]]
  %s6 = scalar_lea.smem %s0, 3
  %s7 = sld [smem:[%s6]]
  %s8 = scalar_lea.smem %s0, 4
  %s9 = sld [smem:[%s8]]
  %s10 = scalar_lea.smem %s0, 5
  %s11 = sld [smem:[%s10]]
  %s12 = scalar_lea.smem %s0, 6
  %s13 = sld [smem:[%s12]]
  %s14 = scalar_lea.smem %s0, 7
  %s15 = sld [smem:[%s14]]
  %s16 = scalar_lea.smem %s0, 8
  %s17 = sld [smem:[%s16]]
  %s18 = scalar_lea.smem %s0, 9
  %s19 = sld [smem:[%s18]]
  %s20 = scalar_lea.smem %s0, 10
  %s21 = sld [smem:[%s20]]
  %s22 = scalar_lea.smem %s0, 11
  %s23 = sld [smem:[%s22]]
  %s24 = scalar_lea.smem %s0, 12
  %s25 = sld [smem:[%s24]]
  %s26 = scalar_lea.smem %s0, 13
  %s27 = sld [smem:[%s26]]
  %s28 = scalar_lea.smem %s0, 14
  %s29 = sld [smem:[%s28]]
  %s30 = scalar_lea.smem %s0, 15
  %s31 = sld [smem:[%s30]]
  %s32 = scalar_lea.smem %s0, 16
  %s33 = sld [smem:[%s32]]
  %s34 = scalar_lea.smem %s0, 17
  %s35 = sld [smem:[%s34]]
  %s36 = scalar_lea.smem %s0, 18
  %s37 = sld [smem:[%s36]]
  %s38 = scalar_lea.smem %s0, 19
  %s39 = sld [smem:[%s38]]
  %s40 = scalar_lea.smem %s0, 20
  %s41 = sld [smem:[%s40]]
  %s42 = scalar_lea.smem %s0, 21
  %s43 = sld [smem:[%s42]]
  %s44 = scalar_lea.smem %s0, 22
  %s45 = sld [smem:[%s44]]
  %s46 = scalar_lea.smem %s0, 23
  %s47 = sld [smem:[%s46]]
  %s48 = scalar_lea.smem %s0, 24
  %s49 = sld [smem:[%s48]]
  %s50 = scalar_lea.smem %s0, 25
  %s51 = sld [smem:[%s50]]
  %s52 = scalar_lea.smem %s0, 26
  %s53 = sld [smem:[%s52]]
  %s54 = scalar_lea.smem %s0, 27
  %s55 = sld [smem:[%s54]]
  %s56 = scalar_lea.smem %s0, 28
  %s57 = sld [smem:[%s56]]
  %s58 = scalar_lea.smem %s0, 29
  %s59 = sld [smem:[%s58]]
  %s60 = scalar_lea.smem %s0, 30
  %s61 = sld [smem:[%s60]]
  %s62 = sld [smem:[#allocation0]]
  $region218: #{robot_state_vision_encoder.1} parent=0
    _
  %s64 = ssub.s32 1, %s62
  %s65 = scalar_select 0, %s64, %s62
  $region1: #{robot_state_vision_encoder.1} parent=0
    #allocation2 [shape = 'u8[8192]{0}', space=vmem, size = 0x2000, scoped, tag = 'input window, operand 1, single buffered']
    #allocation3 [shape = 's32[1]{0}', space=sflag, size = 0x4, scoped, tag = 'scoped memory for robot_state_vision_encoder.1']
    #allocation4 [shape = 's32[1]{0}', space=sflag, size = 0x4, scoped, tag = 'scoped memory for robot_state_vision_encoder.1']
    #allocation5 [shape = 'u8[2097152]{0}', space=vmem, size = 0x200000, scoped, tag = 'input window, operand 2, single buffered']
    #allocation6 [shape = 's32[1]{0}', space=sflag, size = 0x4, scoped, tag = 'scoped memory for robot_state_vision_encoder.1']
    #allocation7 [shape = 'u8[2048]{0}', space=vmem, size = 0x800, scoped, tag = 'input window, operand 3, single buffered']
    #allocation8 [shape = 'u8[524288]{0}', space=vmem, size = 0x80000, scoped, tag = 'input window, operand 4, single buffered']
    #allocation9 [shape = 's32[1]{0}', space=sflag, size = 0x4, scoped, tag = 'scoped memory for robot_state_vision_encoder.1']
    #allocation10 [shape = 'u8[1024]{0}', space=vmem, size = 0x400, scoped, tag = 'input window, operand 5, single buffered']
    #allocation11 [shape = 'u8[131072]{0}', space=vmem, size = 0x20000, scoped, tag = 'input window, operand 6, single buffered']
    #allocation12 [shape = 's32[1]{0}', space=sflag, size = 0x4, scoped, tag = 'scoped memory for robot_state_vision_encoder.1']
    #allocation13 [shape = 'u8[512]{0}', space=vmem, size = 0x400, scoped, tag = 'input window, operand 7, single buffered']
    #allocation14 [shape = 'u8[512]{0}', space=vmem, size = 0x400, scoped, tag = 'input window, operand 9, single buffered']
    #allocation15 [shape = 's32[1]{0}', space=sflag, size = 0x4, scoped, tag = 'scoped memory for robot_state_vision_encoder.1']
    #allocation16 [shape = 'u8[512]{0}', space=vmem, size = 0x400, scoped, tag = 'input window, operand 11, single buffered']
    #allocation17 [shape = 'u8[4096]{0}', space=vmem, size = 0x1000, scoped, tag = 'input window, operand 12, single buffered']
    #allocation18 [shape = 's32[1]{0}', space=sflag, size = 0x4, scoped, tag = 'scoped memory for robot_state_vision_encoder.1']
    #allocation19 [shape = 'u8[512]{0}', space=vmem, size = 0x400, scoped, tag = 'input window, operand 13, single buffered']
    #allocation20 [shape = 'u8[16384]{0}', space=vmem, size = 0x4000, scoped, tag = 'input window, operand 14, single buffered']
    #allocation21 [shape = 's32[1]{0}', space=sflag, size = 0x4, scoped, tag = 'scoped memory for robot_state_vision_encoder.1']
    #allocation22 [shape = 'u8[512]{0}', space=vmem, size = 0x400, scoped, tag = 'input window, operand 15, single buffered']
    #allocation23 [shape = 'u8[2048]{0}', space=vmem, size = 0x800, scoped, tag = 'input window, operand 17, single buffered']
    #allocation24 [shape = 's32[1]{0}', space=sflag, size = 0x4, scoped, tag = 'scoped memory for robot_state_vision_encoder.1']
    #allocation25 [shape = 'u8[2048]{0}', space=vmem, size = 0x800, scoped, tag = 'input window, operand 18, single buffered']
    #allocation26 [shape = 'u8[65536]{0}', space=vmem, size = 0x10000, scoped, tag = 'input window, operand 19, single buffered']
    #allocation27 [shape = 's32[1]{0}', space=sflag, size = 0x4, scoped, tag = 'scoped memory for robot_state_vision_encoder.1']
    #allocation28 [shape = 'u8[2048]{0}', space=vmem, size = 0x800, scoped, tag = 'input window, operand 20, single buffered']
    #allocation29 [shape = 'u8[2048]{0}', space=vmem, size = 0x800, scoped, tag = 'input window, operand 22, single buffered']
    #allocation30 [shape = 's32[1]{0}', space=sflag, size = 0x4, scoped, tag = 'scoped memory for robot_state_vision_encoder.1']
    #allocation31 [shape = 'u8[512]{0}', space=vmem, size = 0x400, scoped, tag = 'input window, operand 23, single buffered']
    #allocation32 [shape = 'u8[512]{0}', space=vmem, size = 0x400, scoped, tag = 'input window, operand 24, single buffered']
    #allocation33 [shape = 's32[1]{0}', space=sflag, size = 0x4, scoped, tag = 'scoped memory for robot_state_vision_encoder.1']
    #allocation34 [shape = 'u8[32768]{0}', space=vmem, size = 0x8000, scoped, tag = 'input window, operand 25, single buffered']
    #allocation35 [shape = 'u8[512]{0}', space=vmem, size = 0x400, scoped, tag = 'input window, operand 26, single buffered']
    #allocation36 [shape = 's32[1]{0}', space=sflag, size = 0x4, scoped, tag = 'scoped memory for robot_state_vision_encoder.1']
    #allocation37 [shape = 'u8[1024]{0}', space=vmem, size = 0x400, scoped, tag = 'output window, operand 0, single buffered']
    %66 = vsyncpa [#allocation3], 0
    %67 = vsyncpa [#allocation6], 0
    %68 = vsyncpa [#allocation9], 0
    %69 = vsyncpa [#allocation12], 0
    %70 = vsyncpa [#allocation15], 0
    %71 = vsyncpa [#allocation18], 0
    %72 = vsyncpa [#allocation21], 0
    %73 = vsyncpa [#allocation24], 0
    %74 = vsyncpa [#allocation27], 0
    %75 = vsyncpa [#allocation30], 0
    %76 = vsyncpa [#allocation33], 0
    %77 = vsyncpa [#allocation36], 0
    %78 = vsyncpa [#allocation4], 0
    // Predicated region
    $region2: #{robot_state_vision_encoder.1} parent=1 // pred_check
      _
    $region3: #{robot_state_vision_encoder.1} parent=1 // pred_check_branch
      %80 = sbr.rel (0) target = $region5
    $region4: #{robot_state_vision_encoder.1} parent=1 // pred_region
      _
    $region5: #{robot_state_vision_encoder.1} parent=1 // pred_fallthru
      _
    // Predicated region
    $region6: #{robot_state_vision_encoder.1} parent=1 // pred_check
      _
    $region7: #{robot_state_vision_encoder.1} parent=1 // pred_check_branch
      %82 = sbr.rel (0) target = $region9
    $region8: #{robot_state_vision_encoder.1} parent=1 // pred_region
      %s84 = ssub.s32 256, 256
      %85 = vsyncadd [#allocation3], %s84
      %s86 = sshll.u32 [#allocation2], 4
      %s87 = int_to_ptr.vmem [resolvable:$true] %s86
      %92 = dma.hbm_to_vmem [thread:$0]  %s3, 256, %s87, [#allocation3], 128, 128, 8
    $region9: #{robot_state_vision_encoder.1} parent=1 // pred_fallthru
      _
    // Predicated region
    $region10: #{robot_state_vision_encoder.1} parent=1 // pred_check
      _
    $region11: #{robot_state_vision_encoder.1} parent=1 // pred_check_branch
      %94 = sbr.rel (0) target = $region13
    $region12: #{robot_state_vision_encoder.1} parent=1 // pred_region
      %s96 = ssub.s32 65536, 65536
      %97 = vsyncadd [#allocation6], %s96
      %s98 = sshll.u32 [#allocation5], 4
      %s99 = int_to_ptr.vmem [resolvable:$true] %s98
      %104 = dma.hbm_to_vmem [thread:$0]  %s5, 65536, %s99, [#allocation6], 512, 512, 32
    $region13: #{robot_state_vision_encoder.1} parent=1 // pred_fallthru
      _
    // Predicated region
    $region14: #{robot_state_vision_encoder.1} parent=1 // pred_check
      _
    $region15: #{robot_state_vision_encoder.1} parent=1 // pred_check_branch
      %106 = sbr.rel (0) target = $region17
    $region16: #{robot_state_vision_encoder.1} parent=1 // pred_region
      %s108 = ssub.s32 64, 64
      %109 = vsyncadd [#allocation6], %s108
      %s111 = sshll.u32 [#allocation7], 4
      %s112 = int_to_ptr.vmem [resolvable:$true] %s111
      %114 = dma.hbm_to_vmem [thread:$0]  %s7, 64, %s112, [#allocation6]
    $region17: #{robot_state_vision_encoder.1} parent=1 // pred_fallthru
      _
    // Predicated region
    $region18: #{robot_state_vision_encoder.1} parent=1 // pred_check
      _
    $region19: #{robot_state_vision_encoder.1} parent=1 // pred_check_branch
      %116 = sbr.rel (0) target = $region21
    $region20: #{robot_state_vision_encoder.1} parent=1 // pred_region
      %s118 = ssub.s32 16384, 16384
      %119 = vsyncadd [#allocation9], %s118
      %s120 = sshll.u32 [#allocation8], 4
      %s121 = int_to_ptr.vmem [resolvable:$true] %s120
      %126 = dma.hbm_to_vmem [thread:$0]  %s9, 16384, %s121, [#allocation9], 256, 256, 16
    $region21: #{robot_state_vision_encoder.1} parent=1 // pred_fallthru
      _
    // Predicated region
    $region22: #{robot_state_vision_encoder.1} parent=1 // pred_check
      _
    $region23: #{robot_state_vision_encoder.1} parent=1 // pred_check_branch
      %128 = sbr.rel (0) target = $region25
    $region24: #{robot_state_vision_encoder.1} parent=1 // pred_region
      %s130 = ssub.s32 32, 32
      %131 = vsyncadd [#allocation9], %s130
      %s133 = sshll.u32 [#allocation10], 4
      %s134 = int_to_ptr.vmem [resolvable:$true] %s133
      %136 = dma.hbm_to_vmem [thread:$0]  %s11, 32, %s134, [#allocation9]
    $region25: #{robot_state_vision_encoder.1} parent=1 // pred_fallthru
      _
    // Predicated region
    $region26: #{robot_state_vision_encoder.1} parent=1 // pred_check
      _
    $region27: #{robot_state_vision_encoder.1} parent=1 // pred_check_branch
      %138 = sbr.rel (0) target = $region29
    $region28: #{robot_state_vision_encoder.1} parent=1 // pred_region
      %s140 = ssub.s32 4096, 4096
      %141 = vsyncadd [#allocation12], %s140
      %s142 = sshll.u32 [#allocation11], 4
      %s143 = int_to_ptr.vmem [resolvable:$true] %s142
      %148 = dma.hbm_to_vmem [thread:$0]  %s13, 4096, %s143, [#allocation12], 128, 128, 8
    $region29: #{robot_state_vision_encoder.1} parent=1 // pred_fallthru
      _
    // Predicated region
    $region30: #{robot_state_vision_encoder.1} parent=1 // pred_check
      _
    $region31: #{robot_state_vision_encoder.1} parent=1 // pred_check_branch
      %150 = sbr.rel (0) target = $region33
    $region32: #{robot_state_vision_encoder.1} parent=1 // pred_region
      %s152 = ssub.s32 16, 16
      %153 = vsyncadd [#allocation12], %s152
      %s155 = sshll.u32 [#allocation13], 4
      %s156 = int_to_ptr.vmem [resolvable:$true] %s155
      %158 = dma.hbm_to_vmem [thread:$0]  %s15, 16, %s156, [#allocation12]
    $region33: #{robot_state_vision_encoder.1} parent=1 // pred_fallthru
      _
    // Predicated region
    $region34: #{robot_state_vision_encoder.1} parent=1 // pred_check
      _
    $region35: #{robot_state_vision_encoder.1} parent=1 // pred_check_branch
      %160 = sbr.rel (0) target = $region37
    $region36: #{robot_state_vision_encoder.1} parent=1 // pred_region
      _
    $region37: #{robot_state_vision_encoder.1} parent=1 // pred_fallthru
      _
    // Predicated region
    $region38: #{robot_state_vision_encoder.1} parent=1 // pred_check
      _
    $region39: #{robot_state_vision_encoder.1} parent=1 // pred_check_branch
      %162 = sbr.rel (0) target = $region41
    $region40: #{robot_state_vision_encoder.1} parent=1 // pred_region
      %s164 = ssub.s32 16, 16
      %165 = vsyncadd [#allocation15], %s164
      %s167 = sshll.u32 [#allocation14], 4
      %s168 = int_to_ptr.vmem [resolvable:$true] %s167
      %170 = dma.hbm_to_vmem [thread:$0]  %s19, 16, %s168, [#allocation15]
    $region41: #{robot_state_vision_encoder.1} parent=1 // pred_fallthru
      _
    // Predicated region
    $region42: #{robot_state_vision_encoder.1} parent=1 // pred_check
      _
    $region43: #{robot_state_vision_encoder.1} parent=1 // pred_check_branch
      %172 = sbr.rel (0) target = $region45
    $region44: #{robot_state_vision_encoder.1} parent=1 // pred_region
      _
    $region45: #{robot_state_vision_encoder.1} parent=1 // pred_fallthru
      _
    // Predicated region
    $region46: #{robot_state_vision_encoder.1} parent=1 // pred_check
      _
    $region47: #{robot_state_vision_encoder.1} parent=1 // pred_check_branch
      %174 = sbr.rel (0) target = $region49
    $region48: #{robot_state_vision_encoder.1} parent=1 // pred_region
      %s176 = ssub.s32 16, 16
      %177 = vsyncadd [#allocation15], %s176
      %s179 = sshll.u32 [#allocation16], 4
      %s180 = int_to_ptr.vmem [resolvable:$true] %s179
      %182 = dma.hbm_to_vmem [thread:$0]  %s23, 16, %s180, [#allocation15]
    $region49: #{robot_state_vision_encoder.1} parent=1 // pred_fallthru
      _
    // Predicated region
    $region50: #{robot_state_vision_encoder.1} parent=1 // pred_check
      _
    $region51: #{robot_state_vision_encoder.1} parent=1 // pred_check_branch
      %184 = sbr.rel (0) target = $region53
    $region52: #{robot_state_vision_encoder.1} parent=1 // pred_region
      %s186 = ssub.s32 128, 128
      %187 = vsyncadd [#allocation18], %s186
      %s189 = sshll.u32 [#allocation17], 4
      %s190 = int_to_ptr.vmem [resolvable:$true] %s189
      %192 = dma.hbm_to_vmem [thread:$0]  %s25, 128, %s190, [#allocation18]
    $region53: #{robot_state_vision_encoder.1} parent=1 // pred_fallthru
      _
    // Predicated region
    $region54: #{robot_state_vision_encoder.1} parent=1 // pred_check
      _
    $region55: #{robot_state_vision_encoder.1} parent=1 // pred_check_branch
      %194 = sbr.rel (0) target = $region57
    $region56: #{robot_state_vision_encoder.1} parent=1 // pred_region
      %s196 = ssub.s32 16, 16
      %197 = vsyncadd [#allocation18], %s196
      %s199 = sshll.u32 [#allocation19], 4
      %s200 = int_to_ptr.vmem [resolvable:$true] %s199
      %202 = dma.hbm_to_vmem [thread:$0]  %s27, 16, %s200, [#allocation18]
    $region57: #{robot_state_vision_encoder.1} parent=1 // pred_fallthru
      _
    // Predicated region
    $region58: #{robot_state_vision_encoder.1} parent=1 // pred_check
      _
    $region59: #{robot_state_vision_encoder.1} parent=1 // pred_check_branch
      %204 = sbr.rel (0) target = $region61
    $region60: #{robot_state_vision_encoder.1} parent=1 // pred_region
      %s206 = ssub.s32 512, 512
      %207 = vsyncadd [#allocation21], %s206
      %s208 = sshll.u32 [#allocation20], 4
      %s209 = int_to_ptr.vmem [resolvable:$true] %s208
      %214 = dma.hbm_to_vmem [thread:$0]  %s29, 512, %s209, [#allocation21], 128, 128, 8
    $region61: #{robot_state_vision_encoder.1} parent=1 // pred_fallthru
      _
    // Predicated region
    $region62: #{robot_state_vision_encoder.1} parent=1 // pred_check
      _
    $region63: #{robot_state_vision_encoder.1} parent=1 // pred_check_branch
      %216 = sbr.rel (0) target = $region65
    $region64: #{robot_state_vision_encoder.1} parent=1 // pred_region
      %s218 = ssub.s32 16, 16
      %219 = vsyncadd [#allocation21], %s218
      %s221 = sshll.u32 [#allocation22], 4
      %s222 = int_to_ptr.vmem [resolvable:$true] %s221
      %224 = dma.hbm_to_vmem [thread:$0]  %s31, 16, %s222, [#allocation21]
    $region65: #{robot_state_vision_encoder.1} parent=1 // pred_fallthru
      _
    // Predicated region
    $region66: #{robot_state_vision_encoder.1} parent=1 // pred_check
      _
    $region67: #{robot_state_vision_encoder.1} parent=1 // pred_check_branch
      %226 = sbr.rel (0) target = $region69
    $region68: #{robot_state_vision_encoder.1} parent=1 // pred_region
      _
    $region69: #{robot_state_vision_encoder.1} parent=1 // pred_fallthru
      _
    // Predicated region
    $region70: #{robot_state_vision_encoder.1} parent=1 // pred_check
      _
    $region71: #{robot_state_vision_encoder.1} parent=1 // pred_check_branch
      %228 = sbr.rel (0) target = $region73
    $region72: #{robot_state_vision_encoder.1} parent=1 // pred_region
      %s230 = ssub.s32 64, 64
      %231 = vsyncadd [#allocation24], %s230
      %s232 = sshll.u32 [#allocation23], 4
      %s233 = int_to_ptr.vmem [resolvable:$true] %s232
      %238 = dma.hbm_to_vmem [thread:$0]  %s35, 64, %s233, [#allocation24], 16, 16, 1
    $region73: #{robot_state_vision_encoder.1} parent=1 // pred_fallthru
      _
    // Predicated region
    $region74: #{robot_state_vision_encoder.1} parent=1 // pred_check
      _
    $region75: #{robot_state_vision_encoder.1} parent=1 // pred_check_branch
      %240 = sbr.rel (0) target = $region77
    $region76: #{robot_state_vision_encoder.1} parent=1 // pred_region
      %s242 = ssub.s32 64, 64
      %243 = vsyncadd [#allocation24], %s242
      %s244 = sshll.u32 [#allocation25], 4
      %s245 = int_to_ptr.vmem [resolvable:$true] %s244
      %250 = dma.hbm_to_vmem [thread:$0]  %s37, 64, %s245, [#allocation24], 16, 16, 1
    $region77: #{robot_state_vision_encoder.1} parent=1 // pred_fallthru
      _
    // Predicated region
    $region78: #{robot_state_vision_encoder.1} parent=1 // pred_check
      _
    $region79: #{robot_state_vision_encoder.1} parent=1 // pred_check_branch
      %252 = sbr.rel (0) target = $region81
    $region80: #{robot_state_vision_encoder.1} parent=1 // pred_region
      %s254 = ssub.s32 2048, 2048
      %255 = vsyncadd [#allocation27], %s254
      %s256 = sshll.u32 [#allocation26], 4
      %s257 = int_to_ptr.vmem [resolvable:$true] %s256
      %262 = dma.hbm_to_vmem [thread:$0]  %s39, 2048, %s257, [#allocation27], 128, 128, 8
    $region81: #{robot_state_vision_encoder.1} parent=1 // pred_fallthru
      _
    // Predicated region
    $region82: #{robot_state_vision_encoder.1} parent=1 // pred_check
      _
    $region83: #{robot_state_vision_encoder.1} parent=1 // pred_check_branch
      %264 = sbr.rel (0) target = $region85
    $region84: #{robot_state_vision_encoder.1} parent=1 // pred_region
      %s266 = ssub.s32 64, 64
      %267 = vsyncadd [#allocation27], %s266
      %s268 = sshll.u32 [#allocation28], 4
      %s269 = int_to_ptr.vmem [resolvable:$true] %s268
      %274 = dma.hbm_to_vmem [thread:$0]  %s41, 64, %s269, [#allocation27], 16, 16, 1
    $region85: #{robot_state_vision_encoder.1} parent=1 // pred_fallthru
      _
    // Predicated region
    $region86: #{robot_state_vision_encoder.1} parent=1 // pred_check
      _
    $region87: #{robot_state_vision_encoder.1} parent=1 // pred_check_branch
      %276 = sbr.rel (0) target = $region89
    $region88: #{robot_state_vision_encoder.1} parent=1 // pred_region
      _
    $region89: #{robot_state_vision_encoder.1} parent=1 // pred_fallthru
      _
    // Predicated region
    $region90: #{robot_state_vision_encoder.1} parent=1 // pred_check
      _
    $region91: #{robot_state_vision_encoder.1} parent=1 // pred_check_branch
      %278 = sbr.rel (0) target = $region93
    $region92: #{robot_state_vision_encoder.1} parent=1 // pred_region
      %s280 = ssub.s32 64, 64
      %281 = vsyncadd [#allocation30], %s280
      %s282 = sshll.u32 [#allocation29], 4
      %s283 = int_to_ptr.vmem [resolvable:$true] %s282
      %288 = dma.hbm_to_vmem [thread:$0]  %s45, 64, %s283, [#allocation30], 16, 16, 1
    $region93: #{robot_state_vision_encoder.1} parent=1 // pred_fallthru
      _
    // Predicated region
    $region94: #{robot_state_vision_encoder.1} parent=1 // pred_check
      _
    $region95: #{robot_state_vision_encoder.1} parent=1 // pred_check_branch
      %290 = sbr.rel (0) target = $region97
    $region96: #{robot_state_vision_encoder.1} parent=1 // pred_region
      %s292 = ssub.s32 16, 16
      %293 = vsyncadd [#allocation30], %s292
      %s295 = sshll.u32 [#allocation31], 4
      %s296 = int_to_ptr.vmem [resolvable:$true] %s295
      %298 = dma.hbm_to_vmem [thread:$0]  %s47, 16, %s296, [#allocation30]
    $region97: #{robot_state_vision_encoder.1} parent=1 // pred_fallthru
      _
    // Predicated region
    $region98: #{robot_state_vision_encoder.1} parent=1 // pred_check
      _
    $region99: #{robot_state_vision_encoder.1} parent=1 // pred_check_branch
      %300 = sbr.rel (0) target = $region101
    $region100: #{robot_state_vision_encoder.1} parent=1 // pred_region
      %s302 = ssub.s32 16, 16
      %303 = vsyncadd [#allocation33], %s302
      %s305 = sshll.u32 [#allocation32], 4
      %s306 = int_to_ptr.vmem [resolvable:$true] %s305
      %308 = dma.hbm_to_vmem [thread:$0]  %s49, 16, %s306, [#allocation33]
    $region101: #{robot_state_vision_encoder.1} parent=1 // pred_fallthru
      _
    // Predicated region
    $region102: #{robot_state_vision_encoder.1} parent=1 // pred_check
      _
    $region103: #{robot_state_vision_encoder.1} parent=1 // pred_check_branch
      %310 = sbr.rel (0) target = $region105
    $region104: #{robot_state_vision_encoder.1} parent=1 // pred_region
      %s312 = ssub.s32 1024, 1024
      %313 = vsyncadd [#allocation33], %s312
      %s314 = sshll.u32 [#allocation34], 4
      %s315 = int_to_ptr.vmem [resolvable:$true] %s314
      %320 = dma.hbm_to_vmem [thread:$0]  %s51, 1024, %s315, [#allocation33], 256, 256, 16
    $region105: #{robot_state_vision_encoder.1} parent=1 // pred_fallthru
      _
    // Predicated region
    $region106: #{robot_state_vision_encoder.1} parent=1 // pred_check
      _
    $region107: #{robot_state_vision_encoder.1} parent=1 // pred_check_branch
      %322 = sbr.rel (0) target = $region109
    $region108: #{robot_state_vision_encoder.1} parent=1 // pred_region
      %s324 = ssub.s32 16, 16
      %325 = vsyncadd [#allocation36], %s324
      %s327 = sshll.u32 [#allocation35], 4
      %s328 = int_to_ptr.vmem [resolvable:$true] %s327
      %330 = dma.hbm_to_vmem [thread:$0]  %s53, 16, %s328, [#allocation36]
    $region109: #{robot_state_vision_encoder.1} parent=1 // pred_fallthru
      _
    // Predicated region
    $region110: #{robot_state_vision_encoder.1} parent=1 // pred_check
      _
    $region111: #{robot_state_vision_encoder.1} parent=1 // pred_check_branch
      %332 = sbr.rel (0) target = $region113
    $region112: #{robot_state_vision_encoder.1} parent=1 // pred_region
      _
    $region113: #{robot_state_vision_encoder.1} parent=1 // pred_fallthru
      _
    // Predicated region
    $region114: #{robot_state_vision_encoder.1} parent=1 // pred_check
      _
    $region115: #{robot_state_vision_encoder.1} parent=1 // pred_check_branch
      %334 = sbr.rel (0) target = $region117
    $region116: #{robot_state_vision_encoder.1} parent=1 // pred_region
      _
    $region117: #{robot_state_vision_encoder.1} parent=1 // pred_fallthru
      _
    // Predicated region
    $region118: #{robot_state_vision_encoder.1} parent=1 // pred_check
      _
    $region119: #{robot_state_vision_encoder.1} parent=1 // pred_check_branch
      %336 = sbr.rel (0) target = $region121
    $region120: #{robot_state_vision_encoder.1} parent=1 // pred_region
      _
    $region121: #{robot_state_vision_encoder.1} parent=1 // pred_fallthru
      _
    // Predicated region
    $region122: #{robot_state_vision_encoder.1} parent=1 // pred_check
      _
    $region123: #{robot_state_vision_encoder.1} parent=1 // pred_check_branch
      %338 = sbr.rel (0) target = $region125
    $region124: #{robot_state_vision_encoder.1} parent=1 // pred_region
      %339 = dma.done [#allocation3], 256
    $region125: #{robot_state_vision_encoder.1} parent=1 // pred_fallthru
      _
    // Predicated region
    $region126: #{robot_state_vision_encoder.1} parent=1 // pred_check
      _
    $region127: #{robot_state_vision_encoder.1} parent=1 // pred_check_branch
      %341 = sbr.rel (0) target = $region129
    $region128: #{robot_state_vision_encoder.1} parent=1 // pred_region
      %342 = dma.done [#allocation6], 65536
    $region129: #{robot_state_vision_encoder.1} parent=1 // pred_fallthru
      _
    // Predicated region
    $region130: #{robot_state_vision_encoder.1} parent=1 // pred_check
      _
    $region131: #{robot_state_vision_encoder.1} parent=1 // pred_check_branch
      %344 = sbr.rel (0) target = $region133
    $region132: #{robot_state_vision_encoder.1} parent=1 // pred_region
      %345 = dma.done [#allocation6], 64
    $region133: #{robot_state_vision_encoder.1} parent=1 // pred_fallthru
      _
    // Predicated region
    $region134: #{robot_state_vision_encoder.1} parent=1 // pred_check
      _
    $region135: #{robot_state_vision_encoder.1} parent=1 // pred_check_branch
      %347 = sbr.rel (0) target = $region137
    $region136: #{robot_state_vision_encoder.1} parent=1 // pred_region
      %348 = dma.done [#allocation9], 16384
    $region137: #{robot_state_vision_encoder.1} parent=1 // pred_fallthru
      _
    // Predicated region
    $region138: #{robot_state_vision_encoder.1} parent=1 // pred_check
      _
    $region139: #{robot_state_vision_encoder.1} parent=1 // pred_check_branch
      %350 = sbr.rel (0) target = $region141
    $region140: #{robot_state_vision_encoder.1} parent=1 // pred_region
      %351 = dma.done [#allocation9], 32
    $region141: #{robot_state_vision_encoder.1} parent=1 // pred_fallthru
      _
    // Predicated region
    $region142: #{robot_state_vision_encoder.1} parent=1 // pred_check
      _
    $region143: #{robot_state_vision_encoder.1} parent=1 // pred_check_branch
      %353 = sbr.rel (0) target = $region145
    $region144: #{robot_state_vision_encoder.1} parent=1 // pred_region
      %354 = dma.done [#allocation12], 4096
    $region145: #{robot_state_vision_encoder.1} parent=1 // pred_fallthru
      _
    // Predicated region
    $region146: #{robot_state_vision_encoder.1} parent=1 // pred_check
      _
    $region147: #{robot_state_vision_encoder.1} parent=1 // pred_check_branch
      %356 = sbr.rel (0) target = $region149
    $region148: #{robot_state_vision_encoder.1} parent=1 // pred_region
      %357 = dma.done [#allocation12], 16
    $region149: #{robot_state_vision_encoder.1} parent=1 // pred_fallthru
      _
    // Predicated region
    $region150: #{robot_state_vision_encoder.1} parent=1 // pred_check
      _
    $region151: #{robot_state_vision_encoder.1} parent=1 // pred_check_branch
      %359 = sbr.rel (0) target = $region153
    $region152: #{robot_state_vision_encoder.1} parent=1 // pred_region
      %360 = dma.done [#allocation15], 16
    $region153: #{robot_state_vision_encoder.1} parent=1 // pred_fallthru
      _
    // Predicated region
    $region154: #{robot_state_vision_encoder.1} parent=1 // pred_check
      _
    $region155: #{robot_state_vision_encoder.1} parent=1 // pred_check_branch
      %362 = sbr.rel (0) target = $region157
    $region156: #{robot_state_vision_encoder.1} parent=1 // pred_region
      %363 = dma.done [#allocation15], 16
    $region157: #{robot_state_vision_encoder.1} parent=1 // pred_fallthru
      _
    // Predicated region
    $region158: #{robot_state_vision_encoder.1} parent=1 // pred_check
      _
    $region159: #{robot_state_vision_encoder.1} parent=1 // pred_check_branch
      %365 = sbr.rel (0) target = $region161
    $region160: #{robot_state_vision_encoder.1} parent=1 // pred_region
      %366 = dma.done [#allocation18], 128
    $region161: #{robot_state_vision_encoder.1} parent=1 // pred_fallthru
      _
    // Predicated region
    $region162: #{robot_state_vision_encoder.1} parent=1 // pred_check
      _
    $region163: #{robot_state_vision_encoder.1} parent=1 // pred_check_branch
      %368 = sbr.rel (0) target = $region165
    $region164: #{robot_state_vision_encoder.1} parent=1 // pred_region
      %369 = dma.done [#allocation18], 16
    $region165: #{robot_state_vision_encoder.1} parent=1 // pred_fallthru
      _
    // Predicated region
    $region166: #{robot_state_vision_encoder.1} parent=1 // pred_check
      _
    $region167: #{robot_state_vision_encoder.1} parent=1 // pred_check_branch
      %371 = sbr.rel (0) target = $region169
    $region168: #{robot_state_vision_encoder.1} parent=1 // pred_region
      %372 = dma.done [#allocation21], 512
    $region169: #{robot_state_vision_encoder.1} parent=1 // pred_fallthru
      _
    // Predicated region
    $region170: #{robot_state_vision_encoder.1} parent=1 // pred_check
      _
    $region171: #{robot_state_vision_encoder.1} parent=1 // pred_check_branch
      %374 = sbr.rel (0) target = $region173
    $region172: #{robot_state_vision_encoder.1} parent=1 // pred_region
      %375 = dma.done [#allocation21], 16
    $region173: #{robot_state_vision_encoder.1} parent=1 // pred_fallthru
      _
    // Predicated region
    $region174: #{robot_state_vision_encoder.1} parent=1 // pred_check
      _
    $region175: #{robot_state_vision_encoder.1} parent=1 // pred_check_branch
      %377 = sbr.rel (0) target = $region177
    $region176: #{robot_state_vision_encoder.1} parent=1 // pred_region
      %378 = dma.done [#allocation24], 64
    $region177: #{robot_state_vision_encoder.1} parent=1 // pred_fallthru
      _
    // Predicated region
    $region178: #{robot_state_vision_encoder.1} parent=1 // pred_check
      _
    $region179: #{robot_state_vision_encoder.1} parent=1 // pred_check_branch
      %380 = sbr.rel (0) target = $region181
    $region180: #{robot_state_vision_encoder.1} parent=1 // pred_region
      %381 = dma.done [#allocation24], 64
    $region181: #{robot_state_vision_encoder.1} parent=1 // pred_fallthru
      _
    // Predicated region
    $region182: #{robot_state_vision_encoder.1} parent=1 // pred_check
      _
    $region183: #{robot_state_vision_encoder.1} parent=1 // pred_check_branch
      %383 = sbr.rel (0) target = $region185
    $region184: #{robot_state_vision_encoder.1} parent=1 // pred_region
      %384 = dma.done [#allocation27], 2048
    $region185: #{robot_state_vision_encoder.1} parent=1 // pred_fallthru
      _
    // Predicated region
    $region186: #{robot_state_vision_encoder.1} parent=1 // pred_check
      _
    $region187: #{robot_state_vision_encoder.1} parent=1 // pred_check_branch
      %386 = sbr.rel (0) target = $region189
    $region188: #{robot_state_vision_encoder.1} parent=1 // pred_region
      %387 = dma.done [#allocation27], 64
    $region189: #{robot_state_vision_encoder.1} parent=1 // pred_fallthru
      _
    // Predicated region
    $region190: #{robot_state_vision_encoder.1} parent=1 // pred_check
      _
    $region191: #{robot_state_vision_encoder.1} parent=1 // pred_check_branch
      %389 = sbr.rel (0) target = $region193
    $region192: #{robot_state_vision_encoder.1} parent=1 // pred_region
      %390 = dma.done [#allocation30], 64
    $region193: #{robot_state_vision_encoder.1} parent=1 // pred_fallthru
      _
    // Predicated region
    $region194: #{robot_state_vision_encoder.1} parent=1 // pred_check
      _
    $region195: #{robot_state_vision_encoder.1} parent=1 // pred_check_branch
      %392 = sbr.rel (0) target = $region197
    $region196: #{robot_state_vision_encoder.1} parent=1 // pred_region
      %393 = dma.done [#allocation30], 16
    $region197: #{robot_state_vision_encoder.1} parent=1 // pred_fallthru
      _
    // Predicated region
    $region198: #{robot_state_vision_encoder.1} parent=1 // pred_check
      _
    $region199: #{robot_state_vision_encoder.1} parent=1 // pred_check_branch
      %395 = sbr.rel (0) target = $region201
    $region200: #{robot_state_vision_encoder.1} parent=1 // pred_region
      %396 = dma.done [#allocation33], 16
    $region201: #{robot_state_vision_encoder.1} parent=1 // pred_fallthru
      _
    // Predicated region
    $region202: #{robot_state_vision_encoder.1} parent=1 // pred_check
      _
    $region203: #{robot_state_vision_encoder.1} parent=1 // pred_check_branch
      %398 = sbr.rel (0) target = $region205
    $region204: #{robot_state_vision_encoder.1} parent=1 // pred_region
      %399 = dma.done [#allocation33], 1024
    $region205: #{robot_state_vision_encoder.1} parent=1 // pred_fallthru
      _
    // Predicated region
    $region206: #{robot_state_vision_encoder.1} parent=1 // pred_check
      _
    $region207: #{robot_state_vision_encoder.1} parent=1 // pred_check_branch
      %401 = sbr.rel (0) target = $region209
    $region208: #{robot_state_vision_encoder.1} parent=1 // pred_region
      %402 = dma.done [#allocation36], 16
    $region209: #{robot_state_vision_encoder.1} parent=1 // pred_fallthru
      _
    %v403 = vld [vmem:[%s1] sm:$0xff]
    %v404 = vld [vmem:[%s1 + $0x8] sm:$0xff]
    %v405 = vld [vmem:[#allocation5] sm:$0xff]
    %v406 = vld [vmem:[#allocation5 + $0x8] sm:$0xff]
    %v407 = vld [vmem:[#allocation5 + $0x10] sm:$0xff]
    %v408 = vld [vmem:[#allocation5 + $0x18] sm:$0xff]
    %v409 = vld [vmem:[#allocation5 + $0x20] sm:$0xff]
    %v410 = vld [vmem:[#allocation5 + $0x28] sm:$0xff]
    %v411 = vld [vmem:[#allocation5 + $0x30] sm:$0xff]
    %v412 = vld [vmem:[#allocation5 + $0x38] sm:$0xff]
    %v413 = vld [vmem:[#allocation5 + $0x40] sm:$0xff]
    %v414 = vld [vmem:[#allocation5 + $0x48] sm:$0xff]
    %v415 = vld [vmem:[#allocation5 + $0x50] sm:$0xff]
    %v416 = vld [vmem:[#allocation5 + $0x58] sm:$0xff]
    %v417 = vld [vmem:[#allocation5 + $0x60] sm:$0xff]
    %v418 = vld [vmem:[#allocation5 + $0x68] sm:$0xff]
    %v419 = vld [vmem:[#allocation5 + $0x70] sm:$0xff]
    %v420 = vld [vmem:[#allocation5 + $0x78] sm:$0xff]
    %v421 = vld [vmem:[#allocation5 + $0x80] sm:$0xff]
    %v422 = vld [vmem:[#allocation5 + $0x88] sm:$0xff]
    %v423 = vld [vmem:[#allocation5 + $0x90] sm:$0xff]
    %v424 = vld [vmem:[#allocation5 + $0x98] sm:$0xff]
    %v425 = vld [vmem:[#allocation5 + $0xa0] sm:$0xff]
    %v426 = vld [vmem:[#allocation5 + $0xa8] sm:$0xff]
    %v427 = vld [vmem:[#allocation5 + $0xb0] sm:$0xff]
    %v428 = vld [vmem:[#allocation5 + $0xb8] sm:$0xff]
    %v429 = vld [vmem:[#allocation5 + $0xc0] sm:$0xff]
    %v430 = vld [vmem:[#allocation5 + $0xc8] sm:$0xff]
    %v431 = vld [vmem:[#allocation5 + $0xd0] sm:$0xff]
    %v432 = vld [vmem:[#allocation5 + $0xd8] sm:$0xff]
    %v433 = vld [vmem:[#allocation5 + $0xe0] sm:$0xff]
    %v434 = vld [vmem:[#allocation5 + $0xe8] sm:$0xff]
    %v435 = vld [vmem:[#allocation5 + $0xf0] sm:$0xff]
    %v436 = vld [vmem:[#allocation5 + $0xf8] sm:$0xff]
    %v437 = vld [vmem:[#allocation5 + $0x100] sm:$0xff]
    %v438 = vld [vmem:[#allocation5 + $0x108] sm:$0xff]
    %v439 = vld [vmem:[#allocation5 + $0x110] sm:$0xff]
    %v440 = vld [vmem:[#allocation5 + $0x118] sm:$0xff]
    %v441 = vld [vmem:[#allocation5 + $0x120] sm:$0xff]
    %v442 = vld [vmem:[#allocation5 + $0x128] sm:$0xff]
    %v443 = vld [vmem:[#allocation5 + $0x130] sm:$0xff]
    %v444 = vld [vmem:[#allocation5 + $0x138] sm:$0xff]
    %v445 = vld [vmem:[#allocation5 + $0x140] sm:$0xff]
    %v446 = vld [vmem:[#allocation5 + $0x148] sm:$0xff]
    %v447 = vld [vmem:[#allocation5 + $0x150] sm:$0xff]
    %v448 = vld [vmem:[#allocation5 + $0x158] sm:$0xff]
    %v449 = vld [vmem:[#allocation5 + $0x160] sm:$0xff]
    %v450 = vld [vmem:[#allocation5 + $0x168] sm:$0xff]
    %v451 = vld [vmem:[#allocation5 + $0x170] sm:$0xff]
    %v452 = vld [vmem:[#allocation5 + $0x178] sm:$0xff]
    %v453 = vld [vmem:[#allocation5 + $0x180] sm:$0xff]
    %v454 = vld [vmem:[#allocation5 + $0x188] sm:$0xff]
    %v455 = vld [vmem:[#allocation5 + $0x190] sm:$0xff]
    %v456 = vld [vmem:[#allocation5 + $0x198] sm:$0xff]
    %v457 = vld [vmem:[#allocation5 + $0x1a0] sm:$0xff]
    %v458 = vld [vmem:[#allocation5 + $0x1a8] sm:$0xff]
    %v459 = vld [vmem:[#allocation5 + $0x1b0] sm:$0xff]
    %v460 = vld [vmem:[#allocation5 + $0x1b8] sm:$0xff]
    %v461 = vld [vmem:[#allocation5 + $0x1c0] sm:$0xff]
    %v462 = vld [vmem:[#allocation5 + $0x1c8] sm:$0xff]
    %v463 = vld [vmem:[#allocation5 + $0x1d0] sm:$0xff]
    %v464 = vld [vmem:[#allocation5 + $0x1d8] sm:$0xff]
    %v465 = vld [vmem:[#allocation5 + $0x1e0] sm:$0xff]
    %v466 = vld [vmem:[#allocation5 + $0x1e8] sm:$0xff]
    %v467 = vld [vmem:[#allocation5 + $0x1f0] sm:$0xff]
    %v468 = vld [vmem:[#allocation5 + $0x1f8] sm:$0xff]
    %v469 = vld [vmem:[#allocation5 + $0x200] sm:$0xff]
    %v470 = vld [vmem:[#allocation5 + $0x208] sm:$0xff]
    %v471 = vld [vmem:[#allocation5 + $0x210] sm:$0xff]
    %v472 = vld [vmem:[#allocation5 + $0x218] sm:$0xff]
    %v473 = vld [vmem:[#allocation5 + $0x220] sm:$0xff]
    %v474 = vld [vmem:[#allocation5 + $0x228] sm:$0xff]
    %v475 = vld [vmem:[#allocation5 + $0x230] sm:$0xff]
    %v476 = vld [vmem:[#allocation5 + $0x238] sm:$0xff]
    %v477 = vld [vmem:[#allocation5 + $0x240] sm:$0xff]
    %v478 = vld [vmem:[#allocation5 + $0x248] sm:$0xff]
    %v479 = vld [vmem:[#allocation5 + $0x250] sm:$0xff]
    %v480 = vld [vmem:[#allocation5 + $0x258] sm:$0xff]
    %v481 = vld [vmem:[#allocation5 + $0x260] sm:$0xff]
    %v482 = vld [vmem:[#allocation5 + $0x268] sm:$0xff]
    %v483 = vld [vmem:[#allocation5 + $0x270] sm:$0xff]
    %v484 = vld [vmem:[#allocation5 + $0x278] sm:$0xff]
    %v485 = vld [vmem:[#allocation5 + $0x280] sm:$0xff]
    %v486 = vld [vmem:[#allocation5 + $0x288] sm:$0xff]
    %v487 = vld [vmem:[#allocation5 + $0x290] sm:$0xff]
    %v488 = vld [vmem:[#allocation5 + $0x298] sm:$0xff]
    %v489 = vld [vmem:[#allocation5 + $0x2a0] sm:$0xff]
    %v490 = vld [vmem:[#allocation5 + $0x2a8] sm:$0xff]
    %v491 = vld [vmem:[#allocation5 + $0x2b0] sm:$0xff]
    %v492 = vld [vmem:[#allocation5 + $0x2b8] sm:$0xff]
    %v493 = vld [vmem:[#allocation5 + $0x2c0] sm:$0xff]
    %v494 = vld [vmem:[#allocation5 + $0x2c8] sm:$0xff]
    %v495 = vld [vmem:[#allocation5 + $0x2d0] sm:$0xff]
    %v496 = vld [vmem:[#allocation5 + $0x2d8] sm:$0xff]
    %v497 = vld [vmem:[#allocation5 + $0x2e0] sm:$0xff]
    %v498 = vld [vmem:[#allocation5 + $0x2e8] sm:$0xff]
    %v499 = vld [vmem:[#allocation5 + $0x2f0] sm:$0xff]
    %v500 = vld [vmem:[#allocation5 + $0x2f8] sm:$0xff]
    %v501 = vld [vmem:[#allocation5 + $0x300] sm:$0xff]
    %v502 = vld [vmem:[#allocation5 + $0x308] sm:$0xff]
    %v503 = vld [vmem:[#allocation5 + $0x310] sm:$0xff]
    %v504 = vld [vmem:[#allocation5 + $0x318] sm:$0xff]
    %v505 = vld [vmem:[#allocation5 + $0x320] sm:$0xff]
    %v506 = vld [vmem:[#allocation5 + $0x328] sm:$0xff]
    %v507 = vld [vmem:[#allocation5 + $0x330] sm:$0xff]
    %v508 = vld [vmem:[#allocation5 + $0x338] sm:$0xff]
    %v509 = vld [vmem:[#allocation5 + $0x340] sm:$0xff]
    %v510 = vld [vmem:[#allocation5 + $0x348] sm:$0xff]
    %v511 = vld [vmem:[#allocation5 + $0x350] sm:$0xff]
    %v512 = vld [vmem:[#allocation5 + $0x358] sm:$0xff]
    %v513 = vld [vmem:[#allocation5 + $0x360] sm:$0xff]
    %v514 = vld [vmem:[#allocation5 + $0x368] sm:$0xff]
    %v515 = vld [vmem:[#allocation5 + $0x370] sm:$0xff]
    %v516 = vld [vmem:[#allocation5 + $0x378] sm:$0xff]
    %v517 = vld [vmem:[#allocation5 + $0x380] sm:$0xff]
    %v518 = vld [vmem:[#allocation5 + $0x388] sm:$0xff]
    %v519 = vld [vmem:[#allocation5 + $0x390] sm:$0xff]
    %v520 = vld [vmem:[#allocation5 + $0x398] sm:$0xff]
    %v521 = vld [vmem:[#allocation5 + $0x3a0] sm:$0xff]
    %v522 = vld [vmem:[#allocation5 + $0x3a8] sm:$0xff]
    %v523 = vld [vmem:[#allocation5 + $0x3b0] sm:$0xff]
    %v524 = vld [vmem:[#allocation5 + $0x3b8] sm:$0xff]
    %v525 = vld [vmem:[#allocation5 + $0x3c0] sm:$0xff]
    %v526 = vld [vmem:[#allocation5 + $0x3c8] sm:$0xff]
    %v527 = vld [vmem:[#allocation5 + $0x3d0] sm:$0xff]
    %v528 = vld [vmem:[#allocation5 + $0x3d8] sm:$0xff]
    %v529 = vld [vmem:[#allocation5 + $0x3e0] sm:$0xff]
    %v530 = vld [vmem:[#allocation5 + $0x3e8] sm:$0xff]
    %v531 = vld [vmem:[#allocation5 + $0x3f0] sm:$0xff]
    %v532 = vld [vmem:[#allocation5 + $0x3f8] sm:$0xff]
    %v533 = vld [vmem:[#allocation5 + $0x400] sm:$0xff]
    %v534 = vld [vmem:[#allocation5 + $0x408] sm:$0xff]
    %v535 = vld [vmem:[#allocation5 + $0x410] sm:$0xff]
    %v536 = vld [vmem:[#allocation5 + $0x418] sm:$0xff]
    %v537 = vld [vmem:[#allocation5 + $0x420] sm:$0xff]
    %v538 = vld [vmem:[#allocation5 + $0x428] sm:$0xff]
    %v539 = vld [vmem:[#allocation5 + $0x430] sm:$0xff]
    %v540 = vld [vmem:[#allocation5 + $0x438] sm:$0xff]
    %v541 = vld [vmem:[#allocation5 + $0x440] sm:$0xff]
    %v542 = vld [vmem:[#allocation5 + $0x448] sm:$0xff]
    %v543 = vld [vmem:[#allocation5 + $0x450] sm:$0xff]
    %v544 = vld [vmem:[#allocation5 + $0x458] sm:$0xff]
    %v545 = vld [vmem:[#allocation5 + $0x460] sm:$0xff]
    %v546 = vld [vmem:[#allocation5 + $0x468] sm:$0xff]
    %v547 = vld [vmem:[#allocation5 + $0x470] sm:$0xff]
    %v548 = vld [vmem:[#allocation5 + $0x478] sm:$0xff]
    %v549 = vld [vmem:[#allocation5 + $0x480] sm:$0xff]
    %v550 = vld [vmem:[#allocation5 + $0x488] sm:$0xff]
    %v551 = vld [vmem:[#allocation5 + $0x490] sm:$0xff]
    %v552 = vld [vmem:[#allocation5 + $0x498] sm:$0xff]
    %v553 = vld [vmem:[#allocation5 + $0x4a0] sm:$0xff]
    %v554 = vld [vmem:[#allocation5 + $0x4a8] sm:$0xff]
    %v555 = vld [vmem:[#allocation5 + $0x4b0] sm:$0xff]
    %v556 = vld [vmem:[#allocation5 + $0x4b8] sm:$0xff]
    %v557 = vld [vmem:[#allocation5 + $0x4c0] sm:$0xff]
    %v558 = vld [vmem:[#allocation5 + $0x4c8] sm:$0xff]
    %v559 = vld [vmem:[#allocation5 + $0x4d0] sm:$0xff]
    %v560 = vld [vmem:[#allocation5 + $0x4d8] sm:$0xff]
    %v561 = vld [vmem:[#allocation5 + $0x4e0] sm:$0xff]
    %v562 = vld [vmem:[#allocation5 + $0x4e8] sm:$0xff]
    %v563 = vld [vmem:[#allocation5 + $0x4f0] sm:$0xff]
    %v564 = vld [vmem:[#allocation5 + $0x4f8] sm:$0xff]
    %v565 = vld [vmem:[#allocation5 + $0x500] sm:$0xff]
    %v566 = vld [vmem:[#allocation5 + $0x508] sm:$0xff]
    %v567 = vld [vmem:[#allocation5 + $0x510] sm:$0xff]
    %v568 = vld [vmem:[#allocation5 + $0x518] sm:$0xff]
    %v569 = vld [vmem:[#allocation5 + $0x520] sm:$0xff]
    %v570 = vld [vmem:[#allocation5 + $0x528] sm:$0xff]
    %v571 = vld [vmem:[#allocation5 + $0x530] sm:$0xff]
    %v572 = vld [vmem:[#allocation5 + $0x538] sm:$0xff]
    %v573 = vld [vmem:[#allocation5 + $0x540] sm:$0xff]
    %v574 = vld [vmem:[#allocation5 + $0x548] sm:$0xff]
    %v575 = vld [vmem:[#allocation5 + $0x550] sm:$0xff]
    %v576 = vld [vmem:[#allocation5 + $0x558] sm:$0xff]
    %v577 = vld [vmem:[#allocation5 + $0x560] sm:$0xff]
    %v578 = vld [vmem:[#allocation5 + $0x568] sm:$0xff]
    %v579 = vld [vmem:[#allocation5 + $0x570] sm:$0xff]
    %v580 = vld [vmem:[#allocation5 + $0x578] sm:$0xff]
    %v581 = vld [vmem:[#allocation5 + $0x580] sm:$0xff]
    %v582 = vld [vmem:[#allocation5 + $0x588] sm:$0xff]
    %v583 = vld [vmem:[#allocation5 + $0x590] sm:$0xff]
    %v584 = vld [vmem:[#allocation5 + $0x598] sm:$0xff]
    %v585 = vld [vmem:[#allocation5 + $0x5a0] sm:$0xff]
    %v586 = vld [vmem:[#allocation5 + $0x5a8] sm:$0xff]
    %v587 = vld [vmem:[#allocation5 + $0x5b0] sm:$0xff]
    %v588 = vld [vmem:[#allocation5 + $0x5b8] sm:$0xff]
    %v589 = vld [vmem:[#allocation5 + $0x5c0] sm:$0xff]
    %v590 = vld [vmem:[#allocation5 + $0x5c8] sm:$0xff]
    %v591 = vld [vmem:[#allocation5 + $0x5d0] sm:$0xff]
    %v592 = vld [vmem:[#allocation5 + $0x5d8] sm:$0xff]
    %v593 = vld [vmem:[#allocation5 + $0x5e0] sm:$0xff]
    %v594 = vld [vmem:[#allocation5 + $0x5e8] sm:$0xff]
    %v595 = vld [vmem:[#allocation5 + $0x5f0] sm:$0xff]
    %v596 = vld [vmem:[#allocation5 + $0x5f8] sm:$0xff]
    %v597 = vld [vmem:[#allocation5 + $0x600] sm:$0xff]
    %v598 = vld [vmem:[#allocation5 + $0x608] sm:$0xff]
    %v599 = vld [vmem:[#allocation5 + $0x610] sm:$0xff]
    %v600 = vld [vmem:[#allocation5 + $0x618] sm:$0xff]
    %v601 = vld [vmem:[#allocation5 + $0x620] sm:$0xff]
    %v602 = vld [vmem:[#allocation5 + $0x628] sm:$0xff]
    %v603 = vld [vmem:[#allocation5 + $0x630] sm:$0xff]
    %v604 = vld [vmem:[#allocation5 + $0x638] sm:$0xff]
    %v605 = vld [vmem:[#allocation5 + $0x640] sm:$0xff]
    %v606 = vld [vmem:[#allocation5 + $0x648] sm:$0xff]
    %v607 = vld [vmem:[#allocation5 + $0x650] sm:$0xff]
    %v608 = vld [vmem:[#allocation5 + $0x658] sm:$0xff]
    %v609 = vld [vmem:[#allocation5 + $0x660] sm:$0xff]
    %v610 = vld [vmem:[#allocation5 + $0x668] sm:$0xff]
    %v611 = vld [vmem:[#allocation5 + $0x670] sm:$0xff]
    %v612 = vld [vmem:[#allocation5 + $0x678] sm:$0xff]
    %v613 = vld [vmem:[#allocation5 + $0x680] sm:$0xff]
    %v614 = vld [vmem:[#allocation5 + $0x688] sm:$0xff]
    %v615 = vld [vmem:[#allocation5 + $0x690] sm:$0xff]
    %v616 = vld [vmem:[#allocation5 + $0x698] sm:$0xff]
    %v617 = vld [vmem:[#allocation5 + $0x6a0] sm:$0xff]
    %v618 = vld [vmem:[#allocation5 + $0x6a8] sm:$0xff]
    %v619 = vld [vmem:[#allocation5 + $0x6b0] sm:$0xff]
    %v620 = vld [vmem:[#allocation5 + $0x6b8] sm:$0xff]
    %v621 = vld [vmem:[#allocation5 + $0x6c0] sm:$0xff]
    %v622 = vld [vmem:[#allocation5 + $0x6c8] sm:$0xff]
    %v623 = vld [vmem:[#allocation5 + $0x6d0] sm:$0xff]
    %v624 = vld [vmem:[#allocation5 + $0x6d8] sm:$0xff]
    %v625 = vld [vmem:[#allocation5 + $0x6e0] sm:$0xff]
    %v626 = vld [vmem:[#allocation5 + $0x6e8] sm:$0xff]
    %v627 = vld [vmem:[#allocation5 + $0x6f0] sm:$0xff]
    %v628 = vld [vmem:[#allocation5 + $0x6f8] sm:$0xff]
    %v629 = vld [vmem:[#allocation5 + $0x700] sm:$0xff]
    %v630 = vld [vmem:[#allocation5 + $0x708] sm:$0xff]
    %v631 = vld [vmem:[#allocation5 + $0x710] sm:$0xff]
    %v632 = vld [vmem:[#allocation5 + $0x718] sm:$0xff]
    %v633 = vld [vmem:[#allocation5 + $0x720] sm:$0xff]
    %v634 = vld [vmem:[#allocation5 + $0x728] sm:$0xff]
    %v635 = vld [vmem:[#allocation5 + $0x730] sm:$0xff]
    %v636 = vld [vmem:[#allocation5 + $0x738] sm:$0xff]
    %v637 = vld [vmem:[#allocation5 + $0x740] sm:$0xff]
    %v638 = vld [vmem:[#allocation5 + $0x748] sm:$0xff]
    %v639 = vld [vmem:[#allocation5 + $0x750] sm:$0xff]
    %v640 = vld [vmem:[#allocation5 + $0x758] sm:$0xff]
    %v641 = vld [vmem:[#allocation5 + $0x760] sm:$0xff]
    %v642 = vld [vmem:[#allocation5 + $0x768] sm:$0xff]
    %v643 = vld [vmem:[#allocation5 + $0x770] sm:$0xff]
    %v644 = vld [vmem:[#allocation5 + $0x778] sm:$0xff]
    %v645 = vld [vmem:[#allocation5 + $0x780] sm:$0xff]
    %v646 = vld [vmem:[#allocation5 + $0x788] sm:$0xff]
    %v647 = vld [vmem:[#allocation5 + $0x790] sm:$0xff]
    %v648 = vld [vmem:[#allocation5 + $0x798] sm:$0xff]
    %v649 = vld [vmem:[#allocation5 + $0x7a0] sm:$0xff]
    %v650 = vld [vmem:[#allocation5 + $0x7a8] sm:$0xff]
    %v651 = vld [vmem:[#allocation5 + $0x7b0] sm:$0xff]
    %v652 = vld [vmem:[#allocation5 + $0x7b8] sm:$0xff]
    %v653 = vld [vmem:[#allocation5 + $0x7c0] sm:$0xff]
    %v654 = vld [vmem:[#allocation5 + $0x7c8] sm:$0xff]
    %v655 = vld [vmem:[#allocation5 + $0x7d0] sm:$0xff]
    %v656 = vld [vmem:[#allocation5 + $0x7d8] sm:$0xff]
    %v657 = vld [vmem:[#allocation5 + $0x7e0] sm:$0xff]
    %v658 = vld [vmem:[#allocation5 + $0x7e8] sm:$0xff]
    %v659 = vld [vmem:[#allocation5 + $0x7f0] sm:$0xff]
    %v660 = vld [vmem:[#allocation5 + $0x7f8] sm:$0xff]
    %v661 = vld [vmem:[#allocation5 + $0x800] sm:$0xff]
    %v662 = vld [vmem:[#allocation5 + $0x808] sm:$0xff]
    %v663 = vld [vmem:[#allocation5 + $0x810] sm:$0xff]
    %v664 = vld [vmem:[#allocation5 + $0x818] sm:$0xff]
    %v665 = vld [vmem:[#allocation5 + $0x820] sm:$0xff]
    %v666 = vld [vmem:[#allocation5 + $0x828] sm:$0xff]
    %v667 = vld [vmem:[#allocation5 + $0x830] sm:$0xff]
    %v668 = vld [vmem:[#allocation5 + $0x838] sm:$0xff]
    %v669 = vld [vmem:[#allocation5 + $0x840] sm:$0xff]
    %v670 = vld [vmem:[#allocation5 + $0x848] sm:$0xff]
    %v671 = vld [vmem:[#allocation5 + $0x850] sm:$0xff]
    %v672 = vld [vmem:[#allocation5 + $0x858] sm:$0xff]
    %v673 = vld [vmem:[#allocation5 + $0x860] sm:$0xff]
    %v674 = vld [vmem:[#allocation5 + $0x868] sm:$0xff]
    %v675 = vld [vmem:[#allocation5 + $0x870] sm:$0xff]
    %v676 = vld [vmem:[#allocation5 + $0x878] sm:$0xff]
    %v677 = vld [vmem:[#allocation5 + $0x880] sm:$0xff]
    %v678 = vld [vmem:[#allocation5 + $0x888] sm:$0xff]
    %v679 = vld [vmem:[#allocation5 + $0x890] sm:$0xff]
    %v680 = vld [vmem:[#allocation5 + $0x898] sm:$0xff]
    %v681 = vld [vmem:[#allocation5 + $0x8a0] sm:$0xff]
    %v682 = vld [vmem:[#allocation5 + $0x8a8] sm:$0xff]
    %v683 = vld [vmem:[#allocation5 + $0x8b0] sm:$0xff]
    %v684 = vld [vmem:[#allocation5 + $0x8b8] sm:$0xff]
    %v685 = vld [vmem:[#allocation5 + $0x8c0] sm:$0xff]
    %v686 = vld [vmem:[#allocation5 + $0x8c8] sm:$0xff]
    %v687 = vld [vmem:[#allocation5 + $0x8d0] sm:$0xff]
    %v688 = vld [vmem:[#allocation5 + $0x8d8] sm:$0xff]
    %v689 = vld [vmem:[#allocation5 + $0x8e0] sm:$0xff]
    %v690 = vld [vmem:[#allocation5 + $0x8e8] sm:$0xff]
    %v691 = vld [vmem:[#allocation5 + $0x8f0] sm:$0xff]
    %v692 = vld [vmem:[#allocation5 + $0x8f8] sm:$0xff]
    %v693 = vld [vmem:[#allocation5 + $0x900] sm:$0xff]
    %v694 = vld [vmem:[#allocation5 + $0x908] sm:$0xff]
    %v695 = vld [vmem:[#allocation5 + $0x910] sm:$0xff]
    %v696 = vld [vmem:[#allocation5 + $0x918] sm:$0xff]
    %v697 = vld [vmem:[#allocation5 + $0x920] sm:$0xff]
    %v698 = vld [vmem:[#allocation5 + $0x928] sm:$0xff]
    %v699 = vld [vmem:[#allocation5 + $0x930] sm:$0xff]
    %v700 = vld [vmem:[#allocation5 + $0x938] sm:$0xff]
    %v701 = vld [vmem:[#allocation5 + $0x940] sm:$0xff]
    %v702 = vld [vmem:[#allocation5 + $0x948] sm:$0xff]
    %v703 = vld [vmem:[#allocation5 + $0x950] sm:$0xff]
    %v704 = vld [vmem:[#allocation5 + $0x958] sm:$0xff]
    %v705 = vld [vmem:[#allocation5 + $0x960] sm:$0xff]
    %v706 = vld [vmem:[#allocation5 + $0x968] sm:$0xff]
    %v707 = vld [vmem:[#allocation5 + $0x970] sm:$0xff]
    %v708 = vld [vmem:[#allocation5 + $0x978] sm:$0xff]
    %v709 = vld [vmem:[#allocation5 + $0x980] sm:$0xff]
    %v710 = vld [vmem:[#allocation5 + $0x988] sm:$0xff]
    %v711 = vld [vmem:[#allocation5 + $0x990] sm:$0xff]
    %v712 = vld [vmem:[#allocation5 + $0x998] sm:$0xff]
    %v713 = vld [vmem:[#allocation5 + $0x9a0] sm:$0xff]
    %v714 = vld [vmem:[#allocation5 + $0x9a8] sm:$0xff]
    %v715 = vld [vmem:[#allocation5 + $0x9b0] sm:$0xff]
    %v716 = vld [vmem:[#allocation5 + $0x9b8] sm:$0xff]
    %v717 = vld [vmem:[#allocation5 + $0x9c0] sm:$0xff]
    %v718 = vld [vmem:[#allocation5 + $0x9c8] sm:$0xff]
    %v719 = vld [vmem:[#allocation5 + $0x9d0] sm:$0xff]
    %v720 = vld [vmem:[#allocation5 + $0x9d8] sm:$0xff]
    %v721 = vld [vmem:[#allocation5 + $0x9e0] sm:$0xff]
    %v722 = vld [vmem:[#allocation5 + $0x9e8] sm:$0xff]
    %v723 = vld [vmem:[#allocation5 + $0x9f0] sm:$0xff]
    %v724 = vld [vmem:[#allocation5 + $0x9f8] sm:$0xff]
    %v725 = vld [vmem:[#allocation5 + $0xa00] sm:$0xff]
    %v726 = vld [vmem:[#allocation5 + $0xa08] sm:$0xff]
    %v727 = vld [vmem:[#allocation5 + $0xa10] sm:$0xff]
    %v728 = vld [vmem:[#allocation5 + $0xa18] sm:$0xff]
    %v729 = vld [vmem:[#allocation5 + $0xa20] sm:$0xff]
    %v730 = vld [vmem:[#allocation5 + $0xa28] sm:$0xff]
    %v731 = vld [vmem:[#allocation5 + $0xa30] sm:$0xff]
    %v732 = vld [vmem:[#allocation5 + $0xa38] sm:$0xff]
    %v733 = vld [vmem:[#allocation5 + $0xa40] sm:$0xff]
    %v734 = vld [vmem:[#allocation5 + $0xa48] sm:$0xff]
    %v735 = vld [vmem:[#allocation5 + $0xa50] sm:$0xff]
    %v736 = vld [vmem:[#allocation5 + $0xa58] sm:$0xff]
    %v737 = vld [vmem:[#allocation5 + $0xa60] sm:$0xff]
    %v738 = vld [vmem:[#allocation5 + $0xa68] sm:$0xff]
    %v739 = vld [vmem:[#allocation5 + $0xa70] sm:$0xff]
    %v740 = vld [vmem:[#allocation5 + $0xa78] sm:$0xff]
    %v741 = vld [vmem:[#allocation5 + $0xa80] sm:$0xff]
    %v742 = vld [vmem:[#allocation5 + $0xa88] sm:$0xff]
    %v743 = vld [vmem:[#allocation5 + $0xa90] sm:$0xff]
    %v744 = vld [vmem:[#allocation5 + $0xa98] sm:$0xff]
    %v745 = vld [vmem:[#allocation5 + $0xaa0] sm:$0xff]
    %v746 = vld [vmem:[#allocation5 + $0xaa8] sm:$0xff]
    %v747 = vld [vmem:[#allocation5 + $0xab0] sm:$0xff]
    %v748 = vld [vmem:[#allocation5 + $0xab8] sm:$0xff]
    %v749 = vld [vmem:[#allocation5 + $0xac0] sm:$0xff]
    %v750 = vld [vmem:[#allocation5 + $0xac8] sm:$0xff]
    %v751 = vld [vmem:[#allocation5 + $0xad0] sm:$0xff]
    %v752 = vld [vmem:[#allocation5 + $0xad8] sm:$0xff]
    %v753 = vld [vmem:[#allocation5 + $0xae0] sm:$0xff]
    %v754 = vld [vmem:[#allocation5 + $0xae8] sm:$0xff]
    %v755 = vld [vmem:[#allocation5 + $0xaf0] sm:$0xff]
    %v756 = vld [vmem:[#allocation5 + $0xaf8] sm:$0xff]
    %v757 = vld [vmem:[#allocation5 + $0xb00] sm:$0xff]
    %v758 = vld [vmem:[#allocation5 + $0xb08] sm:$0xff]
    %v759 = vld [vmem:[#allocation5 + $0xb10] sm:$0xff]
    %v760 = vld [vmem:[#allocation5 + $0xb18] sm:$0xff]
    %v761 = vld [vmem:[#allocation5 + $0xb20] sm:$0xff]
    %v762 = vld [vmem:[#allocation5 + $0xb28] sm:$0xff]
    %v763 = vld [vmem:[#allocation5 + $0xb30] sm:$0xff]
    %v764 = vld [vmem:[#allocation5 + $0xb38] sm:$0xff]
    %v765 = vld [vmem:[#allocation5 + $0xb40] sm:$0xff]
    %v766 = vld [vmem:[#allocation5 + $0xb48] sm:$0xff]
    %v767 = vld [vmem:[#allocation5 + $0xb50] sm:$0xff]
    %v768 = vld [vmem:[#allocation5 + $0xb58] sm:$0xff]
    %v769 = vld [vmem:[#allocation5 + $0xb60] sm:$0xff]
    %v770 = vld [vmem:[#allocation5 + $0xb68] sm:$0xff]
    %v771 = vld [vmem:[#allocation5 + $0xb70] sm:$0xff]
    %v772 = vld [vmem:[#allocation5 + $0xb78] sm:$0xff]
    %v773 = vld [vmem:[#allocation5 + $0xb80] sm:$0xff]
    %v774 = vld [vmem:[#allocation5 + $0xb88] sm:$0xff]
    %v775 = vld [vmem:[#allocation5 + $0xb90] sm:$0xff]
    %v776 = vld [vmem:[#allocation5 + $0xb98] sm:$0xff]
    %v777 = vld [vmem:[#allocation5 + $0xba0] sm:$0xff]
    %v778 = vld [vmem:[#allocation5 + $0xba8] sm:$0xff]
    %v779 = vld [vmem:[#allocation5 + $0xbb0] sm:$0xff]
    %v780 = vld [vmem:[#allocation5 + $0xbb8] sm:$0xff]
    %v781 = vld [vmem:[#allocation5 + $0xbc0] sm:$0xff]
    %v782 = vld [vmem:[#allocation5 + $0xbc8] sm:$0xff]
    %v783 = vld [vmem:[#allocation5 + $0xbd0] sm:$0xff]
    %v784 = vld [vmem:[#allocation5 + $0xbd8] sm:$0xff]
    %v785 = vld [vmem:[#allocation5 + $0xbe0] sm:$0xff]
    %v786 = vld [vmem:[#allocation5 + $0xbe8] sm:$0xff]
    %v787 = vld [vmem:[#allocation5 + $0xbf0] sm:$0xff]
    %v788 = vld [vmem:[#allocation5 + $0xbf8] sm:$0xff]
    %v789 = vld [vmem:[#allocation5 + $0xc00] sm:$0xff]
    %v790 = vld [vmem:[#allocation5 + $0xc08] sm:$0xff]
    %v791 = vld [vmem:[#allocation5 + $0xc10] sm:$0xff]
    %v792 = vld [vmem:[#allocation5 + $0xc18] sm:$0xff]
    %v793 = vld [vmem:[#allocation5 + $0xc20] sm:$0xff]
    %v794 = vld [vmem:[#allocation5 + $0xc28] sm:$0xff]
    %v795 = vld [vmem:[#allocation5 + $0xc30] sm:$0xff]
    %v796 = vld [vmem:[#allocation5 + $0xc38] sm:$0xff]
    %v797 = vld [vmem:[#allocation5 + $0xc40] sm:$0xff]
    %v798 = vld [vmem:[#allocation5 + $0xc48] sm:$0xff]
    %v799 = vld [vmem:[#allocation5 + $0xc50] sm:$0xff]
    %v800 = vld [vmem:[#allocation5 + $0xc58] sm:$0xff]
    %v801 = vld [vmem:[#allocation5 + $0xc60] sm:$0xff]
    %v802 = vld [vmem:[#allocation5 + $0xc68] sm:$0xff]
    %v803 = vld [vmem:[#allocation5 + $0xc70] sm:$0xff]
    %v804 = vld [vmem:[#allocation5 + $0xc78] sm:$0xff]
    %v805 = vld [vmem:[#allocation5 + $0xc80] sm:$0xff]
    %v806 = vld [vmem:[#allocation5 + $0xc88] sm:$0xff]
    %v807 = vld [vmem:[#allocation5 + $0xc90] sm:$0xff]
    %v808 = vld [vmem:[#allocation5 + $0xc98] sm:$0xff]
    %v809 = vld [vmem:[#allocation5 + $0xca0] sm:$0xff]
    %v810 = vld [vmem:[#allocation5 + $0xca8] sm:$0xff]
    %v811 = vld [vmem:[#allocation5 + $0xcb0] sm:$0xff]
    %v812 = vld [vmem:[#allocation5 + $0xcb8] sm:$0xff]
    %v813 = vld [vmem:[#allocation5 + $0xcc0] sm:$0xff]
    %v814 = vld [vmem:[#allocation5 + $0xcc8] sm:$0xff]
    %v815 = vld [vmem:[#allocation5 + $0xcd0] sm:$0xff]
    %v816 = vld [vmem:[#allocation5 + $0xcd8] sm:$0xff]
    %v817 = vld [vmem:[#allocation5 + $0xce0] sm:$0xff]
    %v818 = vld [vmem:[#allocation5 + $0xce8] sm:$0xff]
    %v819 = vld [vmem:[#allocation5 + $0xcf0] sm:$0xff]
    %v820 = vld [vmem:[#allocation5 + $0xcf8] sm:$0xff]
    %v821 = vld [vmem:[#allocation5 + $0xd00] sm:$0xff]
    %v822 = vld [vmem:[#allocation5 + $0xd08] sm:$0xff]
    %v823 = vld [vmem:[#allocation5 + $0xd10] sm:$0xff]
    %v824 = vld [vmem:[#allocation5 + $0xd18] sm:$0xff]
    %v825 = vld [vmem:[#allocation5 + $0xd20] sm:$0xff]
    %v826 = vld [vmem:[#allocation5 + $0xd28] sm:$0xff]
    %v827 = vld [vmem:[#allocation5 + $0xd30] sm:$0xff]
    %v828 = vld [vmem:[#allocation5 + $0xd38] sm:$0xff]
    %v829 = vld [vmem:[#allocation5 + $0xd40] sm:$0xff]
    %v830 = vld [vmem:[#allocation5 + $0xd48] sm:$0xff]
    %v831 = vld [vmem:[#allocation5 + $0xd50] sm:$0xff]
    %v832 = vld [vmem:[#allocation5 + $0xd58] sm:$0xff]
    %v833 = vld [vmem:[#allocation5 + $0xd60] sm:$0xff]
    %v834 = vld [vmem:[#allocation5 + $0xd68] sm:$0xff]
    %v835 = vld [vmem:[#allocation5 + $0xd70] sm:$0xff]
    %v836 = vld [vmem:[#allocation5 + $0xd78] sm:$0xff]
    %v837 = vld [vmem:[#allocation5 + $0xd80] sm:$0xff]
    %v838 = vld [vmem:[#allocation5 + $0xd88] sm:$0xff]
    %v839 = vld [vmem:[#allocation5 + $0xd90] sm:$0xff]
    %v840 = vld [vmem:[#allocation5 + $0xd98] sm:$0xff]
    %v841 = vld [vmem:[#allocation5 + $0xda0] sm:$0xff]
    %v842 = vld [vmem:[#allocation5 + $0xda8] sm:$0xff]
    %v843 = vld [vmem:[#allocation5 + $0xdb0] sm:$0xff]
    %v844 = vld [vmem:[#allocation5 + $0xdb8] sm:$0xff]
    %v845 = vld [vmem:[#allocation5 + $0xdc0] sm:$0xff]
    %v846 = vld [vmem:[#allocation5 + $0xdc8] sm:$0xff]
    %v847 = vld [vmem:[#allocation5 + $0xdd0] sm:$0xff]
    %v848 = vld [vmem:[#allocation5 + $0xdd8] sm:$0xff]
    %v849 = vld [vmem:[#allocation5 + $0xde0] sm:$0xff]
    %v850 = vld [vmem:[#allocation5 + $0xde8] sm:$0xff]
    %v851 = vld [vmem:[#allocation5 + $0xdf0] sm:$0xff]
    %v852 = vld [vmem:[#allocation5 + $0xdf8] sm:$0xff]
    %v853 = vld [vmem:[#allocation5 + $0xe00] sm:$0xff]
    %v854 = vld [vmem:[#allocation5 + $0xe08] sm:$0xff]
    %v855 = vld [vmem:[#allocation5 + $0xe10] sm:$0xff]
    %v856 = vld [vmem:[#allocation5 + $0xe18] sm:$0xff]
    %v857 = vld [vmem:[#allocation5 + $0xe20] sm:$0xff]
    %v858 = vld [vmem:[#allocation5 + $0xe28] sm:$0xff]
    %v859 = vld [vmem:[#allocation5 + $0xe30] sm:$0xff]
    %v860 = vld [vmem:[#allocation5 + $0xe38] sm:$0xff]
    %v861 = vld [vmem:[#allocation5 + $0xe40] sm:$0xff]
    %v862 = vld [vmem:[#allocation5 + $0xe48] sm:$0xff]
    %v863 = vld [vmem:[#allocation5 + $0xe50] sm:$0xff]
    %v864 = vld [vmem:[#allocation5 + $0xe58] sm:$0xff]
    %v865 = vld [vmem:[#allocation5 + $0xe60] sm:$0xff]
    %v866 = vld [vmem:[#allocation5 + $0xe68] sm:$0xff]
    %v867 = vld [vmem:[#allocation5 + $0xe70] sm:$0xff]
    %v868 = vld [vmem:[#allocation5 + $0xe78] sm:$0xff]
    %v869 = vld [vmem:[#allocation5 + $0xe80] sm:$0xff]
    %v870 = vld [vmem:[#allocation5 + $0xe88] sm:$0xff]
    %v871 = vld [vmem:[#allocation5 + $0xe90] sm:$0xff]
    %v872 = vld [vmem:[#allocation5 + $0xe98] sm:$0xff]
    %v873 = vld [vmem:[#allocation5 + $0xea0] sm:$0xff]
    %v874 = vld [vmem:[#allocation5 + $0xea8] sm:$0xff]
    %v875 = vld [vmem:[#allocation5 + $0xeb0] sm:$0xff]
    %v876 = vld [vmem:[#allocation5 + $0xeb8] sm:$0xff]
    %v877 = vld [vmem:[#allocation5 + $0xec0] sm:$0xff]
    %v878 = vld [vmem:[#allocation5 + $0xec8] sm:$0xff]
    %v879 = vld [vmem:[#allocation5 + $0xed0] sm:$0xff]
    %v880 = vld [vmem:[#allocation5 + $0xed8] sm:$0xff]
    %v881 = vld [vmem:[#allocation5 + $0xee0] sm:$0xff]
    %v882 = vld [vmem:[#allocation5 + $0xee8] sm:$0xff]
    %v883 = vld [vmem:[#allocation5 + $0xef0] sm:$0xff]
    %v884 = vld [vmem:[#allocation5 + $0xef8] sm:$0xff]
    %v885 = vld [vmem:[#allocation5 + $0xf00] sm:$0xff]
    %v886 = vld [vmem:[#allocation5 + $0xf08] sm:$0xff]
    %v887 = vld [vmem:[#allocation5 + $0xf10] sm:$0xff]
    %v888 = vld [vmem:[#allocation5 + $0xf18] sm:$0xff]
    %v889 = vld [vmem:[#allocation5 + $0xf20] sm:$0xff]
    %v890 = vld [vmem:[#allocation5 + $0xf28] sm:$0xff]
    %v891 = vld [vmem:[#allocation5 + $0xf30] sm:$0xff]
    %v892 = vld [vmem:[#allocation5 + $0xf38] sm:$0xff]
    %v893 = vld [vmem:[#allocation5 + $0xf40] sm:$0xff]
    %v894 = vld [vmem:[#allocation5 + $0xf48] sm:$0xff]
    %v895 = vld [vmem:[#allocation5 + $0xf50] sm:$0xff]
    %v896 = vld [vmem:[#allocation5 + $0xf58] sm:$0xff]
    %v897 = vld [vmem:[#allocation5 + $0xf60] sm:$0xff]
    %v898 = vld [vmem:[#allocation5 + $0xf68] sm:$0xff]
    %v899 = vld [vmem:[#allocation5 + $0xf70] sm:$0xff]
    %v900 = vld [vmem:[#allocation5 + $0xf78] sm:$0xff]
    %v901 = vld [vmem:[#allocation5 + $0xf80] sm:$0xff]
    %v902 = vld [vmem:[#allocation5 + $0xf88] sm:$0xff]
    %v903 = vld [vmem:[#allocation5 + $0xf90] sm:$0xff]
    %v904 = vld [vmem:[#allocation5 + $0xf98] sm:$0xff]
    %v905 = vld [vmem:[#allocation5 + $0xfa0] sm:$0xff]
    %v906 = vld [vmem:[#allocation5 + $0xfa8] sm:$0xff]
    %v907 = vld [vmem:[#allocation5 + $0xfb0] sm:$0xff]
    %v908 = vld [vmem:[#allocation5 + $0xfb8] sm:$0xff]
    %v909 = vld [vmem:[#allocation5 + $0xfc0] sm:$0xff]
    %v910 = vld [vmem:[#allocation5 + $0xfc8] sm:$0xff]
    %v911 = vld [vmem:[#allocation5 + $0xfd0] sm:$0xff]
    %v912 = vld [vmem:[#allocation5 + $0xfd8] sm:$0xff]
    %v913 = vld [vmem:[#allocation5 + $0xfe0] sm:$0xff]
    %v914 = vld [vmem:[#allocation5 + $0xfe8] sm:$0xff]
    %v915 = vld [vmem:[#allocation5 + $0xff0] sm:$0xff]
    %v916 = vld [vmem:[#allocation5 + $0xff8] sm:$0xff]
    %v917 = vld [vmem:[#allocation7] sm:$0xf]
    %v919 = vlaneseq
    %v920 = vshrl.u32 %v919, 7
    %v921 = vsub.s32 0, %v920
    %v922 = vrot.slane %v917, %v921
    %v923 = vlaneseq
    %v924 = vshrl.u32 %v923, 7
    %v925 = vsub.s32 1, %v924
    %v926 = vrot.slane %v917, %v925
    %v927 = vlaneseq
    %v928 = vshrl.u32 %v927, 7
    %v929 = vsub.s32 2, %v928
    %v930 = vrot.slane %v917, %v929
    %v931 = vlaneseq
    %v932 = vshrl.u32 %v931, 7
    %v933 = vsub.s32 3, %v932
    %v934 = vrot.slane %v917, %v933
    %v941 = vcombine.high %v403, %v403
    %v943 = vunpack.c.l.s4 1983009808
    %v944 = vunpack.c.0.s8 %v943
    %v945 = vlaneseq
    %v946 = vshrl.u32 %v945, 7
    %v947 = vsub.s32 %v944, %v946
    %v948 = vrot.slane %v403, %v947
    %v950 = vunpack.c.l.s4 1983009808
    %v951 = vunpack.c.0.s8 %v950
    %v952 = vlaneseq
    %v953 = vshrl.u32 %v952, 7
    %v954 = vsub.s32 %v951, %v953
    %v955 = vrot.slane %v941, %v954
    %v956 = vcombine.high %v948, %v948
    %v957 = vcombine.high %v955, %v955
    %v958 = vcombine.high %v404, %v404
    %v960 = vunpack.c.l.s4 1983009808
    %v961 = vunpack.c.0.s8 %v960
    %v962 = vlaneseq
    %v963 = vshrl.u32 %v962, 7
    %v964 = vsub.s32 %v961, %v963
    %v965 = vrot.slane %v404, %v964
    %v967 = vunpack.c.l.s4 1983009808
    %v968 = vunpack.c.0.s8 %v967
    %v969 = vlaneseq
    %v970 = vshrl.u32 %v969, 7
    %v971 = vsub.s32 %v968, %v970
    %v972 = vrot.slane %v958, %v971
    %v973 = vcombine.high %v965, %v965
    %v974 = vcombine.high %v972, %v972
    %983 = vmatprep.subr.mxu0 %v406
    %984 = vmatpush1.msra.mxu0 %v405
    %985 = vmatprep.subr.mxu0 %v410
    %986 = vmatpush1.msra.mxu0 %v409
    %987 = vmatprep.subr.mxu0 %v414
    %988 = vmatpush1.msra.mxu0 %v413
    %989 = vmatprep.subr.mxu0 %v418
    %990 = vmatpush1.msra.mxu0 %v417
    %991 = vmatprep.subr.mxu0 %v422
    %992 = vmatpush1.msra.mxu0 %v421
    %993 = vmatprep.subr.mxu0 %v426
    %994 = vmatpush1.msra.mxu0 %v425
    %995 = vmatprep.subr.mxu0 %v430
    %996 = vmatpush1.msra.mxu0 %v429
    %997 = vmatprep.subr.mxu0 %v434
    %998 = vmatpush1.msra.mxu0 %v433
    %999 = vmatprep.subr.mxu0 %v438
    %1000 = vmatpush1.msra.mxu0 %v437
    %1001 = vmatprep.subr.mxu0 %v442
    %1002 = vmatpush1.msra.mxu0 %v441
    %1003 = vmatprep.subr.mxu0 %v446
    %1004 = vmatpush1.msra.mxu0 %v445
    %1005 = vmatprep.subr.mxu0 %v450
    %1006 = vmatpush1.msra.mxu0 %v449
    %1007 = vmatprep.subr.mxu0 %v454
    %1008 = vmatpush1.msra.mxu0 %v453
    %1009 = vmatprep.subr.mxu0 %v458
    %1010 = vmatpush1.msra.mxu0 %v457
    %1011 = vmatprep.subr.mxu0 %v462
    %1012 = vmatpush1.msra.mxu0 %v461
    %1013 = vmatprep.subr.mxu0 %v466
    %1014 = vmatpush1.msra.mxu0 %v465
    %1015 = vmatprep.subr.mxu0 %v470
    %1016 = vmatpush1.msra.mxu0 %v469
    %1017 = vmatprep.subr.mxu0 %v474
    %1018 = vmatpush1.msra.mxu0 %v473
    %1019 = vmatprep.subr.mxu0 %v478
    %1020 = vmatpush1.msra.mxu0 %v477
    %1021 = vmatprep.subr.mxu0 %v482
    %1022 = vmatpush1.msra.mxu0 %v481
    %1023 = vmatprep.subr.mxu0 %v486
    %1024 = vmatpush1.msra.mxu0 %v485
    %1025 = vmatprep.subr.mxu0 %v490
    %1026 = vmatpush1.msra.mxu0 %v489
    %1027 = vmatprep.subr.mxu0 %v494
    %1028 = vmatpush1.msra.mxu0 %v493
    %1029 = vmatprep.subr.mxu0 %v498
    %1030 = vmatpush1.msra.mxu0 %v497
    %1031 = vmatprep.subr.mxu0 %v502
    %1032 = vmatpush1.msra.mxu0 %v501
    %1033 = vmatprep.subr.mxu0 %v506
    %1034 = vmatpush1.msra.mxu0 %v505
    %1035 = vmatprep.subr.mxu0 %v510
    %1036 = vmatpush1.msra.mxu0 %v509
    %1037 = vmatprep.subr.mxu0 %v514
    %1038 = vmatpush1.msra.mxu0 %v513
    %1039 = vmatprep.subr.mxu0 %v518
    %1040 = vmatpush1.msra.mxu0 %v517
    %1041 = vmatprep.subr.mxu0 %v522
    %1042 = vmatpush1.msra.mxu0 %v521
    %1043 = vmatprep.subr.mxu0 %v526
    %1044 = vmatpush1.msra.mxu0 %v525
    %1045 = vmatprep.subr.mxu0 %v530
    %1046 = vmatpush1.msra.mxu0 %v529
    %1047 = vmatprep.mubr.f32.mxu0 %v956
    %1048 = vmatmul.mubr.f32.gmra.mrb[0].mxu0 %v948
    %v1049 = vpop.f32.mrb[0].mxu0
    %v1050 = vadd.f32 %v922, %v1049
    %v1051 = vpop.f32.mrb[0].mxu0
    %v1052 = vadd.f32 %v926, %v1051
    %1053 = vdwg.mxu0
    %1054 = vmatprep.subr.mxu0 %v534
    %1055 = vmatpush1.msra.mxu0 %v533
    %1056 = vmatprep.subr.mxu0 %v538
    %1057 = vmatpush1.msra.mxu0 %v537
    %1058 = vmatprep.subr.mxu0 %v542
    %1059 = vmatpush1.msra.mxu0 %v541
    %1060 = vmatprep.subr.mxu0 %v546
    %1061 = vmatpush1.msra.mxu0 %v545
    %1062 = vmatprep.subr.mxu0 %v550
    %1063 = vmatpush1.msra.mxu0 %v549
    %1064 = vmatprep.subr.mxu0 %v554
    %1065 = vmatpush1.msra.mxu0 %v553
    %1066 = vmatprep.subr.mxu0 %v558
    %1067 = vmatpush1.msra.mxu0 %v557
    %1068 = vmatprep.subr.mxu0 %v562
    %1069 = vmatpush1.msra.mxu0 %v561
    %1070 = vmatprep.subr.mxu0 %v566
    %1071 = vmatpush1.msra.mxu0 %v565
    %1072 = vmatprep.subr.mxu0 %v570
    %1073 = vmatpush1.msra.mxu0 %v569
    %1074 = vmatprep.subr.mxu0 %v574
    %1075 = vmatpush1.msra.mxu0 %v573
    %1076 = vmatprep.subr.mxu0 %v578
    %1077 = vmatpush1.msra.mxu0 %v577
    %1078 = vmatprep.subr.mxu0 %v582
    %1079 = vmatpush1.msra.mxu0 %v581
    %1080 = vmatprep.subr.mxu0 %v586
    %1081 = vmatpush1.msra.mxu0 %v585
    %1082 = vmatprep.subr.mxu0 %v590
    %1083 = vmatpush1.msra.mxu0 %v589
    %1084 = vmatprep.subr.mxu0 %v594
    %1085 = vmatpush1.msra.mxu0 %v593
    %1086 = vmatprep.subr.mxu0 %v598
    %1087 = vmatpush1.msra.mxu0 %v597
    %1088 = vmatprep.subr.mxu0 %v602
    %1089 = vmatpush1.msra.mxu0 %v601
    %1090 = vmatprep.subr.mxu0 %v606
    %1091 = vmatpush1.msra.mxu0 %v605
    %1092 = vmatprep.subr.mxu0 %v610
    %1093 = vmatpush1.msra.mxu0 %v609
    %1094 = vmatprep.subr.mxu0 %v614
    %1095 = vmatpush1.msra.mxu0 %v613
    %1096 = vmatprep.subr.mxu0 %v618
    %1097 = vmatpush1.msra.mxu0 %v617
    %1098 = vmatprep.subr.mxu0 %v622
    %1099 = vmatpush1.msra.mxu0 %v621
    %1100 = vmatprep.subr.mxu0 %v626
    %1101 = vmatpush1.msra.mxu0 %v625
    %1102 = vmatprep.subr.mxu0 %v630
    %1103 = vmatpush1.msra.mxu0 %v629
    %1104 = vmatprep.subr.mxu0 %v634
    %1105 = vmatpush1.msra.mxu0 %v633
    %1106 = vmatprep.subr.mxu0 %v638
    %1107 = vmatpush1.msra.mxu0 %v637
    %1108 = vmatprep.subr.mxu0 %v642
    %1109 = vmatpush1.msra.mxu0 %v641
    %1110 = vmatprep.subr.mxu0 %v646
    %1111 = vmatpush1.msra.mxu0 %v645
    %1112 = vmatprep.subr.mxu0 %v650
    %1113 = vmatpush1.msra.mxu0 %v649
    %1114 = vmatprep.subr.mxu0 %v654
    %1115 = vmatpush1.msra.mxu0 %v653
    %1116 = vmatprep.subr.mxu0 %v658
    %1117 = vmatpush1.msra.mxu0 %v657
    %1118 = vmatprep.mubr.f32.mxu0 %v957
    %1119 = vmatmul.mubr.f32.gmra.mrb[0].mxu0 %v955
    %v1120 = vpop.f32.mrb[0].mxu0
    %v1121 = vadd.f32 %v1050, %v1120
    %v1122 = vpop.f32.mrb[0].mxu0
    %v1123 = vadd.f32 %v1052, %v1122
    %1124 = vdwg.mxu0
    %1125 = vmatprep.subr.mxu0 %v662
    %1126 = vmatpush1.msra.mxu0 %v661
    %1127 = vmatprep.subr.mxu0 %v666
    %1128 = vmatpush1.msra.mxu0 %v665
    %1129 = vmatprep.subr.mxu0 %v670
    %1130 = vmatpush1.msra.mxu0 %v669
    %1131 = vmatprep.subr.mxu0 %v674
    %1132 = vmatpush1.msra.mxu0 %v673
    %1133 = vmatprep.subr.mxu0 %v678
    %1134 = vmatpush1.msra.mxu0 %v677
    %1135 = vmatprep.subr.mxu0 %v682
    %1136 = vmatpush1.msra.mxu0 %v681
    %1137 = vmatprep.subr.mxu0 %v686
    %1138 = vmatpush1.msra.mxu0 %v685
    %1139 = vmatprep.subr.mxu0 %v690
    %1140 = vmatpush1.msra.mxu0 %v689
    %1141 = vmatprep.subr.mxu0 %v694
    %1142 = vmatpush1.msra.mxu0 %v693
    %1143 = vmatprep.subr.mxu0 %v698
    %1144 = vmatpush1.msra.mxu0 %v697
    %1145 = vmatprep.subr.mxu0 %v702
    %1146 = vmatpush1.msra.mxu0 %v701
    %1147 = vmatprep.subr.mxu0 %v706
    %1148 = vmatpush1.msra.mxu0 %v705
    %1149 = vmatprep.subr.mxu0 %v710
    %1150 = vmatpush1.msra.mxu0 %v709
    %1151 = vmatprep.subr.mxu0 %v714
    %1152 = vmatpush1.msra.mxu0 %v713
    %1153 = vmatprep.subr.mxu0 %v718
    %1154 = vmatpush1.msra.mxu0 %v717
    %1155 = vmatprep.subr.mxu0 %v722
    %1156 = vmatpush1.msra.mxu0 %v721
    %1157 = vmatprep.subr.mxu0 %v726
    %1158 = vmatpush1.msra.mxu0 %v725
    %1159 = vmatprep.subr.mxu0 %v730
    %1160 = vmatpush1.msra.mxu0 %v729
    %1161 = vmatprep.subr.mxu0 %v734
    %1162 = vmatpush1.msra.mxu0 %v733
    %1163 = vmatprep.subr.mxu0 %v738
    %1164 = vmatpush1.msra.mxu0 %v737
    %1165 = vmatprep.subr.mxu0 %v742
    %1166 = vmatpush1.msra.mxu0 %v741
    %1167 = vmatprep.subr.mxu0 %v746
    %1168 = vmatpush1.msra.mxu0 %v745
    %1169 = vmatprep.subr.mxu0 %v750
    %1170 = vmatpush1.msra.mxu0 %v749
    %1171 = vmatprep.subr.mxu0 %v754
    %1172 = vmatpush1.msra.mxu0 %v753
    %1173 = vmatprep.subr.mxu0 %v758
    %1174 = vmatpush1.msra.mxu0 %v757
    %1175 = vmatprep.subr.mxu0 %v762
    %1176 = vmatpush1.msra.mxu0 %v761
    %1177 = vmatprep.subr.mxu0 %v766
    %1178 = vmatpush1.msra.mxu0 %v765
    %1179 = vmatprep.subr.mxu0 %v770
    %1180 = vmatpush1.msra.mxu0 %v769
    %1181 = vmatprep.subr.mxu0 %v774
    %1182 = vmatpush1.msra.mxu0 %v773
    %1183 = vmatprep.subr.mxu0 %v778
    %1184 = vmatpush1.msra.mxu0 %v777
    %1185 = vmatprep.subr.mxu0 %v782
    %1186 = vmatpush1.msra.mxu0 %v781
    %1187 = vmatprep.subr.mxu0 %v786
    %1188 = vmatpush1.msra.mxu0 %v785
    %1189 = vmatprep.mubr.f32.mxu0 %v973
    %1190 = vmatmul.mubr.f32.gmra.mrb[0].mxu0 %v965
    %v1191 = vpop.f32.mrb[0].mxu0
    %v1192 = vadd.f32 %v1121, %v1191
    %v1193 = vpop.f32.mrb[0].mxu0
    %v1194 = vadd.f32 %v1123, %v1193
    %1195 = vdwg.mxu0
    %1196 = vmatprep.subr.mxu0 %v790
    %1197 = vmatpush1.msra.mxu0 %v789
    %1198 = vmatprep.subr.mxu0 %v794
    %1199 = vmatpush1.msra.mxu0 %v793
    %1200 = vmatprep.subr.mxu0 %v798
    %1201 = vmatpush1.msra.mxu0 %v797
    %1202 = vmatprep.subr.mxu0 %v802
    %1203 = vmatpush1.msra.mxu0 %v801
    %1204 = vmatprep.subr.mxu0 %v806
    %1205 = vmatpush1.msra.mxu0 %v805
    %1206 = vmatprep.subr.mxu0 %v810
    %1207 = vmatpush1.msra.mxu0 %v809
    %1208 = vmatprep.subr.mxu0 %v814
    %1209 = vmatpush1.msra.mxu0 %v813
    %1210 = vmatprep.subr.mxu0 %v818
    %1211 = vmatpush1.msra.mxu0 %v817
    %1212 = vmatprep.subr.mxu0 %v822
    %1213 = vmatpush1.msra.mxu0 %v821
    %1214 = vmatprep.subr.mxu0 %v826
    %1215 = vmatpush1.msra.mxu0 %v825
    %1216 = vmatprep.subr.mxu0 %v830
    %1217 = vmatpush1.msra.mxu0 %v829
    %1218 = vmatprep.subr.mxu0 %v834
    %1219 = vmatpush1.msra.mxu0 %v833
    %1220 = vmatprep.subr.mxu0 %v838
    %1221 = vmatpush1.msra.mxu0 %v837
    %1222 = vmatprep.subr.mxu0 %v842
    %1223 = vmatpush1.msra.mxu0 %v841
    %1224 = vmatprep.subr.mxu0 %v846
    %1225 = vmatpush1.msra.mxu0 %v845
    %1226 = vmatprep.subr.mxu0 %v850
    %1227 = vmatpush1.msra.mxu0 %v849
    %1228 = vmatprep.subr.mxu0 %v854
    %1229 = vmatpush1.msra.mxu0 %v853
    %1230 = vmatprep.subr.mxu0 %v858
    %1231 = vmatpush1.msra.mxu0 %v857
    %1232 = vmatprep.subr.mxu0 %v862
    %1233 = vmatpush1.msra.mxu0 %v861
    %1234 = vmatprep.subr.mxu0 %v866
    %1235 = vmatpush1.msra.mxu0 %v865
    %1236 = vmatprep.subr.mxu0 %v870
    %1237 = vmatpush1.msra.mxu0 %v869
    %1238 = vmatprep.subr.mxu0 %v874
    %1239 = vmatpush1.msra.mxu0 %v873
    %1240 = vmatprep.subr.mxu0 %v878
    %1241 = vmatpush1.msra.mxu0 %v877
    %1242 = vmatprep.subr.mxu0 %v882
    %1243 = vmatpush1.msra.mxu0 %v881
    %1244 = vmatprep.subr.mxu0 %v886
    %1245 = vmatpush1.msra.mxu0 %v885
    %1246 = vmatprep.subr.mxu0 %v890
    %1247 = vmatpush1.msra.mxu0 %v889
    %1248 = vmatprep.subr.mxu0 %v894
    %1249 = vmatpush1.msra.mxu0 %v893
    %1250 = vmatprep.subr.mxu0 %v898
    %1251 = vmatpush1.msra.mxu0 %v897
    %1252 = vmatprep.subr.mxu0 %v902
    %1253 = vmatpush1.msra.mxu0 %v901
    %1254 = vmatprep.subr.mxu0 %v906
    %1255 = vmatpush1.msra.mxu0 %v905
    %1256 = vmatprep.subr.mxu0 %v910
    %1257 = vmatpush1.msra.mxu0 %v909
    %1258 = vmatprep.subr.mxu0 %v914
    %1259 = vmatpush1.msra.mxu0 %v913
    %1260 = vmatprep.mubr.f32.mxu0 %v974
    %1261 = vmatmul.mubr.f32.gmra.mrb[0].mxu0 %v972
    %v1262 = vpop.f32.mrb[0].mxu0
    %v1263 = vadd.f32 %v1192, %v1262
    %v1264 = vpop.f32.mrb[0].mxu0
    %v1265 = vadd.f32 %v1194, %v1264
    %1266 = vdwg.mxu0
    %1267 = vmatprep.subr.mxu0 %v408
    %1268 = vmatpush1.msra.mxu0 %v407
    %1269 = vmatprep.subr.mxu0 %v412
    %1270 = vmatpush1.msra.mxu0 %v411
    %1271 = vmatprep.subr.mxu0 %v416
    %1272 = vmatpush1.msra.mxu0 %v415
    %1273 = vmatprep.subr.mxu0 %v420
    %1274 = vmatpush1.msra.mxu0 %v419
    %1275 = vmatprep.subr.mxu0 %v424
    %1276 = vmatpush1.msra.mxu0 %v423
    %1277 = vmatprep.subr.mxu0 %v428
    %1278 = vmatpush1.msra.mxu0 %v427
    %1279 = vmatprep.subr.mxu0 %v432
    %1280 = vmatpush1.msra.mxu0 %v431
    %1281 = vmatprep.subr.mxu0 %v436
    %1282 = vmatpush1.msra.mxu0 %v435
    %1283 = vmatprep.subr.mxu0 %v440
    %1284 = vmatpush1.msra.mxu0 %v439
    %1285 = vmatprep.subr.mxu0 %v444
    %1286 = vmatpush1.msra.mxu0 %v443
    %1287 = vmatprep.subr.mxu0 %v448
    %1288 = vmatpush1.msra.mxu0 %v447
    %1289 = vmatprep.subr.mxu0 %v452
    %1290 = vmatpush1.msra.mxu0 %v451
    %1291 = vmatprep.subr.mxu0 %v456
    %1292 = vmatpush1.msra.mxu0 %v455
    %1293 = vmatprep.subr.mxu0 %v460
    %1294 = vmatpush1.msra.mxu0 %v459
    %1295 = vmatprep.subr.mxu0 %v464
    %1296 = vmatpush1.msra.mxu0 %v463
    %1297 = vmatprep.subr.mxu0 %v468
    %1298 = vmatpush1.msra.mxu0 %v467
    %1299 = vmatprep.subr.mxu0 %v472
    %1300 = vmatpush1.msra.mxu0 %v471
    %1301 = vmatprep.subr.mxu0 %v476
    %1302 = vmatpush1.msra.mxu0 %v475
    %1303 = vmatprep.subr.mxu0 %v480
    %1304 = vmatpush1.msra.mxu0 %v479
    %1305 = vmatprep.subr.mxu0 %v484
    %1306 = vmatpush1.msra.mxu0 %v483
    %1307 = vmatprep.subr.mxu0 %v488
    %1308 = vmatpush1.msra.mxu0 %v487
    %1309 = vmatprep.subr.mxu0 %v492
    %1310 = vmatpush1.msra.mxu0 %v491
    %1311 = vmatprep.subr.mxu0 %v496
    %1312 = vmatpush1.msra.mxu0 %v495
    %1313 = vmatprep.subr.mxu0 %v500
    %1314 = vmatpush1.msra.mxu0 %v499
    %1315 = vmatprep.subr.mxu0 %v504
    %1316 = vmatpush1.msra.mxu0 %v503
    %1317 = vmatprep.subr.mxu0 %v508
    %1318 = vmatpush1.msra.mxu0 %v507
    %1319 = vmatprep.subr.mxu0 %v512
    %1320 = vmatpush1.msra.mxu0 %v511
    %1321 = vmatprep.subr.mxu0 %v516
    %1322 = vmatpush1.msra.mxu0 %v515
    %1323 = vmatprep.subr.mxu0 %v520
    %1324 = vmatpush1.msra.mxu0 %v519
    %1325 = vmatprep.subr.mxu0 %v524
    %1326 = vmatpush1.msra.mxu0 %v523
    %1327 = vmatprep.subr.mxu0 %v528
    %1328 = vmatpush1.msra.mxu0 %v527
    %1329 = vmatprep.subr.mxu0 %v532
    %1330 = vmatpush1.msra.mxu0 %v531
    %1331 = vmatprep.mubr.f32.mxu0 %v956
    %1332 = vmatmul.mubr.f32.gmra.mrb[0].mxu0 %v948
    %v1333 = vpop.f32.mrb[0].mxu0
    %v1334 = vadd.f32 %v930, %v1333
    %v1335 = vpop.f32.mrb[0].mxu0
    %v1336 = vadd.f32 %v934, %v1335
    %1337 = vdwg.mxu0
    %1338 = vmatprep.subr.mxu0 %v536
    %1339 = vmatpush1.msra.mxu0 %v535
    %1340 = vmatprep.subr.mxu0 %v540
    %1341 = vmatpush1.msra.mxu0 %v539
    %1342 = vmatprep.subr.mxu0 %v544
    %1343 = vmatpush1.msra.mxu0 %v543
    %1344 = vmatprep.subr.mxu0 %v548
    %1345 = vmatpush1.msra.mxu0 %v547
    %1346 = vmatprep.subr.mxu0 %v552
    %1347 = vmatpush1.msra.mxu0 %v551
    %1348 = vmatprep.subr.mxu0 %v556
    %1349 = vmatpush1.msra.mxu0 %v555
    %1350 = vmatprep.subr.mxu0 %v560
    %1351 = vmatpush1.msra.mxu0 %v559
    %1352 = vmatprep.subr.mxu0 %v564
    %1353 = vmatpush1.msra.mxu0 %v563
    %1354 = vmatprep.subr.mxu0 %v568
    %1355 = vmatpush1.msra.mxu0 %v567
    %1356 = vmatprep.subr.mxu0 %v572
    %1357 = vmatpush1.msra.mxu0 %v571
    %1358 = vmatprep.subr.mxu0 %v576
    %1359 = vmatpush1.msra.mxu0 %v575
    %1360 = vmatprep.subr.mxu0 %v580
    %1361 = vmatpush1.msra.mxu0 %v579
    %1362 = vmatprep.subr.mxu0 %v584
    %1363 = vmatpush1.msra.mxu0 %v583
    %1364 = vmatprep.subr.mxu0 %v588
    %1365 = vmatpush1.msra.mxu0 %v587
    %1366 = vmatprep.subr.mxu0 %v592
    %1367 = vmatpush1.msra.mxu0 %v591
    %1368 = vmatprep.subr.mxu0 %v596
    %1369 = vmatpush1.msra.mxu0 %v595
    %1370 = vmatprep.subr.mxu0 %v600
    %1371 = vmatpush1.msra.mxu0 %v599
    %1372 = vmatprep.subr.mxu0 %v604
    %1373 = vmatpush1.msra.mxu0 %v603
    %1374 = vmatprep.subr.mxu0 %v608
    %1375 = vmatpush1.msra.mxu0 %v607
    %1376 = vmatprep.subr.mxu0 %v612
    %1377 = vmatpush1.msra.mxu0 %v611
    %1378 = vmatprep.subr.mxu0 %v616
    %1379 = vmatpush1.msra.mxu0 %v615
    %1380 = vmatprep.subr.mxu0 %v620
    %1381 = vmatpush1.msra.mxu0 %v619
    %1382 = vmatprep.subr.mxu0 %v624
    %1383 = vmatpush1.msra.mxu0 %v623
    %1384 = vmatprep.subr.mxu0 %v628
    %1385 = vmatpush1.msra.mxu0 %v627
    %1386 = vmatprep.subr.mxu0 %v632
    %1387 = vmatpush1.msra.mxu0 %v631
    %1388 = vmatprep.subr.mxu0 %v636
    %1389 = vmatpush1.msra.mxu0 %v635
    %1390 = vmatprep.subr.mxu0 %v640
    %1391 = vmatpush1.msra.mxu0 %v639
    %1392 = vmatprep.subr.mxu0 %v644
    %1393 = vmatpush1.msra.mxu0 %v643
    %1394 = vmatprep.subr.mxu0 %v648
    %1395 = vmatpush1.msra.mxu0 %v647
    %1396 = vmatprep.subr.mxu0 %v652
    %1397 = vmatpush1.msra.mxu0 %v651
    %1398 = vmatprep.subr.mxu0 %v656
    %1399 = vmatpush1.msra.mxu0 %v655
    %1400 = vmatprep.subr.mxu0 %v660
    %1401 = vmatpush1.msra.mxu0 %v659
    %1402 = vmatprep.mubr.f32.mxu0 %v957
    %1403 = vmatmul.mubr.f32.gmra.mrb[0].mxu0 %v955
    %v1404 = vpop.f32.mrb[0].mxu0
    %v1405 = vadd.f32 %v1334, %v1404
    %v1406 = vpop.f32.mrb[0].mxu0
    %v1407 = vadd.f32 %v1336, %v1406
    %1408 = vdwg.mxu0
    %1409 = vmatprep.subr.mxu0 %v664
    %1410 = vmatpush1.msra.mxu0 %v663
    %1411 = vmatprep.subr.mxu0 %v668
    %1412 = vmatpush1.msra.mxu0 %v667
    %1413 = vmatprep.subr.mxu0 %v672
    %1414 = vmatpush1.msra.mxu0 %v671
    %1415 = vmatprep.subr.mxu0 %v676
    %1416 = vmatpush1.msra.mxu0 %v675
    %1417 = vmatprep.subr.mxu0 %v680
    %1418 = vmatpush1.msra.mxu0 %v679
    %1419 = vmatprep.subr.mxu0 %v684
    %1420 = vmatpush1.msra.mxu0 %v683
    %1421 = vmatprep.subr.mxu0 %v688
    %1422 = vmatpush1.msra.mxu0 %v687
    %1423 = vmatprep.subr.mxu0 %v692
    %1424 = vmatpush1.msra.mxu0 %v691
    %1425 = vmatprep.subr.mxu0 %v696
    %1426 = vmatpush1.msra.mxu0 %v695
    %1427 = vmatprep.subr.mxu0 %v700
    %1428 = vmatpush1.msra.mxu0 %v699
    %1429 = vmatprep.subr.mxu0 %v704
    %1430 = vmatpush1.msra.mxu0 %v703
    %1431 = vmatprep.subr.mxu0 %v708
    %1432 = vmatpush1.msra.mxu0 %v707
    %1433 = vmatprep.subr.mxu0 %v712
    %1434 = vmatpush1.msra.mxu0 %v711
    %1435 = vmatprep.subr.mxu0 %v716
    %1436 = vmatpush1.msra.mxu0 %v715
    %1437 = vmatprep.subr.mxu0 %v720
    %1438 = vmatpush1.msra.mxu0 %v719
    %1439 = vmatprep.subr.mxu0 %v724
    %1440 = vmatpush1.msra.mxu0 %v723
    %1441 = vmatprep.subr.mxu0 %v728
    %1442 = vmatpush1.msra.mxu0 %v727
    %1443 = vmatprep.subr.mxu0 %v732
    %1444 = vmatpush1.msra.mxu0 %v731
    %1445 = vmatprep.subr.mxu0 %v736
    %1446 = vmatpush1.msra.mxu0 %v735
    %1447 = vmatprep.subr.mxu0 %v740
    %1448 = vmatpush1.msra.mxu0 %v739
    %1449 = vmatprep.subr.mxu0 %v744
    %1450 = vmatpush1.msra.mxu0 %v743
    %1451 = vmatprep.subr.mxu0 %v748
    %1452 = vmatpush1.msra.mxu0 %v747
    %1453 = vmatprep.subr.mxu0 %v752
    %1454 = vmatpush1.msra.mxu0 %v751
    %1455 = vmatprep.subr.mxu0 %v756
    %1456 = vmatpush1.msra.mxu0 %v755
    %1457 = vmatprep.subr.mxu0 %v760
    %1458 = vmatpush1.msra.mxu0 %v759
    %1459 = vmatprep.subr.mxu0 %v764
    %1460 = vmatpush1.msra.mxu0 %v763
    %1461 = vmatprep.subr.mxu0 %v768
    %1462 = vmatpush1.msra.mxu0 %v767
    %1463 = vmatprep.subr.mxu0 %v772
    %1464 = vmatpush1.msra.mxu0 %v771
    %1465 = vmatprep.subr.mxu0 %v776
    %1466 = vmatpush1.msra.mxu0 %v775
    %1467 = vmatprep.subr.mxu0 %v780
    %1468 = vmatpush1.msra.mxu0 %v779
    %1469 = vmatprep.subr.mxu0 %v784
    %1470 = vmatpush1.msra.mxu0 %v783
    %1471 = vmatprep.subr.mxu0 %v788
    %1472 = vmatpush1.msra.mxu0 %v787
    %1473 = vmatprep.mubr.f32.mxu0 %v973
    %1474 = vmatmul.mubr.f32.gmra.mrb[0].mxu0 %v965
    %v1475 = vpop.f32.mrb[0].mxu0
    %v1476 = vadd.f32 %v1405, %v1475
    %v1477 = vpop.f32.mrb[0].mxu0
    %v1478 = vadd.f32 %v1407, %v1477
    %1479 = vdwg.mxu0
    %1480 = vmatprep.subr.mxu0 %v792
    %1481 = vmatpush1.msra.mxu0 %v791
    %1482 = vmatprep.subr.mxu0 %v796
    %1483 = vmatpush1.msra.mxu0 %v795
    %1484 = vmatprep.subr.mxu0 %v800
    %1485 = vmatpush1.msra.mxu0 %v799
    %1486 = vmatprep.subr.mxu0 %v804
    %1487 = vmatpush1.msra.mxu0 %v803
    %1488 = vmatprep.subr.mxu0 %v808
    %1489 = vmatpush1.msra.mxu0 %v807
    %1490 = vmatprep.subr.mxu0 %v812
    %1491 = vmatpush1.msra.mxu0 %v811
    %1492 = vmatprep.subr.mxu0 %v816
    %1493 = vmatpush1.msra.mxu0 %v815
    %1494 = vmatprep.subr.mxu0 %v820
    %1495 = vmatpush1.msra.mxu0 %v819
    %1496 = vmatprep.subr.mxu0 %v824
    %1497 = vmatpush1.msra.mxu0 %v823
    %1498 = vmatprep.subr.mxu0 %v828
    %1499 = vmatpush1.msra.mxu0 %v827
    %1500 = vmatprep.subr.mxu0 %v832
    %1501 = vmatpush1.msra.mxu0 %v831
    %1502 = vmatprep.subr.mxu0 %v836
    %1503 = vmatpush1.msra.mxu0 %v835
    %1504 = vmatprep.subr.mxu0 %v840
    %1505 = vmatpush1.msra.mxu0 %v839
    %1506 = vmatprep.subr.mxu0 %v844
    %1507 = vmatpush1.msra.mxu0 %v843
    %1508 = vmatprep.subr.mxu0 %v848
    %1509 = vmatpush1.msra.mxu0 %v847
    %1510 = vmatprep.subr.mxu0 %v852
    %1511 = vmatpush1.msra.mxu0 %v851
    %1512 = vmatprep.subr.mxu0 %v856
    %1513 = vmatpush1.msra.mxu0 %v855
    %1514 = vmatprep.subr.mxu0 %v860
    %1515 = vmatpush1.msra.mxu0 %v859
    %1516 = vmatprep.subr.mxu0 %v864
    %1517 = vmatpush1.msra.mxu0 %v863
    %1518 = vmatprep.subr.mxu0 %v868
    %1519 = vmatpush1.msra.mxu0 %v867
    %1520 = vmatprep.subr.mxu0 %v872
    %1521 = vmatpush1.msra.mxu0 %v871
    %1522 = vmatprep.subr.mxu0 %v876
    %1523 = vmatpush1.msra.mxu0 %v875
    %1524 = vmatprep.subr.mxu0 %v880
    %1525 = vmatpush1.msra.mxu0 %v879
    %1526 = vmatprep.subr.mxu0 %v884
    %1527 = vmatpush1.msra.mxu0 %v883
    %1528 = vmatprep.subr.mxu0 %v888
    %1529 = vmatpush1.msra.mxu0 %v887
    %1530 = vmatprep.subr.mxu0 %v892
    %1531 = vmatpush1.msra.mxu0 %v891
    %1532 = vmatprep.subr.mxu0 %v896
    %1533 = vmatpush1.msra.mxu0 %v895
    %1534 = vmatprep.subr.mxu0 %v900
    %1535 = vmatpush1.msra.mxu0 %v899
    %1536 = vmatprep.subr.mxu0 %v904
    %1537 = vmatpush1.msra.mxu0 %v903
    %1538 = vmatprep.subr.mxu0 %v908
    %1539 = vmatpush1.msra.mxu0 %v907
    %1540 = vmatprep.subr.mxu0 %v912
    %1541 = vmatpush1.msra.mxu0 %v911
    %1542 = vmatprep.subr.mxu0 %v916
    %1543 = vmatpush1.msra.mxu0 %v915
    %1544 = vmatprep.mubr.f32.mxu0 %v974
    %1545 = vmatmul.mubr.f32.gmra.mrb[0].mxu0 %v972
    %v1546 = vpop.f32.mrb[0].mxu0
    %v1547 = vadd.f32 %v1476, %v1546
    %v1548 = vpop.f32.mrb[0].mxu0
    %v1549 = vadd.f32 %v1478, %v1548
    %1550 = vdwg.mxu0
    %v1551 = vmax.f32 %v1263, 0.0
    %v1552 = vmax.f32 %v1265, 0.0
    %v1553 = vmax.f32 %v1547, 0.0
    %v1554 = vmax.f32 %v1549, 0.0
    %v1555 = vld [vmem:[#allocation8] sm:$0xff]
    %v1556 = vld [vmem:[#allocation8 + $0x8] sm:$0xff]
    %v1557 = vld [vmem:[#allocation8 + $0x10] sm:$0xff]
    %v1558 = vld [vmem:[#allocation8 + $0x18] sm:$0xff]
    %v1559 = vld [vmem:[#allocation8 + $0x20] sm:$0xff]
    %v1560 = vld [vmem:[#allocation8 + $0x28] sm:$0xff]
    %v1561 = vld [vmem:[#allocation8 + $0x30] sm:$0xff]
    %v1562 = vld [vmem:[#allocation8 + $0x38] sm:$0xff]
    %v1563 = vld [vmem:[#allocation8 + $0x40] sm:$0xff]
    %v1564 = vld [vmem:[#allocation8 + $0x48] sm:$0xff]
    %v1565 = vld [vmem:[#allocation8 + $0x50] sm:$0xff]
    %v1566 = vld [vmem:[#allocation8 + $0x58] sm:$0xff]
    %v1567 = vld [vmem:[#allocation8 + $0x60] sm:$0xff]
    %v1568 = vld [vmem:[#allocation8 + $0x68] sm:$0xff]
    %v1569 = vld [vmem:[#allocation8 + $0x70] sm:$0xff]
    %v1570 = vld [vmem:[#allocation8 + $0x78] sm:$0xff]
    %v1571 = vld [vmem:[#allocation8 + $0x80] sm:$0xff]
    %v1572 = vld [vmem:[#allocation8 + $0x88] sm:$0xff]
    %v1573 = vld [vmem:[#allocation8 + $0x90] sm:$0xff]
    %v1574 = vld [vmem:[#allocation8 + $0x98] sm:$0xff]
    %v1575 = vld [vmem:[#allocation8 + $0xa0] sm:$0xff]
    %v1576 = vld [vmem:[#allocation8 + $0xa8] sm:$0xff]
    %v1577 = vld [vmem:[#allocation8 + $0xb0] sm:$0xff]
    %v1578 = vld [vmem:[#allocation8 + $0xb8] sm:$0xff]
    %v1579 = vld [vmem:[#allocation8 + $0xc0] sm:$0xff]
    %v1580 = vld [vmem:[#allocation8 + $0xc8] sm:$0xff]
    %v1581 = vld [vmem:[#allocation8 + $0xd0] sm:$0xff]
    %v1582 = vld [vmem:[#allocation8 + $0xd8] sm:$0xff]
    %v1583 = vld [vmem:[#allocation8 + $0xe0] sm:$0xff]
    %v1584 = vld [vmem:[#allocation8 + $0xe8] sm:$0xff]
    %v1585 = vld [vmem:[#allocation8 + $0xf0] sm:$0xff]
    %v1586 = vld [vmem:[#allocation8 + $0xf8] sm:$0xff]
    %v1587 = vld [vmem:[#allocation8 + $0x100] sm:$0xff]
    %v1588 = vld [vmem:[#allocation8 + $0x108] sm:$0xff]
    %v1589 = vld [vmem:[#allocation8 + $0x110] sm:$0xff]
    %v1590 = vld [vmem:[#allocation8 + $0x118] sm:$0xff]
    %v1591 = vld [vmem:[#allocation8 + $0x120] sm:$0xff]
    %v1592 = vld [vmem:[#allocation8 + $0x128] sm:$0xff]
    %v1593 = vld [vmem:[#allocation8 + $0x130] sm:$0xff]
    %v1594 = vld [vmem:[#allocation8 + $0x138] sm:$0xff]
    %v1595 = vld [vmem:[#allocation8 + $0x140] sm:$0xff]
    %v1596 = vld [vmem:[#allocation8 + $0x148] sm:$0xff]
    %v1597 = vld [vmem:[#allocation8 + $0x150] sm:$0xff]
    %v1598 = vld [vmem:[#allocation8 + $0x158] sm:$0xff]
    %v1599 = vld [vmem:[#allocation8 + $0x160] sm:$0xff]
    %v1600 = vld [vmem:[#allocation8 + $0x168] sm:$0xff]
    %v1601 = vld [vmem:[#allocation8 + $0x170] sm:$0xff]
    %v1602 = vld [vmem:[#allocation8 + $0x178] sm:$0xff]
    %v1603 = vld [vmem:[#allocation8 + $0x180] sm:$0xff]
    %v1604 = vld [vmem:[#allocation8 + $0x188] sm:$0xff]
    %v1605 = vld [vmem:[#allocation8 + $0x190] sm:$0xff]
    %v1606 = vld [vmem:[#allocation8 + $0x198] sm:$0xff]
    %v1607 = vld [vmem:[#allocation8 + $0x1a0] sm:$0xff]
    %v1608 = vld [vmem:[#allocation8 + $0x1a8] sm:$0xff]
    %v1609 = vld [vmem:[#allocation8 + $0x1b0] sm:$0xff]
    %v1610 = vld [vmem:[#allocation8 + $0x1b8] sm:$0xff]
    %v1611 = vld [vmem:[#allocation8 + $0x1c0] sm:$0xff]
    %v1612 = vld [vmem:[#allocation8 + $0x1c8] sm:$0xff]
    %v1613 = vld [vmem:[#allocation8 + $0x1d0] sm:$0xff]
    %v1614 = vld [vmem:[#allocation8 + $0x1d8] sm:$0xff]
    %v1615 = vld [vmem:[#allocation8 + $0x1e0] sm:$0xff]
    %v1616 = vld [vmem:[#allocation8 + $0x1e8] sm:$0xff]
    %v1617 = vld [vmem:[#allocation8 + $0x1f0] sm:$0xff]
    %v1618 = vld [vmem:[#allocation8 + $0x1f8] sm:$0xff]
    %v1619 = vld [vmem:[#allocation8 + $0x200] sm:$0xff]
    %v1620 = vld [vmem:[#allocation8 + $0x208] sm:$0xff]
    %v1621 = vld [vmem:[#allocation8 + $0x210] sm:$0xff]
    %v1622 = vld [vmem:[#allocation8 + $0x218] sm:$0xff]
    %v1623 = vld [vmem:[#allocation8 + $0x220] sm:$0xff]
    %v1624 = vld [vmem:[#allocation8 + $0x228] sm:$0xff]
    %v1625 = vld [vmem:[#allocation8 + $0x230] sm:$0xff]
    %v1626 = vld [vmem:[#allocation8 + $0x238] sm:$0xff]
    %v1627 = vld [vmem:[#allocation8 + $0x240] sm:$0xff]
    %v1628 = vld [vmem:[#allocation8 + $0x248] sm:$0xff]
    %v1629 = vld [vmem:[#allocation8 + $0x250] sm:$0xff]
    %v1630 = vld [vmem:[#allocation8 + $0x258] sm:$0xff]
    %v1631 = vld [vmem:[#allocation8 + $0x260] sm:$0xff]
    %v1632 = vld [vmem:[#allocation8 + $0x268] sm:$0xff]
    %v1633 = vld [vmem:[#allocation8 + $0x270] sm:$0xff]
    %v1634 = vld [vmem:[#allocation8 + $0x278] sm:$0xff]
    %v1635 = vld [vmem:[#allocation8 + $0x280] sm:$0xff]
    %v1636 = vld [vmem:[#allocation8 + $0x288] sm:$0xff]
    %v1637 = vld [vmem:[#allocation8 + $0x290] sm:$0xff]
    %v1638 = vld [vmem:[#allocation8 + $0x298] sm:$0xff]
    %v1639 = vld [vmem:[#allocation8 + $0x2a0] sm:$0xff]
    %v1640 = vld [vmem:[#allocation8 + $0x2a8] sm:$0xff]
    %v1641 = vld [vmem:[#allocation8 + $0x2b0] sm:$0xff]
    %v1642 = vld [vmem:[#allocation8 + $0x2b8] sm:$0xff]
    %v1643 = vld [vmem:[#allocation8 + $0x2c0] sm:$0xff]
    %v1644 = vld [vmem:[#allocation8 + $0x2c8] sm:$0xff]
    %v1645 = vld [vmem:[#allocation8 + $0x2d0] sm:$0xff]
    %v1646 = vld [vmem:[#allocation8 + $0x2d8] sm:$0xff]
    %v1647 = vld [vmem:[#allocation8 + $0x2e0] sm:$0xff]
    %v1648 = vld [vmem:[#allocation8 + $0x2e8] sm:$0xff]
    %v1649 = vld [vmem:[#allocation8 + $0x2f0] sm:$0xff]
    %v1650 = vld [vmem:[#allocation8 + $0x2f8] sm:$0xff]
    %v1651 = vld [vmem:[#allocation8 + $0x300] sm:$0xff]
    %v1652 = vld [vmem:[#allocation8 + $0x308] sm:$0xff]
    %v1653 = vld [vmem:[#allocation8 + $0x310] sm:$0xff]
    %v1654 = vld [vmem:[#allocation8 + $0x318] sm:$0xff]
    %v1655 = vld [vmem:[#allocation8 + $0x320] sm:$0xff]
    %v1656 = vld [vmem:[#allocation8 + $0x328] sm:$0xff]
    %v1657 = vld [vmem:[#allocation8 + $0x330] sm:$0xff]
    %v1658 = vld [vmem:[#allocation8 + $0x338] sm:$0xff]
    %v1659 = vld [vmem:[#allocation8 + $0x340] sm:$0xff]
    %v1660 = vld [vmem:[#allocation8 + $0x348] sm:$0xff]
    %v1661 = vld [vmem:[#allocation8 + $0x350] sm:$0xff]
    %v1662 = vld [vmem:[#allocation8 + $0x358] sm:$0xff]
    %v1663 = vld [vmem:[#allocation8 + $0x360] sm:$0xff]
    %v1664 = vld [vmem:[#allocation8 + $0x368] sm:$0xff]
    %v1665 = vld [vmem:[#allocation8 + $0x370] sm:$0xff]
    %v1666 = vld [vmem:[#allocation8 + $0x378] sm:$0xff]
    %v1667 = vld [vmem:[#allocation8 + $0x380] sm:$0xff]
    %v1668 = vld [vmem:[#allocation8 + $0x388] sm:$0xff]
    %v1669 = vld [vmem:[#allocation8 + $0x390] sm:$0xff]
    %v1670 = vld [vmem:[#allocation8 + $0x398] sm:$0xff]
    %v1671 = vld [vmem:[#allocation8 + $0x3a0] sm:$0xff]
    %v1672 = vld [vmem:[#allocation8 + $0x3a8] sm:$0xff]
    %v1673 = vld [vmem:[#allocation8 + $0x3b0] sm:$0xff]
    %v1674 = vld [vmem:[#allocation8 + $0x3b8] sm:$0xff]
    %v1675 = vld [vmem:[#allocation8 + $0x3c0] sm:$0xff]
    %v1676 = vld [vmem:[#allocation8 + $0x3c8] sm:$0xff]
    %v1677 = vld [vmem:[#allocation8 + $0x3d0] sm:$0xff]
    %v1678 = vld [vmem:[#allocation8 + $0x3d8] sm:$0xff]
    %v1679 = vld [vmem:[#allocation8 + $0x3e0] sm:$0xff]
    %v1680 = vld [vmem:[#allocation8 + $0x3e8] sm:$0xff]
    %v1681 = vld [vmem:[#allocation8 + $0x3f0] sm:$0xff]
    %v1682 = vld [vmem:[#allocation8 + $0x3f8] sm:$0xff]
    %v1683 = vld [vmem:[#allocation10] sm:$0x3]
    %v1685 = vlaneseq
    %v1686 = vshrl.u32 %v1685, 7
    %v1687 = vsub.s32 0, %v1686
    %v1688 = vrot.slane %v1683, %v1687
    %v1689 = vlaneseq
    %v1690 = vshrl.u32 %v1689, 7
    %v1691 = vsub.s32 1, %v1690
    %v1692 = vrot.slane %v1683, %v1691
    %1695 = vmatprep.subr.mxu0 %v1556
    %1696 = vmatpush1.msra.mxu0 %v1555
    %1697 = vmatprep.subr.mxu0 %v1558
    %1698 = vmatpush1.msra.mxu0 %v1557
    %1699 = vmatprep.subr.mxu0 %v1560
    %1700 = vmatpush1.msra.mxu0 %v1559
    %1701 = vmatprep.subr.mxu0 %v1562
    %1702 = vmatpush1.msra.mxu0 %v1561
    %1703 = vmatprep.subr.mxu0 %v1564
    %1704 = vmatpush1.msra.mxu0 %v1563
    %1705 = vmatprep.subr.mxu0 %v1566
    %1706 = vmatpush1.msra.mxu0 %v1565
    %1707 = vmatprep.subr.mxu0 %v1568
    %1708 = vmatpush1.msra.mxu0 %v1567
    %1709 = vmatprep.subr.mxu0 %v1570
    %1710 = vmatpush1.msra.mxu0 %v1569
    %1711 = vmatprep.subr.mxu0 %v1572
    %1712 = vmatpush1.msra.mxu0 %v1571
    %1713 = vmatprep.subr.mxu0 %v1574
    %1714 = vmatpush1.msra.mxu0 %v1573
    %1715 = vmatprep.subr.mxu0 %v1576
    %1716 = vmatpush1.msra.mxu0 %v1575
    %1717 = vmatprep.subr.mxu0 %v1578
    %1718 = vmatpush1.msra.mxu0 %v1577
    %1719 = vmatprep.subr.mxu0 %v1580
    %1720 = vmatpush1.msra.mxu0 %v1579
    %1721 = vmatprep.subr.mxu0 %v1582
    %1722 = vmatpush1.msra.mxu0 %v1581
    %1723 = vmatprep.subr.mxu0 %v1584
    %1724 = vmatpush1.msra.mxu0 %v1583
    %1725 = vmatprep.subr.mxu0 %v1586
    %1726 = vmatpush1.msra.mxu0 %v1585
    %1727 = vmatprep.subr.mxu0 %v1588
    %1728 = vmatpush1.msra.mxu0 %v1587
    %1729 = vmatprep.subr.mxu0 %v1590
    %1730 = vmatpush1.msra.mxu0 %v1589
    %1731 = vmatprep.subr.mxu0 %v1592
    %1732 = vmatpush1.msra.mxu0 %v1591
    %1733 = vmatprep.subr.mxu0 %v1594
    %1734 = vmatpush1.msra.mxu0 %v1593
    %1735 = vmatprep.subr.mxu0 %v1596
    %1736 = vmatpush1.msra.mxu0 %v1595
    %1737 = vmatprep.subr.mxu0 %v1598
    %1738 = vmatpush1.msra.mxu0 %v1597
    %1739 = vmatprep.subr.mxu0 %v1600
    %1740 = vmatpush1.msra.mxu0 %v1599
    %1741 = vmatprep.subr.mxu0 %v1602
    %1742 = vmatpush1.msra.mxu0 %v1601
    %1743 = vmatprep.subr.mxu0 %v1604
    %1744 = vmatpush1.msra.mxu0 %v1603
    %1745 = vmatprep.subr.mxu0 %v1606
    %1746 = vmatpush1.msra.mxu0 %v1605
    %1747 = vmatprep.subr.mxu0 %v1608
    %1748 = vmatpush1.msra.mxu0 %v1607
    %1749 = vmatprep.subr.mxu0 %v1610
    %1750 = vmatpush1.msra.mxu0 %v1609
    %1751 = vmatprep.subr.mxu0 %v1612
    %1752 = vmatpush1.msra.mxu0 %v1611
    %1753 = vmatprep.subr.mxu0 %v1614
    %1754 = vmatpush1.msra.mxu0 %v1613
    %1755 = vmatprep.subr.mxu0 %v1616
    %1756 = vmatpush1.msra.mxu0 %v1615
    %1757 = vmatprep.subr.mxu0 %v1618
    %1758 = vmatpush1.msra.mxu0 %v1617
    %1759 = vmatprep.mubr.f32.mxu0 %v1552
    %1760 = vmatmul.mubr.f32.gmra.mrb[0].mxu0 %v1551
    %v1761 = vpop.f32.mrb[0].mxu0
    %v1762 = vadd.f32 %v1688, %v1761
    %v1763 = vpop.f32.mrb[0].mxu0
    %v1764 = vadd.f32 %v1692, %v1763
    %1765 = vdwg.mxu0
    %1766 = vmatprep.subr.mxu0 %v1620
    %1767 = vmatpush1.msra.mxu0 %v1619
    %1768 = vmatprep.subr.mxu0 %v1622
    %1769 = vmatpush1.msra.mxu0 %v1621
    %1770 = vmatprep.subr.mxu0 %v1624
    %1771 = vmatpush1.msra.mxu0 %v1623
    %1772 = vmatprep.subr.mxu0 %v1626
    %1773 = vmatpush1.msra.mxu0 %v1625
    %1774 = vmatprep.subr.mxu0 %v1628
    %1775 = vmatpush1.msra.mxu0 %v1627
    %1776 = vmatprep.subr.mxu0 %v1630
    %1777 = vmatpush1.msra.mxu0 %v1629
    %1778 = vmatprep.subr.mxu0 %v1632
    %1779 = vmatpush1.msra.mxu0 %v1631
    %1780 = vmatprep.subr.mxu0 %v1634
    %1781 = vmatpush1.msra.mxu0 %v1633
    %1782 = vmatprep.subr.mxu0 %v1636
    %1783 = vmatpush1.msra.mxu0 %v1635
    %1784 = vmatprep.subr.mxu0 %v1638
    %1785 = vmatpush1.msra.mxu0 %v1637
    %1786 = vmatprep.subr.mxu0 %v1640
    %1787 = vmatpush1.msra.mxu0 %v1639
    %1788 = vmatprep.subr.mxu0 %v1642
    %1789 = vmatpush1.msra.mxu0 %v1641
    %1790 = vmatprep.subr.mxu0 %v1644
    %1791 = vmatpush1.msra.mxu0 %v1643
    %1792 = vmatprep.subr.mxu0 %v1646
    %1793 = vmatpush1.msra.mxu0 %v1645
    %1794 = vmatprep.subr.mxu0 %v1648
    %1795 = vmatpush1.msra.mxu0 %v1647
    %1796 = vmatprep.subr.mxu0 %v1650
    %1797 = vmatpush1.msra.mxu0 %v1649
    %1798 = vmatprep.subr.mxu0 %v1652
    %1799 = vmatpush1.msra.mxu0 %v1651
    %1800 = vmatprep.subr.mxu0 %v1654
    %1801 = vmatpush1.msra.mxu0 %v1653
    %1802 = vmatprep.subr.mxu0 %v1656
    %1803 = vmatpush1.msra.mxu0 %v1655
    %1804 = vmatprep.subr.mxu0 %v1658
    %1805 = vmatpush1.msra.mxu0 %v1657
    %1806 = vmatprep.subr.mxu0 %v1660
    %1807 = vmatpush1.msra.mxu0 %v1659
    %1808 = vmatprep.subr.mxu0 %v1662
    %1809 = vmatpush1.msra.mxu0 %v1661
    %1810 = vmatprep.subr.mxu0 %v1664
    %1811 = vmatpush1.msra.mxu0 %v1663
    %1812 = vmatprep.subr.mxu0 %v1666
    %1813 = vmatpush1.msra.mxu0 %v1665
    %1814 = vmatprep.subr.mxu0 %v1668
    %1815 = vmatpush1.msra.mxu0 %v1667
    %1816 = vmatprep.subr.mxu0 %v1670
    %1817 = vmatpush1.msra.mxu0 %v1669
    %1818 = vmatprep.subr.mxu0 %v1672
    %1819 = vmatpush1.msra.mxu0 %v1671
    %1820 = vmatprep.subr.mxu0 %v1674
    %1821 = vmatpush1.msra.mxu0 %v1673
    %1822 = vmatprep.subr.mxu0 %v1676
    %1823 = vmatpush1.msra.mxu0 %v1675
    %1824 = vmatprep.subr.mxu0 %v1678
    %1825 = vmatpush1.msra.mxu0 %v1677
    %1826 = vmatprep.subr.mxu0 %v1680
    %1827 = vmatpush1.msra.mxu0 %v1679
    %1828 = vmatprep.subr.mxu0 %v1682
    %1829 = vmatpush1.msra.mxu0 %v1681
    %1830 = vmatprep.mubr.f32.mxu0 %v1554
    %1831 = vmatmul.mubr.f32.gmra.mrb[0].mxu0 %v1553
    %v1832 = vpop.f32.mrb[0].mxu0
    %v1833 = vadd.f32 %v1762, %v1832
    %v1834 = vpop.f32.mrb[0].mxu0
    %v1835 = vadd.f32 %v1764, %v1834
    %1836 = vdwg.mxu0
    %v1837 = vmax.f32 %v1833, 0.0
    %v1838 = vmax.f32 %v1835, 0.0
    %v1839 = vld [vmem:[#allocation11] sm:$0xff]
    %v1840 = vld [vmem:[#allocation11 + $0x8] sm:$0xff]
    %v1841 = vld [vmem:[#allocation11 + $0x10] sm:$0xff]
    %v1842 = vld [vmem:[#allocation11 + $0x18] sm:$0xff]
    %v1843 = vld [vmem:[#allocation11 + $0x20] sm:$0xff]
    %v1844 = vld [vmem:[#allocation11 + $0x28] sm:$0xff]
    %v1845 = vld [vmem:[#allocation11 + $0x30] sm:$0xff]
    %v1846 = vld [vmem:[#allocation11 + $0x38] sm:$0xff]
    %v1847 = vld [vmem:[#allocation11 + $0x40] sm:$0xff]
    %v1848 = vld [vmem:[#allocation11 + $0x48] sm:$0xff]
    %v1849 = vld [vmem:[#allocation11 + $0x50] sm:$0xff]
    %v1850 = vld [vmem:[#allocation11 + $0x58] sm:$0xff]
    %v1851 = vld [vmem:[#allocation11 + $0x60] sm:$0xff]
    %v1852 = vld [vmem:[#allocation11 + $0x68] sm:$0xff]
    %v1853 = vld [vmem:[#allocation11 + $0x70] sm:$0xff]
    %v1854 = vld [vmem:[#allocation11 + $0x78] sm:$0xff]
    %v1855 = vld [vmem:[#allocation11 + $0x80] sm:$0xff]
    %v1856 = vld [vmem:[#allocation11 + $0x88] sm:$0xff]
    %v1857 = vld [vmem:[#allocation11 + $0x90] sm:$0xff]
    %v1858 = vld [vmem:[#allocation11 + $0x98] sm:$0xff]
    %v1859 = vld [vmem:[#allocation11 + $0xa0] sm:$0xff]
    %v1860 = vld [vmem:[#allocation11 + $0xa8] sm:$0xff]
    %v1861 = vld [vmem:[#allocation11 + $0xb0] sm:$0xff]
    %v1862 = vld [vmem:[#allocation11 + $0xb8] sm:$0xff]
    %v1863 = vld [vmem:[#allocation11 + $0xc0] sm:$0xff]
    %v1864 = vld [vmem:[#allocation11 + $0xc8] sm:$0xff]
    %v1865 = vld [vmem:[#allocation11 + $0xd0] sm:$0xff]
    %v1866 = vld [vmem:[#allocation11 + $0xd8] sm:$0xff]
    %v1867 = vld [vmem:[#allocation11 + $0xe0] sm:$0xff]
    %v1868 = vld [vmem:[#allocation11 + $0xe8] sm:$0xff]
    %v1869 = vld [vmem:[#allocation11 + $0xf0] sm:$0xff]
    %v1870 = vld [vmem:[#allocation11 + $0xf8] sm:$0xff]
    %v1871 = vld [vmem:[#allocation13] sm:$0x1]
    %v1873 = vlaneseq
    %v1874 = vshrl.u32 %v1873, 7
    %v1875 = vsub.s32 0, %v1874
    %v1876 = vrot.slane %v1871, %v1875
    %1878 = vmatprep.subr.mxu0 0.0
    %1879 = vmatpush1.msra.mxu0 %v1839
    %1880 = vmatprep.subr.mxu0 0.0
    %1881 = vmatpush1.msra.mxu0 %v1840
    %1882 = vmatprep.subr.mxu0 0.0
    %1883 = vmatpush1.msra.mxu0 %v1841
    %1884 = vmatprep.subr.mxu0 0.0
    %1885 = vmatpush1.msra.mxu0 %v1842
    %1886 = vmatprep.subr.mxu0 0.0
    %1887 = vmatpush1.msra.mxu0 %v1843
    %1888 = vmatprep.subr.mxu0 0.0
    %1889 = vmatpush1.msra.mxu0 %v1844
    %1890 = vmatprep.subr.mxu0 0.0
    %1891 = vmatpush1.msra.mxu0 %v1845
    %1892 = vmatprep.subr.mxu0 0.0
    %1893 = vmatpush1.msra.mxu0 %v1846
    %1894 = vmatprep.subr.mxu0 0.0
    %1895 = vmatpush1.msra.mxu0 %v1847
    %1896 = vmatprep.subr.mxu0 0.0
    %1897 = vmatpush1.msra.mxu0 %v1848
    %1898 = vmatprep.subr.mxu0 0.0
    %1899 = vmatpush1.msra.mxu0 %v1849
    %1900 = vmatprep.subr.mxu0 0.0
    %1901 = vmatpush1.msra.mxu0 %v1850
    %1902 = vmatprep.subr.mxu0 0.0
    %1903 = vmatpush1.msra.mxu0 %v1851
    %1904 = vmatprep.subr.mxu0 0.0
    %1905 = vmatpush1.msra.mxu0 %v1852
    %1906 = vmatprep.subr.mxu0 0.0
    %1907 = vmatpush1.msra.mxu0 %v1853
    %1908 = vmatprep.subr.mxu0 0.0
    %1909 = vmatpush1.msra.mxu0 %v1854
    %1910 = vmatprep.subr.mxu0 0.0
    %1911 = vmatpush1.msra.mxu0 %v1855
    %1912 = vmatprep.subr.mxu0 0.0
    %1913 = vmatpush1.msra.mxu0 %v1856
    %1914 = vmatprep.subr.mxu0 0.0
    %1915 = vmatpush1.msra.mxu0 %v1857
    %1916 = vmatprep.subr.mxu0 0.0
    %1917 = vmatpush1.msra.mxu0 %v1858
    %1918 = vmatprep.subr.mxu0 0.0
    %1919 = vmatpush1.msra.mxu0 %v1859
    %1920 = vmatprep.subr.mxu0 0.0
    %1921 = vmatpush1.msra.mxu0 %v1860
    %1922 = vmatprep.subr.mxu0 0.0
    %1923 = vmatpush1.msra.mxu0 %v1861
    %1924 = vmatprep.subr.mxu0 0.0
    %1925 = vmatpush1.msra.mxu0 %v1862
    %1926 = vmatprep.subr.mxu0 0.0
    %1927 = vmatpush1.msra.mxu0 %v1863
    %1928 = vmatprep.subr.mxu0 0.0
    %1929 = vmatpush1.msra.mxu0 %v1864
    %1930 = vmatprep.subr.mxu0 0.0
    %1931 = vmatpush1.msra.mxu0 %v1865
    %1932 = vmatprep.subr.mxu0 0.0
    %1933 = vmatpush1.msra.mxu0 %v1866
    %1934 = vmatprep.subr.mxu0 0.0
    %1935 = vmatpush1.msra.mxu0 %v1867
    %1936 = vmatprep.subr.mxu0 0.0
    %1937 = vmatpush1.msra.mxu0 %v1868
    %1938 = vmatprep.subr.mxu0 0.0
    %1939 = vmatpush1.msra.mxu0 %v1869
    %1940 = vmatprep.subr.mxu0 0.0
    %1941 = vmatpush1.msra.mxu0 %v1870
    %1942 = vmatprep.mubr.f32.mxu0 %v1838
    %1943 = vmatmul.mubr.f32.gmra.mrb[0].mxu0 %v1837
    %v1944 = vpop.f32.mrb[0].mxu0
    %v1945 = vadd.f32 %v1876, %v1944
    %v1946 = vpop.f32.mrb[0].mxu0
    %1947 = vdwg.mxu0
    %v1948 = vmax.f32 %v1945, 0.0
    %v1949 = vld [vmem:[%s17] sm:$0xff]
    %v1950 = vld [vmem:[%s17 + $0x8] sm:$0xff]
    %v1951 = vld [vmem:[%s17 + $0x10] sm:$0xff]
    %v1952 = vld [vmem:[%s17 + $0x18] sm:$0xff]
    %v1953 = vld [vmem:[%s17 + $0x20] sm:$0xff]
    %v1954 = vld [vmem:[%s17 + $0x28] sm:$0xff]
    %v1955 = vld [vmem:[%s17 + $0x30] sm:$0xff]
    %v1956 = vld [vmem:[%s17 + $0x38] sm:$0xff]
    %v1957 = vld [vmem:[%s17 + $0x40] sm:$0xff]
    %v1958 = vld [vmem:[%s17 + $0x48] sm:$0xff]
    %v1959 = vld [vmem:[%s17 + $0x50] sm:$0xff]
    %v1960 = vld [vmem:[%s17 + $0x58] sm:$0xff]
    %v1961 = vld [vmem:[%s17 + $0x60] sm:$0xff]
    %v1962 = vld [vmem:[%s17 + $0x68] sm:$0xff]
    %v1963 = vld [vmem:[%s17 + $0x70] sm:$0xff]
    %v1964 = vld [vmem:[%s17 + $0x78] sm:$0xff]
    %v1965 = vld [vmem:[#allocation14] sm:$0x1]
    %v1967 = vlaneseq
    %v1968 = vshrl.u32 %v1967, 7
    %v1969 = vsub.s32 0, %v1968
    %v1970 = vrot.slane %v1965, %v1969
    %1972 = vmatprep.subr.mxu0 0.0
    %1973 = vmatpush1.msra.mxu0 %v1949
    %1974 = vmatprep.subr.mxu0 0.0
    %1975 = vmatpush1.msra.mxu0 %v1950
    %1976 = vmatprep.subr.mxu0 0.0
    %1977 = vmatpush1.msra.mxu0 %v1951
    %1978 = vmatprep.subr.mxu0 0.0
    %1979 = vmatpush1.msra.mxu0 %v1952
    %1980 = vmatprep.subr.mxu0 0.0
    %1981 = vmatpush1.msra.mxu0 %v1953
    %1982 = vmatprep.subr.mxu0 0.0
    %1983 = vmatpush1.msra.mxu0 %v1954
    %1984 = vmatprep.subr.mxu0 0.0
    %1985 = vmatpush1.msra.mxu0 %v1955
    %1986 = vmatprep.subr.mxu0 0.0
    %1987 = vmatpush1.msra.mxu0 %v1956
    %1988 = vmatprep.subr.mxu0 0.0
    %1989 = vmatpush1.msra.mxu0 %v1957
    %1990 = vmatprep.subr.mxu0 0.0
    %1991 = vmatpush1.msra.mxu0 %v1958
    %1992 = vmatprep.subr.mxu0 0.0
    %1993 = vmatpush1.msra.mxu0 %v1959
    %1994 = vmatprep.subr.mxu0 0.0
    %1995 = vmatpush1.msra.mxu0 %v1960
    %1996 = vmatprep.subr.mxu0 0.0
    %1997 = vmatpush1.msra.mxu0 %v1961
    %1998 = vmatprep.subr.mxu0 0.0
    %1999 = vmatpush1.msra.mxu0 %v1962
    %2000 = vmatprep.subr.mxu0 0.0
    %2001 = vmatpush1.msra.mxu0 %v1963
    %2002 = vmatprep.subr.mxu0 0.0
    %2003 = vmatpush1.msra.mxu0 %v1964
    %2004 = vmatprep.subr.mxu0 0.0
    %2005 = vmatpush1.msra.mxu0 0.0
    %2006 = vmatprep.subr.mxu0 0.0
    %2007 = vmatpush1.msra.mxu0 0.0
    %2008 = vmatprep.subr.mxu0 0.0
    %2009 = vmatpush1.msra.mxu0 0.0
    %2010 = vmatprep.subr.mxu0 0.0
    %2011 = vmatpush1.msra.mxu0 0.0
    %2012 = vmatprep.subr.mxu0 0.0
    %2013 = vmatpush1.msra.mxu0 0.0
    %2014 = vmatprep.subr.mxu0 0.0
    %2015 = vmatpush1.msra.mxu0 0.0
    %2016 = vmatprep.subr.mxu0 0.0
    %2017 = vmatpush1.msra.mxu0 0.0
    %2018 = vmatprep.subr.mxu0 0.0
    %2019 = vmatpush1.msra.mxu0 0.0
    %2020 = vmatprep.subr.mxu0 0.0
    %2021 = vmatpush1.msra.mxu0 0.0
    %2022 = vmatprep.subr.mxu0 0.0
    %2023 = vmatpush1.msra.mxu0 0.0
    %2024 = vmatprep.subr.mxu0 0.0
    %2025 = vmatpush1.msra.mxu0 0.0
    %2026 = vmatprep.subr.mxu0 0.0
    %2027 = vmatpush1.msra.mxu0 0.0
    %2028 = vmatprep.subr.mxu0 0.0
    %2029 = vmatpush1.msra.mxu0 0.0
    %2030 = vmatprep.subr.mxu0 0.0
    %2031 = vmatpush1.msra.mxu0 0.0
    %2032 = vmatprep.subr.mxu0 0.0
    %2033 = vmatpush1.msra.mxu0 0.0
    %2034 = vmatprep.subr.mxu0 0.0
    %2035 = vmatpush1.msra.mxu0 0.0
    %2036 = vmatprep.mubr.f32.mxu0 0.0
    %2037 = vmatmul.mubr.f32.gmra.mrb[0].mxu0 %v1948
    %v2038 = vpop.f32.mrb[0].mxu0
    %v2039 = vadd.f32 %v1970, %v2038
    %v2040 = vpop.f32.mrb[0].mxu0
    %2041 = vdwg.mxu0
    %v2042 = vmax.f32 %v2039, 0.0
    %v2043 = vld [vmem:[%s21] sm:$0xff]
    %v2044 = vld [vmem:[%s21 + $0x8] sm:$0xff]
    %v2045 = vld [vmem:[%s21 + $0x10] sm:$0xff]
    %v2046 = vld [vmem:[%s21 + $0x18] sm:$0xff]
    %v2047 = vld [vmem:[%s21 + $0x20] sm:$0xff]
    %v2048 = vld [vmem:[%s21 + $0x28] sm:$0xff]
    %v2049 = vld [vmem:[%s21 + $0x30] sm:$0xff]
    %v2050 = vld [vmem:[%s21 + $0x38] sm:$0xff]
    %v2051 = vld [vmem:[#allocation16] sm:$0x1]
    %v2053 = vlaneseq
    %v2054 = vshrl.u32 %v2053, 7
    %v2055 = vsub.s32 0, %v2054
    %v2056 = vrot.slane %v2051, %v2055
    %vm2058 = vcmask 523264
    %v2060 = vsel %vm2058, %v2042, 0
    %2062 = vmatprep.subr.mxu0 0.0
    %2063 = vmatpush1.msra.mxu0 %v2043
    %2064 = vmatprep.subr.mxu0 0.0
    %2065 = vmatpush1.msra.mxu0 %v2044
    %2066 = vmatprep.subr.mxu0 0.0
    %2067 = vmatpush1.msra.mxu0 %v2045
    %2068 = vmatprep.subr.mxu0 0.0
    %2069 = vmatpush1.msra.mxu0 %v2046
    %2070 = vmatprep.subr.mxu0 0.0
    %2071 = vmatpush1.msra.mxu0 %v2047
    %2072 = vmatprep.subr.mxu0 0.0
    %2073 = vmatpush1.msra.mxu0 %v2048
    %2074 = vmatprep.subr.mxu0 0.0
    %2075 = vmatpush1.msra.mxu0 %v2049
    %2076 = vmatprep.subr.mxu0 0.0
    %2077 = vmatpush1.msra.mxu0 %v2050
    %2078 = vmatprep.subr.mxu0 0.0
    %2079 = vmatpush1.msra.mxu0 0.0
    %2080 = vmatprep.subr.mxu0 0.0
    %2081 = vmatpush1.msra.mxu0 0.0
    %2082 = vmatprep.subr.mxu0 0.0
    %2083 = vmatpush1.msra.mxu0 0.0
    %2084 = vmatprep.subr.mxu0 0.0
    %2085 = vmatpush1.msra.mxu0 0.0
    %2086 = vmatprep.subr.mxu0 0.0
    %2087 = vmatpush1.msra.mxu0 0.0
    %2088 = vmatprep.subr.mxu0 0.0
    %2089 = vmatpush1.msra.mxu0 0.0
    %2090 = vmatprep.subr.mxu0 0.0
    %2091 = vmatpush1.msra.mxu0 0.0
    %2092 = vmatprep.subr.mxu0 0.0
    %2093 = vmatpush1.msra.mxu0 0.0
    %2094 = vmatprep.subr.mxu0 0.0
    %2095 = vmatpush1.msra.mxu0 0.0
    %2096 = vmatprep.subr.mxu0 0.0
    %2097 = vmatpush1.msra.mxu0 0.0
    %2098 = vmatprep.subr.mxu0 0.0
    %2099 = vmatpush1.msra.mxu0 0.0
    %2100 = vmatprep.subr.mxu0 0.0
    %2101 = vmatpush1.msra.mxu0 0.0
    %2102 = vmatprep.subr.mxu0 0.0
    %2103 = vmatpush1.msra.mxu0 0.0
    %2104 = vmatprep.subr.mxu0 0.0
    %2105 = vmatpush1.msra.mxu0 0.0
    %2106 = vmatprep.subr.mxu0 0.0
    %2107 = vmatpush1.msra.mxu0 0.0
    %2108 = vmatprep.subr.mxu0 0.0
    %2109 = vmatpush1.msra.mxu0 0.0
    %2110 = vmatprep.subr.mxu0 0.0
    %2111 = vmatpush1.msra.mxu0 0.0
    %2112 = vmatprep.subr.mxu0 0.0
    %2113 = vmatpush1.msra.mxu0 0.0
    %2114 = vmatprep.subr.mxu0 0.0
    %2115 = vmatpush1.msra.mxu0 0.0
    %2116 = vmatprep.subr.mxu0 0.0
    %2117 = vmatpush1.msra.mxu0 0.0
    %2118 = vmatprep.subr.mxu0 0.0
    %2119 = vmatpush1.msra.mxu0 0.0
    %2120 = vmatprep.subr.mxu0 0.0
    %2121 = vmatpush1.msra.mxu0 0.0
    %2122 = vmatprep.subr.mxu0 0.0
    %2123 = vmatpush1.msra.mxu0 0.0
    %2124 = vmatprep.subr.mxu0 0.0
    %2125 = vmatpush1.msra.mxu0 0.0
    %2126 = vmatprep.mubr.f32.mxu0 0.0
    %2127 = vmatmul.mubr.f32.gmra.mrb[0].mxu0 %v2060
    %v2128 = vpop.f32.mrb[0].mxu0
    %v2129 = vadd.f32 %v2056, %v2128
    %v2130 = vpop.f32.mrb[0].mxu0
    %2131 = vdwg.mxu0
    %v2132 = vmax.f32 %v2129, 0.0
    %v2133 = vld [vmem:[#allocation20] sm:$0xff]
    %v2134 = vld [vmem:[#allocation20 + $0x8] sm:$0xff]
    %v2135 = vld [vmem:[#allocation20 + $0x10] sm:$0xff]
    %v2136 = vld [vmem:[#allocation20 + $0x18] sm:$0xff]
    %v2137 = vld [vmem:[#allocation22] sm:$0x1]
    %v2139 = vlaneseq
    %v2140 = vshrl.u32 %v2139, 7
    %v2141 = vsub.s32 0, %v2140
    %v2142 = vrot.slane %v2137, %v2141
    %vm2144 = vcmask 261120
    %v2146 = vsel %vm2144, %v2132, 0
    %2148 = vmatprep.subr.mxu0 0.0
    %2149 = vmatpush1.msra.mxu0 %v2133
    %2150 = vmatprep.subr.mxu0 0.0
    %2151 = vmatpush1.msra.mxu0 %v2134
    %2152 = vmatprep.subr.mxu0 0.0
    %2153 = vmatpush1.msra.mxu0 %v2135
    %2154 = vmatprep.subr.mxu0 0.0
    %2155 = vmatpush1.msra.mxu0 %v2136
    %2156 = vmatprep.subr.mxu0 0.0
    %2157 = vmatpush1.msra.mxu0 0.0
    %2158 = vmatprep.subr.mxu0 0.0
    %2159 = vmatpush1.msra.mxu0 0.0
    %2160 = vmatprep.subr.mxu0 0.0
    %2161 = vmatpush1.msra.mxu0 0.0
    %2162 = vmatprep.subr.mxu0 0.0
    %2163 = vmatpush1.msra.mxu0 0.0
    %2164 = vmatprep.subr.mxu0 0.0
    %2165 = vmatpush1.msra.mxu0 0.0
    %2166 = vmatprep.subr.mxu0 0.0
    %2167 = vmatpush1.msra.mxu0 0.0
    %2168 = vmatprep.subr.mxu0 0.0
    %2169 = vmatpush1.msra.mxu0 0.0
    %2170 = vmatprep.subr.mxu0 0.0
    %2171 = vmatpush1.msra.mxu0 0.0
    %2172 = vmatprep.subr.mxu0 0.0
    %2173 = vmatpush1.msra.mxu0 0.0
    %2174 = vmatprep.subr.mxu0 0.0
    %2175 = vmatpush1.msra.mxu0 0.0
    %2176 = vmatprep.subr.mxu0 0.0
    %2177 = vmatpush1.msra.mxu0 0.0
    %2178 = vmatprep.subr.mxu0 0.0
    %2179 = vmatpush1.msra.mxu0 0.0
    %2180 = vmatprep.subr.mxu0 0.0
    %2181 = vmatpush1.msra.mxu0 0.0
    %2182 = vmatprep.subr.mxu0 0.0
    %2183 = vmatpush1.msra.mxu0 0.0
    %2184 = vmatprep.subr.mxu0 0.0
    %2185 = vmatpush1.msra.mxu0 0.0
    %2186 = vmatprep.subr.mxu0 0.0
    %2187 = vmatpush1.msra.mxu0 0.0
    %2188 = vmatprep.subr.mxu0 0.0
    %2189 = vmatpush1.msra.mxu0 0.0
    %2190 = vmatprep.subr.mxu0 0.0
    %2191 = vmatpush1.msra.mxu0 0.0
    %2192 = vmatprep.subr.mxu0 0.0
    %2193 = vmatpush1.msra.mxu0 0.0
    %2194 = vmatprep.subr.mxu0 0.0
    %2195 = vmatpush1.msra.mxu0 0.0
    %2196 = vmatprep.subr.mxu0 0.0
    %2197 = vmatpush1.msra.mxu0 0.0
    %2198 = vmatprep.subr.mxu0 0.0
    %2199 = vmatpush1.msra.mxu0 0.0
    %2200 = vmatprep.subr.mxu0 0.0
    %2201 = vmatpush1.msra.mxu0 0.0
    %2202 = vmatprep.subr.mxu0 0.0
    %2203 = vmatpush1.msra.mxu0 0.0
    %2204 = vmatprep.subr.mxu0 0.0
    %2205 = vmatpush1.msra.mxu0 0.0
    %2206 = vmatprep.subr.mxu0 0.0
    %2207 = vmatpush1.msra.mxu0 0.0
    %2208 = vmatprep.subr.mxu0 0.0
    %2209 = vmatpush1.msra.mxu0 0.0
    %2210 = vmatprep.subr.mxu0 0.0
    %2211 = vmatpush1.msra.mxu0 0.0
    %2212 = vmatprep.mubr.f32.mxu0 0.0
    %2213 = vmatmul.mubr.f32.gmra.mrb[0].mxu0 %v2146
    %v2214 = vpop.f32.mrb[0].mxu0
    %v2215 = vadd.f32 %v2142, %v2214
    %v2216 = vpop.f32.mrb[0].mxu0
    %2217 = vdwg.mxu0
    %v2218 = vld [vmem:[%s33] sm:$0xff]
    %v2219 = vld [vmem:[%s33 + $0x8] sm:$0xff]
    %vm2220 = vcmask 15360
    %v2222 = vsel %vm2220, %v2218, 0
    %v2225 = vsel %vm2220, %v2219, 0
    %vm2227 = vcmask 1041408
    %v2229 = vsel %vm2227, %v2215, 0
    %2231 = vmatprep.subr.mxu0 0.0
    %2232 = vmatpush1.msra.mxu0 %v2229
    %2233 = vmatprep.subr.mxu0 0.0
    %2234 = vmatpush1.msra.mxu0 0.0
    %2235 = vmatprep.subr.mxu0 0.0
    %2236 = vmatpush1.msra.mxu0 0.0
    %2237 = vmatprep.subr.mxu0 0.0
    %2238 = vmatpush1.msra.mxu0 0.0
    %2239 = vmatprep.subr.mxu0 0.0
    %2240 = vmatpush1.msra.mxu0 0.0
    %2241 = vmatprep.subr.mxu0 0.0
    %2242 = vmatpush1.msra.mxu0 0.0
    %2243 = vmatprep.subr.mxu0 0.0
    %2244 = vmatpush1.msra.mxu0 0.0
    %2245 = vmatprep.subr.mxu0 0.0
    %2246 = vmatpush1.msra.mxu0 0.0
    %2247 = vmatprep.subr.mxu0 0.0
    %2248 = vmatpush1.msra.mxu0 0.0
    %2249 = vmatprep.subr.mxu0 0.0
    %2250 = vmatpush1.msra.mxu0 0.0
    %2251 = vmatprep.subr.mxu0 0.0
    %2252 = vmatpush1.msra.mxu0 0.0
    %2253 = vmatprep.subr.mxu0 0.0
    %2254 = vmatpush1.msra.mxu0 0.0
    %2255 = vmatprep.subr.mxu0 0.0
    %2256 = vmatpush1.msra.mxu0 0.0
    %2257 = vmatprep.subr.mxu0 0.0
    %2258 = vmatpush1.msra.mxu0 0.0
    %2259 = vmatprep.subr.mxu0 0.0
    %2260 = vmatpush1.msra.mxu0 0.0
    %2261 = vmatprep.subr.mxu0 0.0
    %2262 = vmatpush1.msra.mxu0 0.0
    %2263 = vmatprep.subr.mxu0 0.0
    %2264 = vmatpush1.msra.mxu0 0.0
    %2265 = vmatprep.subr.mxu0 0.0
    %2266 = vmatpush1.msra.mxu0 0.0
    %2267 = vmatprep.subr.mxu0 0.0
    %2268 = vmatpush1.msra.mxu0 0.0
    %2269 = vmatprep.subr.mxu0 0.0
    %2270 = vmatpush1.msra.mxu0 0.0
    %2271 = vmatprep.subr.mxu0 0.0
    %2272 = vmatpush1.msra.mxu0 0.0
    %2273 = vmatprep.subr.mxu0 0.0
    %2274 = vmatpush1.msra.mxu0 0.0
    %2275 = vmatprep.subr.mxu0 0.0
    %2276 = vmatpush1.msra.mxu0 0.0
    %2277 = vmatprep.subr.mxu0 0.0
    %2278 = vmatpush1.msra.mxu0 0.0
    %2279 = vmatprep.subr.mxu0 0.0
    %2280 = vmatpush1.msra.mxu0 0.0
    %2281 = vmatprep.subr.mxu0 0.0
    %2282 = vmatpush1.msra.mxu0 0.0
    %2283 = vmatprep.subr.mxu0 0.0
    %2284 = vmatpush1.msra.mxu0 0.0
    %2285 = vmatprep.subr.mxu0 0.0
    %2286 = vmatpush1.msra.mxu0 0.0
    %2287 = vmatprep.subr.mxu0 0.0
    %2288 = vmatpush1.msra.mxu0 0.0
    %2289 = vmatprep.subr.mxu0 0.0
    %2290 = vmatpush1.msra.mxu0 0.0
    %2291 = vmatprep.subr.mxu0 0.0
    %2292 = vmatpush1.msra.mxu0 0.0
    %2293 = vmatprep.subr.mxu0 0.0
    %2294 = vmatpush1.msra.mxu0 0.0
    %2295 = vmatprep.mubr.f32.mxu0 0.0
    %2296 = vmatmul.mubr.f32.gmra.mrb[0].mxu0 %v2222
    %v2297 = vpop.f32.mrb[0].mxu0
    %v2298 = vadd.f32 0.0, %v2297
    %v2299 = vpop.f32.mrb[0].mxu0
    %2300 = vmatprep.mubr.f32.mxu0 0.0
    %2301 = vmatmul.mubr.f32.gmra.mrb[0].mxu0 %v2225
    %v2302 = vpop.f32.mrb[0].mxu0
    %v2303 = vadd.f32 0.0, %v2302
    %v2304 = vpop.f32.mrb[0].mxu0
    %2305 = vdwg.mxu0
    %v2306 = vld [vmem:[#allocation2] sm:$0xff]
    %v2307 = vld [vmem:[#allocation2 + $0x8] sm:$0xff]
    %v2308 = vld [vmem:[#allocation17] sm:$0xff]
    %v2309 = vld [vmem:[#allocation19] sm:$0x1]
    %v2311 = vlaneseq
    %v2312 = vshrl.u32 %v2311, 7
    %v2313 = vsub.s32 0, %v2312
    %v2314 = vrot.slane %v2309, %v2313
    %vm2316 = vcmask 64512
    %v2318 = vsel %vm2316, %v2306, 0
    %v2321 = vsel %vm2316, %v2307, 0
    %2323 = vmatprep.subr.mxu0 0.0
    %2324 = vmatpush1.msra.mxu0 %v2308
    %2325 = vmatprep.subr.mxu0 0.0
    %2326 = vmatpush1.msra.mxu0 0.0
    %2327 = vmatprep.subr.mxu0 0.0
    %2328 = vmatpush1.msra.mxu0 0.0
    %2329 = vmatprep.subr.mxu0 0.0
    %2330 = vmatpush1.msra.mxu0 0.0
    %2331 = vmatprep.subr.mxu0 0.0
    %2332 = vmatpush1.msra.mxu0 0.0
    %2333 = vmatprep.subr.mxu0 0.0
    %2334 = vmatpush1.msra.mxu0 0.0
    %2335 = vmatprep.subr.mxu0 0.0
    %2336 = vmatpush1.msra.mxu0 0.0
    %2337 = vmatprep.subr.mxu0 0.0
    %2338 = vmatpush1.msra.mxu0 0.0
    %2339 = vmatprep.subr.mxu0 0.0
    %2340 = vmatpush1.msra.mxu0 0.0
    %2341 = vmatprep.subr.mxu0 0.0
    %2342 = vmatpush1.msra.mxu0 0.0
    %2343 = vmatprep.subr.mxu0 0.0
    %2344 = vmatpush1.msra.mxu0 0.0
    %2345 = vmatprep.subr.mxu0 0.0
    %2346 = vmatpush1.msra.mxu0 0.0
    %2347 = vmatprep.subr.mxu0 0.0
    %2348 = vmatpush1.msra.mxu0 0.0
    %2349 = vmatprep.subr.mxu0 0.0
    %2350 = vmatpush1.msra.mxu0 0.0
    %2351 = vmatprep.subr.mxu0 0.0
    %2352 = vmatpush1.msra.mxu0 0.0
    %2353 = vmatprep.subr.mxu0 0.0
    %2354 = vmatpush1.msra.mxu0 0.0
    %2355 = vmatprep.subr.mxu0 0.0
    %2356 = vmatpush1.msra.mxu0 0.0
    %2357 = vmatprep.subr.mxu0 0.0
    %2358 = vmatpush1.msra.mxu0 0.0
    %2359 = vmatprep.subr.mxu0 0.0
    %2360 = vmatpush1.msra.mxu0 0.0
    %2361 = vmatprep.subr.mxu0 0.0
    %2362 = vmatpush1.msra.mxu0 0.0
    %2363 = vmatprep.subr.mxu0 0.0
    %2364 = vmatpush1.msra.mxu0 0.0
    %2365 = vmatprep.subr.mxu0 0.0
    %2366 = vmatpush1.msra.mxu0 0.0
    %2367 = vmatprep.subr.mxu0 0.0
    %2368 = vmatpush1.msra.mxu0 0.0
    %2369 = vmatprep.subr.mxu0 0.0
    %2370 = vmatpush1.msra.mxu0 0.0
    %2371 = vmatprep.subr.mxu0 0.0
    %2372 = vmatpush1.msra.mxu0 0.0
    %2373 = vmatprep.subr.mxu0 0.0
    %2374 = vmatpush1.msra.mxu0 0.0
    %2375 = vmatprep.subr.mxu0 0.0
    %2376 = vmatpush1.msra.mxu0 0.0
    %2377 = vmatprep.subr.mxu0 0.0
    %2378 = vmatpush1.msra.mxu0 0.0
    %2379 = vmatprep.subr.mxu0 0.0
    %2380 = vmatpush1.msra.mxu0 0.0
    %2381 = vmatprep.subr.mxu0 0.0
    %2382 = vmatpush1.msra.mxu0 0.0
    %2383 = vmatprep.subr.mxu0 0.0
    %2384 = vmatpush1.msra.mxu0 0.0
    %2385 = vmatprep.subr.mxu0 0.0
    %2386 = vmatpush1.msra.mxu0 0.0
    %2387 = vmatprep.mubr.f32.mxu0 0.0
    %2388 = vmatmul.mubr.f32.gmra.mrb[0].mxu0 %v2318
    %v2389 = vpop.f32.mrb[0].mxu0
    %v2390 = vadd.f32 %v2314, %v2389
    %v2391 = vpop.f32.mrb[0].mxu0
    %2392 = vmatprep.mubr.f32.mxu0 0.0
    %2393 = vmatmul.mubr.f32.gmra.mrb[0].mxu0 %v2321
    %v2394 = vpop.f32.mrb[0].mxu0
    %v2395 = vadd.f32 %v2314, %v2394
    %v2396 = vpop.f32.mrb[0].mxu0
    %2397 = vdwg.mxu0
    %v2398 = vadd.f32 %v2390, %v2298
    %v2399 = vadd.f32 %v2395, %v2303
    %v2400 = vld [vmem:[#allocation23] sm:$0x1]
    %v2401 = vld [vmem:[#allocation25] sm:$0x1]
    %v2402 = vsel %vm2144, %v2398, 0.0
    %2403 = vadd.xlane.f32.xlu0 %v2402
    %v2404 = vpop.xlane.xlu0 %2403
    %v2405 = vsel %vm2144, %v2399, 0.0
    %2406 = vadd.xlane.f32.xlu0 %v2405
    %v2407 = vpop.xlane.xlu0 %2406
    %v2408 = vrcp.pop 32.0
    %v2409 = vmul.f32 %v2404, %v2408
    %v2410 = vmul.f32 %v2407, %v2408
    %v2411 = vsub.f32 %v2398, %v2409
    %v2412 = vsub.f32 %v2399, %v2410
    %v2413 = vmul.f32 %v2411, %v2411
    %v2414 = vmul.f32 %v2412, %v2412
    %v2415 = vsel %vm2144, %v2413, 0.0
    %2416 = vadd.xlane.f32.xlu0 %v2415
    %v2417 = vpop.xlane.xlu0 %2416
    %v2418 = vsel %vm2144, %v2414, 0.0
    %2419 = vadd.xlane.f32.xlu0 %v2418
    %v2420 = vpop.xlane.xlu0 %2419
    %v2421 = vmul.f32 %v2417, %v2408
    %v2422 = vmul.f32 %v2420, %v2408
    %v2423 = vadd.f32 %v2421, 1e-05
    %v2424 = vadd.f32 %v2422, 1e-05
    %v2425 = vrsqrt.pop %v2423
    %v2426 = vrsqrt.pop %v2424
    %v2427 = vmul.f32 %v2411, %v2425
    %v2428 = vmul.f32 %v2412, %v2426
    %v2430 = vlaneseq
    %v2431 = vshrl.u32 %v2430, 7
    %v2432 = vsub.s32 0, %v2431
    %v2433 = vrot.slane %v2400, %v2432
    %v2435 = vmul.f32 %v2427, %v2433
    %v2436 = vmul.f32 %v2428, %v2433
    %v2438 = vlaneseq
    %v2439 = vshrl.u32 %v2438, 7
    %v2440 = vsub.s32 0, %v2439
    %v2441 = vrot.slane %v2401, %v2440
    %v2443 = vadd.f32 %v2435, %v2441
    %v2444 = vadd.f32 %v2436, %v2441
    %v2445 = vld [vmem:[#allocation26] sm:$0xff]
    %v2446 = vld [vmem:[#allocation26 + $0x8] sm:$0xff]
    %v2447 = vld [vmem:[#allocation26 + $0x10] sm:$0xff]
    %v2448 = vld [vmem:[#allocation26 + $0x18] sm:$0xff]
    %v2449 = vld [vmem:[#allocation28] sm:$0x1]
    %v2451 = vlaneseq
    %v2452 = vshrl.u32 %v2451, 7
    %v2453 = vsub.s32 0, %v2452
    %v2454 = vrot.slane %v2449, %v2453
    %v2457 = vsel %vm2144, %v2443, 0
    %v2460 = vsel %vm2144, %v2444, 0
    %2462 = vmatprep.subr.mxu0 0.0
    %2463 = vmatpush1.msra.mxu0 %v2445
    %2464 = vmatprep.subr.mxu0 0.0
    %2465 = vmatpush1.msra.mxu0 %v2446
    %2466 = vmatprep.subr.mxu0 0.0
    %2467 = vmatpush1.msra.mxu0 %v2447
    %2468 = vmatprep.subr.mxu0 0.0
    %2469 = vmatpush1.msra.mxu0 %v2448
    %2470 = vmatprep.subr.mxu0 0.0
    %2471 = vmatpush1.msra.mxu0 0.0
    %2472 = vmatprep.subr.mxu0 0.0
    %2473 = vmatpush1.msra.mxu0 0.0
    %2474 = vmatprep.subr.mxu0 0.0
    %2475 = vmatpush1.msra.mxu0 0.0
    %2476 = vmatprep.subr.mxu0 0.0
    %2477 = vmatpush1.msra.mxu0 0.0
    %2478 = vmatprep.subr.mxu0 0.0
    %2479 = vmatpush1.msra.mxu0 0.0
    %2480 = vmatprep.subr.mxu0 0.0
    %2481 = vmatpush1.msra.mxu0 0.0
    %2482 = vmatprep.subr.mxu0 0.0
    %2483 = vmatpush1.msra.mxu0 0.0
    %2484 = vmatprep.subr.mxu0 0.0
    %2485 = vmatpush1.msra.mxu0 0.0
    %2486 = vmatprep.subr.mxu0 0.0
    %2487 = vmatpush1.msra.mxu0 0.0
    %2488 = vmatprep.subr.mxu0 0.0
    %2489 = vmatpush1.msra.mxu0 0.0
    %2490 = vmatprep.subr.mxu0 0.0
    %2491 = vmatpush1.msra.mxu0 0.0
    %2492 = vmatprep.subr.mxu0 0.0
    %2493 = vmatpush1.msra.mxu0 0.0
    %2494 = vmatprep.subr.mxu0 0.0
    %2495 = vmatpush1.msra.mxu0 0.0
    %2496 = vmatprep.subr.mxu0 0.0
    %2497 = vmatpush1.msra.mxu0 0.0
    %2498 = vmatprep.subr.mxu0 0.0
    %2499 = vmatpush1.msra.mxu0 0.0
    %2500 = vmatprep.subr.mxu0 0.0
    %2501 = vmatpush1.msra.mxu0 0.0
    %2502 = vmatprep.subr.mxu0 0.0
    %2503 = vmatpush1.msra.mxu0 0.0
    %2504 = vmatprep.subr.mxu0 0.0
    %2505 = vmatpush1.msra.mxu0 0.0
    %2506 = vmatprep.subr.mxu0 0.0
    %2507 = vmatpush1.msra.mxu0 0.0
    %2508 = vmatprep.subr.mxu0 0.0
    %2509 = vmatpush1.msra.mxu0 0.0
    %2510 = vmatprep.subr.mxu0 0.0
    %2511 = vmatpush1.msra.mxu0 0.0
    %2512 = vmatprep.subr.mxu0 0.0
    %2513 = vmatpush1.msra.mxu0 0.0
    %2514 = vmatprep.subr.mxu0 0.0
    %2515 = vmatpush1.msra.mxu0 0.0
    %2516 = vmatprep.subr.mxu0 0.0
    %2517 = vmatpush1.msra.mxu0 0.0
    %2518 = vmatprep.subr.mxu0 0.0
    %2519 = vmatpush1.msra.mxu0 0.0
    %2520 = vmatprep.subr.mxu0 0.0
    %2521 = vmatpush1.msra.mxu0 0.0
    %2522 = vmatprep.subr.mxu0 0.0
    %2523 = vmatpush1.msra.mxu0 0.0
    %2524 = vmatprep.subr.mxu0 0.0
    %2525 = vmatpush1.msra.mxu0 0.0
    %2526 = vmatprep.mubr.f32.mxu0 0.0
    %2527 = vmatmul.mubr.f32.gmra.mrb[0].mxu0 %v2457
    %v2528 = vpop.f32.mrb[0].mxu0
    %v2529 = vadd.f32 %v2454, %v2528
    %v2530 = vpop.f32.mrb[0].mxu0
    %2531 = vmatprep.mubr.f32.mxu0 0.0
    %2532 = vmatmul.mubr.f32.gmra.mrb[0].mxu0 %v2460
    %v2533 = vpop.f32.mrb[0].mxu0
    %v2534 = vadd.f32 %v2454, %v2533
    %v2535 = vpop.f32.mrb[0].mxu0
    %2536 = vdwg.mxu0
    %v2537 = vmax.f32 %v2529, 0.0
    %v2538 = vmax.f32 %v2534, 0.0
    %v2539 = vld [vmem:[%s43] sm:$0xff]
    %v2540 = vld [vmem:[%s43 + $0x8] sm:$0xff]
    %v2541 = vld [vmem:[%s43 + $0x10] sm:$0xff]
    %v2542 = vld [vmem:[%s43 + $0x18] sm:$0xff]
    %v2543 = vld [vmem:[%s43 + $0x20] sm:$0xff]
    %v2544 = vld [vmem:[%s43 + $0x28] sm:$0xff]
    %v2545 = vld [vmem:[%s43 + $0x30] sm:$0xff]
    %v2546 = vld [vmem:[%s43 + $0x38] sm:$0xff]
    %v2547 = vld [vmem:[%s43 + $0x40] sm:$0xff]
    %v2548 = vld [vmem:[%s43 + $0x48] sm:$0xff]
    %v2549 = vld [vmem:[%s43 + $0x50] sm:$0xff]
    %v2550 = vld [vmem:[%s43 + $0x58] sm:$0xff]
    %v2551 = vld [vmem:[%s43 + $0x60] sm:$0xff]
    %v2552 = vld [vmem:[%s43 + $0x68] sm:$0xff]
    %v2553 = vld [vmem:[%s43 + $0x70] sm:$0xff]
    %v2554 = vld [vmem:[%s43 + $0x78] sm:$0xff]
    %2555 = vmatprep.subr.mxu0 0.0
    %2556 = vmatpush1.msra.mxu0 %v2539
    %2557 = vmatprep.subr.mxu0 0.0
    %2558 = vmatpush1.msra.mxu0 %v2540
    %2559 = vmatprep.subr.mxu0 0.0
    %2560 = vmatpush1.msra.mxu0 %v2541
    %2561 = vmatprep.subr.mxu0 0.0
    %2562 = vmatpush1.msra.mxu0 %v2542
    %2563 = vmatprep.subr.mxu0 0.0
    %2564 = vmatpush1.msra.mxu0 %v2543
    %2565 = vmatprep.subr.mxu0 0.0
    %2566 = vmatpush1.msra.mxu0 %v2544
    %2567 = vmatprep.subr.mxu0 0.0
    %2568 = vmatpush1.msra.mxu0 %v2545
    %2569 = vmatprep.subr.mxu0 0.0
    %2570 = vmatpush1.msra.mxu0 %v2546
    %2571 = vmatprep.subr.mxu0 0.0
    %2572 = vmatpush1.msra.mxu0 %v2547
    %2573 = vmatprep.subr.mxu0 0.0
    %2574 = vmatpush1.msra.mxu0 %v2548
    %2575 = vmatprep.subr.mxu0 0.0
    %2576 = vmatpush1.msra.mxu0 %v2549
    %2577 = vmatprep.subr.mxu0 0.0
    %2578 = vmatpush1.msra.mxu0 %v2550
    %2579 = vmatprep.subr.mxu0 0.0
    %2580 = vmatpush1.msra.mxu0 %v2551
    %2581 = vmatprep.subr.mxu0 0.0
    %2582 = vmatpush1.msra.mxu0 %v2552
    %2583 = vmatprep.subr.mxu0 0.0
    %2584 = vmatpush1.msra.mxu0 %v2553
    %2585 = vmatprep.subr.mxu0 0.0
    %2586 = vmatpush1.msra.mxu0 %v2554
    %2587 = vmatprep.subr.mxu0 0.0
    %2588 = vmatpush1.msra.mxu0 0.0
    %2589 = vmatprep.subr.mxu0 0.0
    %2590 = vmatpush1.msra.mxu0 0.0
    %2591 = vmatprep.subr.mxu0 0.0
    %2592 = vmatpush1.msra.mxu0 0.0
    %2593 = vmatprep.subr.mxu0 0.0
    %2594 = vmatpush1.msra.mxu0 0.0
    %2595 = vmatprep.subr.mxu0 0.0
    %2596 = vmatpush1.msra.mxu0 0.0
    %2597 = vmatprep.subr.mxu0 0.0
    %2598 = vmatpush1.msra.mxu0 0.0
    %2599 = vmatprep.subr.mxu0 0.0
    %2600 = vmatpush1.msra.mxu0 0.0
    %2601 = vmatprep.subr.mxu0 0.0
    %2602 = vmatpush1.msra.mxu0 0.0
    %2603 = vmatprep.subr.mxu0 0.0
    %2604 = vmatpush1.msra.mxu0 0.0
    %2605 = vmatprep.subr.mxu0 0.0
    %2606 = vmatpush1.msra.mxu0 0.0
    %2607 = vmatprep.subr.mxu0 0.0
    %2608 = vmatpush1.msra.mxu0 0.0
    %2609 = vmatprep.subr.mxu0 0.0
    %2610 = vmatpush1.msra.mxu0 0.0
    %2611 = vmatprep.subr.mxu0 0.0
    %2612 = vmatpush1.msra.mxu0 0.0
    %2613 = vmatprep.subr.mxu0 0.0
    %2614 = vmatpush1.msra.mxu0 0.0
    %2615 = vmatprep.subr.mxu0 0.0
    %2616 = vmatpush1.msra.mxu0 0.0
    %2617 = vmatprep.subr.mxu0 0.0
    %2618 = vmatpush1.msra.mxu0 0.0
    %2619 = vmatprep.mubr.f32.mxu0 0.0
    %2620 = vmatmul.mubr.f32.gmra.mrb[0].mxu0 %v2537
    %v2621 = vpop.f32.mrb[0].mxu0
    %v2622 = vadd.f32 0.0, %v2621
    %v2623 = vpop.f32.mrb[0].mxu0
    %2624 = vmatprep.mubr.f32.mxu0 0.0
    %2625 = vmatmul.mubr.f32.gmra.mrb[0].mxu0 %v2538
    %v2626 = vpop.f32.mrb[0].mxu0
    %v2627 = vadd.f32 0.0, %v2626
    %v2628 = vpop.f32.mrb[0].mxu0
    %2629 = vdwg.mxu0
    %v2630 = vadd.f32 %v2398, %v2622
    %v2631 = vadd.f32 %v2399, %v2627
    %v2632 = vld [vmem:[#allocation29] sm:$0x1]
    %v2634 = vlaneseq
    %v2635 = vshrl.u32 %v2634, 7
    %v2636 = vsub.s32 0, %v2635
    %v2637 = vrot.slane %v2632, %v2636
    %v2639 = vadd.f32 %v2630, %v2637
    %v2640 = vadd.f32 %v2631, %v2637
    %2643 = vrot.lane.b32.xlu0 %v2298, 96
    %v2644 = vpop.permute.xlu0 %2643
    %2645 = vrot.lane.b32.xlu0 %v2303, 96
    %v2646 = vpop.permute.xlu0 %2645
    %v2649 = vadd.f32 %v2639, %v2644
    %v2650 = vadd.f32 %v2640, %v2646
    %s2651 = scalar_lea.vmem [#allocation23], 1
    %v2652 = vld [vmem:[%s2651] sm:$0x1]
    %s2653 = scalar_lea.vmem [#allocation25], 1
    %v2654 = vld [vmem:[%s2653] sm:$0x1]
    %v2655 = vsel %vm2144, %v2649, 0.0
    %2656 = vadd.xlane.f32.xlu0 %v2655
    %v2657 = vpop.xlane.xlu0 %2656
    %v2658 = vsel %vm2144, %v2650, 0.0
    %2659 = vadd.xlane.f32.xlu0 %v2658
    %v2660 = vpop.xlane.xlu0 %2659
    %v2661 = vmul.f32 %v2657, %v2408
    %v2662 = vmul.f32 %v2660, %v2408
    %v2663 = vsub.f32 %v2649, %v2661
    %v2664 = vsub.f32 %v2650, %v2662
    %v2665 = vmul.f32 %v2663, %v2663
    %v2666 = vmul.f32 %v2664, %v2664
    %v2667 = vsel %vm2144, %v2665, 0.0
    %2668 = vadd.xlane.f32.xlu0 %v2667
    %v2669 = vpop.xlane.xlu0 %2668
    %v2670 = vsel %vm2144, %v2666, 0.0
    %2671 = vadd.xlane.f32.xlu0 %v2670
    %v2672 = vpop.xlane.xlu0 %2671
    %v2673 = vmul.f32 %v2669, %v2408
    %v2674 = vmul.f32 %v2672, %v2408
    %v2675 = vadd.f32 %v2673, 1e-05
    %v2676 = vadd.f32 %v2674, 1e-05
    %v2677 = vrsqrt.pop %v2675
    %v2678 = vrsqrt.pop %v2676
    %v2679 = vmul.f32 %v2663, %v2677
    %v2680 = vmul.f32 %v2664, %v2678
    %v2682 = vlaneseq
    %v2683 = vshrl.u32 %v2682, 7
    %v2684 = vsub.s32 0, %v2683
    %v2685 = vrot.slane %v2652, %v2684
    %v2687 = vmul.f32 %v2679, %v2685
    %v2688 = vmul.f32 %v2680, %v2685
    %v2690 = vlaneseq
    %v2691 = vshrl.u32 %v2690, 7
    %v2692 = vsub.s32 0, %v2691
    %v2693 = vrot.slane %v2654, %v2692
    %v2695 = vadd.f32 %v2687, %v2693
    %v2696 = vadd.f32 %v2688, %v2693
    %s2697 = scalar_lea.vmem [#allocation26], 32
    %v2698 = vld [vmem:[%s2697] sm:$0xff]
    %v2699 = vld [vmem:[%s2697 + $0x8] sm:$0xff]
    %v2700 = vld [vmem:[%s2697 + $0x10] sm:$0xff]
    %v2701 = vld [vmem:[%s2697 + $0x18] sm:$0xff]
    %s2702 = scalar_lea.vmem [#allocation28], 1
    %v2703 = vld [vmem:[%s2702] sm:$0x1]
    %v2705 = vlaneseq
    %v2706 = vshrl.u32 %v2705, 7
    %v2707 = vsub.s32 0, %v2706
    %v2708 = vrot.slane %v2703, %v2707
    %v2711 = vsel %vm2144, %v2695, 0
    %v2714 = vsel %vm2144, %v2696, 0
    %2716 = vmatprep.subr.mxu0 0.0
    %2717 = vmatpush1.msra.mxu0 %v2698
    %2718 = vmatprep.subr.mxu0 0.0
    %2719 = vmatpush1.msra.mxu0 %v2699
    %2720 = vmatprep.subr.mxu0 0.0
    %2721 = vmatpush1.msra.mxu0 %v2700
    %2722 = vmatprep.subr.mxu0 0.0
    %2723 = vmatpush1.msra.mxu0 %v2701
    %2724 = vmatprep.subr.mxu0 0.0
    %2725 = vmatpush1.msra.mxu0 0.0
    %2726 = vmatprep.subr.mxu0 0.0
    %2727 = vmatpush1.msra.mxu0 0.0
    %2728 = vmatprep.subr.mxu0 0.0
    %2729 = vmatpush1.msra.mxu0 0.0
    %2730 = vmatprep.subr.mxu0 0.0
    %2731 = vmatpush1.msra.mxu0 0.0
    %2732 = vmatprep.subr.mxu0 0.0
    %2733 = vmatpush1.msra.mxu0 0.0
    %2734 = vmatprep.subr.mxu0 0.0
    %2735 = vmatpush1.msra.mxu0 0.0
    %2736 = vmatprep.subr.mxu0 0.0
    %2737 = vmatpush1.msra.mxu0 0.0
    %2738 = vmatprep.subr.mxu0 0.0
    %2739 = vmatpush1.msra.mxu0 0.0
    %2740 = vmatprep.subr.mxu0 0.0
    %2741 = vmatpush1.msra.mxu0 0.0
    %2742 = vmatprep.subr.mxu0 0.0
    %2743 = vmatpush1.msra.mxu0 0.0
    %2744 = vmatprep.subr.mxu0 0.0
    %2745 = vmatpush1.msra.mxu0 0.0
    %2746 = vmatprep.subr.mxu0 0.0
    %2747 = vmatpush1.msra.mxu0 0.0
    %2748 = vmatprep.subr.mxu0 0.0
    %2749 = vmatpush1.msra.mxu0 0.0
    %2750 = vmatprep.subr.mxu0 0.0
    %2751 = vmatpush1.msra.mxu0 0.0
    %2752 = vmatprep.subr.mxu0 0.0
    %2753 = vmatpush1.msra.mxu0 0.0
    %2754 = vmatprep.subr.mxu0 0.0
    %2755 = vmatpush1.msra.mxu0 0.0
    %2756 = vmatprep.subr.mxu0 0.0
    %2757 = vmatpush1.msra.mxu0 0.0
    %2758 = vmatprep.subr.mxu0 0.0
    %2759 = vmatpush1.msra.mxu0 0.0
    %2760 = vmatprep.subr.mxu0 0.0
    %2761 = vmatpush1.msra.mxu0 0.0
    %2762 = vmatprep.subr.mxu0 0.0
    %2763 = vmatpush1.msra.mxu0 0.0
    %2764 = vmatprep.subr.mxu0 0.0
    %2765 = vmatpush1.msra.mxu0 0.0
    %2766 = vmatprep.subr.mxu0 0.0
    %2767 = vmatpush1.msra.mxu0 0.0
    %2768 = vmatprep.subr.mxu0 0.0
    %2769 = vmatpush1.msra.mxu0 0.0
    %2770 = vmatprep.subr.mxu0 0.0
    %2771 = vmatpush1.msra.mxu0 0.0
    %2772 = vmatprep.subr.mxu0 0.0
    %2773 = vmatpush1.msra.mxu0 0.0
    %2774 = vmatprep.subr.mxu0 0.0
    %2775 = vmatpush1.msra.mxu0 0.0
    %2776 = vmatprep.subr.mxu0 0.0
    %2777 = vmatpush1.msra.mxu0 0.0
    %2778 = vmatprep.subr.mxu0 0.0
    %2779 = vmatpush1.msra.mxu0 0.0
    %2780 = vmatprep.mubr.f32.mxu0 0.0
    %2781 = vmatmul.mubr.f32.gmra.mrb[0].mxu0 %v2711
    %v2782 = vpop.f32.mrb[0].mxu0
    %v2783 = vadd.f32 %v2708, %v2782
    %v2784 = vpop.f32.mrb[0].mxu0
    %2785 = vmatprep.mubr.f32.mxu0 0.0
    %2786 = vmatmul.mubr.f32.gmra.mrb[0].mxu0 %v2714
    %v2787 = vpop.f32.mrb[0].mxu0
    %v2788 = vadd.f32 %v2708, %v2787
    %v2789 = vpop.f32.mrb[0].mxu0
    %2790 = vdwg.mxu0
    %v2791 = vmax.f32 %v2783, 0.0
    %v2792 = vmax.f32 %v2788, 0.0
    %s2793 = scalar_lea.vmem %s43, 128
    %v2794 = vld [vmem:[%s2793] sm:$0xff]
    %v2795 = vld [vmem:[%s2793 + $0x8] sm:$0xff]
    %v2796 = vld [vmem:[%s2793 + $0x10] sm:$0xff]
    %v2797 = vld [vmem:[%s2793 + $0x18] sm:$0xff]
    %v2798 = vld [vmem:[%s2793 + $0x20] sm:$0xff]
    %v2799 = vld [vmem:[%s2793 + $0x28] sm:$0xff]
    %v2800 = vld [vmem:[%s2793 + $0x30] sm:$0xff]
    %v2801 = vld [vmem:[%s2793 + $0x38] sm:$0xff]
    %v2802 = vld [vmem:[%s2793 + $0x40] sm:$0xff]
    %v2803 = vld [vmem:[%s2793 + $0x48] sm:$0xff]
    %v2804 = vld [vmem:[%s2793 + $0x50] sm:$0xff]
    %v2805 = vld [vmem:[%s2793 + $0x58] sm:$0xff]
    %v2806 = vld [vmem:[%s2793 + $0x60] sm:$0xff]
    %v2807 = vld [vmem:[%s2793 + $0x68] sm:$0xff]
    %v2808 = vld [vmem:[%s2793 + $0x70] sm:$0xff]
    %v2809 = vld [vmem:[%s2793 + $0x78] sm:$0xff]
    %2810 = vmatprep.subr.mxu0 0.0
    %2811 = vmatpush1.msra.mxu0 %v2794
    %2812 = vmatprep.subr.mxu0 0.0
    %2813 = vmatpush1.msra.mxu0 %v2795
    %2814 = vmatprep.subr.mxu0 0.0
    %2815 = vmatpush1.msra.mxu0 %v2796
    %2816 = vmatprep.subr.mxu0 0.0
    %2817 = vmatpush1.msra.mxu0 %v2797
    %2818 = vmatprep.subr.mxu0 0.0
    %2819 = vmatpush1.msra.mxu0 %v2798
    %2820 = vmatprep.subr.mxu0 0.0
    %2821 = vmatpush1.msra.mxu0 %v2799
    %2822 = vmatprep.subr.mxu0 0.0
    %2823 = vmatpush1.msra.mxu0 %v2800
    %2824 = vmatprep.subr.mxu0 0.0
    %2825 = vmatpush1.msra.mxu0 %v2801
    %2826 = vmatprep.subr.mxu0 0.0
    %2827 = vmatpush1.msra.mxu0 %v2802
    %2828 = vmatprep.subr.mxu0 0.0
    %2829 = vmatpush1.msra.mxu0 %v2803
    %2830 = vmatprep.subr.mxu0 0.0
    %2831 = vmatpush1.msra.mxu0 %v2804
    %2832 = vmatprep.subr.mxu0 0.0
    %2833 = vmatpush1.msra.mxu0 %v2805
    %2834 = vmatprep.subr.mxu0 0.0
    %2835 = vmatpush1.msra.mxu0 %v2806
    %2836 = vmatprep.subr.mxu0 0.0
    %2837 = vmatpush1.msra.mxu0 %v2807
    %2838 = vmatprep.subr.mxu0 0.0
    %2839 = vmatpush1.msra.mxu0 %v2808
    %2840 = vmatprep.subr.mxu0 0.0
    %2841 = vmatpush1.msra.mxu0 %v2809
    %2842 = vmatprep.subr.mxu0 0.0
    %2843 = vmatpush1.msra.mxu0 0.0
    %2844 = vmatprep.subr.mxu0 0.0
    %2845 = vmatpush1.msra.mxu0 0.0
    %2846 = vmatprep.subr.mxu0 0.0
    %2847 = vmatpush1.msra.mxu0 0.0
    %2848 = vmatprep.subr.mxu0 0.0
    %2849 = vmatpush1.msra.mxu0 0.0
    %2850 = vmatprep.subr.mxu0 0.0
    %2851 = vmatpush1.msra.mxu0 0.0
    %2852 = vmatprep.subr.mxu0 0.0
    %2853 = vmatpush1.msra.mxu0 0.0
    %2854 = vmatprep.subr.mxu0 0.0
    %2855 = vmatpush1.msra.mxu0 0.0
    %2856 = vmatprep.subr.mxu0 0.0
    %2857 = vmatpush1.msra.mxu0 0.0
    %2858 = vmatprep.subr.mxu0 0.0
    %2859 = vmatpush1.msra.mxu0 0.0
    %2860 = vmatprep.subr.mxu0 0.0
    %2861 = vmatpush1.msra.mxu0 0.0
    %2862 = vmatprep.subr.mxu0 0.0
    %2863 = vmatpush1.msra.mxu0 0.0
    %2864 = vmatprep.subr.mxu0 0.0
    %2865 = vmatpush1.msra.mxu0 0.0
    %2866 = vmatprep.subr.mxu0 0.0
    %2867 = vmatpush1.msra.mxu0 0.0
    %2868 = vmatprep.subr.mxu0 0.0
    %2869 = vmatpush1.msra.mxu0 0.0
    %2870 = vmatprep.subr.mxu0 0.0
    %2871 = vmatpush1.msra.mxu0 0.0
    %2872 = vmatprep.subr.mxu0 0.0
    %2873 = vmatpush1.msra.mxu0 0.0
    %2874 = vmatprep.mubr.f32.mxu0 0.0
    %2875 = vmatmul.mubr.f32.gmra.mrb[0].mxu0 %v2791
    %v2876 = vpop.f32.mrb[0].mxu0
    %v2877 = vadd.f32 0.0, %v2876
    %v2878 = vpop.f32.mrb[0].mxu0
    %2879 = vmatprep.mubr.f32.mxu0 0.0
    %2880 = vmatmul.mubr.f32.gmra.mrb[0].mxu0 %v2792
    %v2881 = vpop.f32.mrb[0].mxu0
    %v2882 = vadd.f32 0.0, %v2881
    %v2883 = vpop.f32.mrb[0].mxu0
    %2884 = vdwg.mxu0
    %v2885 = vadd.f32 %v2649, %v2877
    %v2886 = vadd.f32 %v2650, %v2882
    %s2887 = scalar_lea.vmem [#allocation29], 1
    %v2888 = vld [vmem:[%s2887] sm:$0x1]
    %v2890 = vlaneseq
    %v2891 = vshrl.u32 %v2890, 7
    %v2892 = vsub.s32 0, %v2891
    %v2893 = vrot.slane %v2888, %v2892
    %v2895 = vadd.f32 %v2885, %v2893
    %v2896 = vadd.f32 %v2886, %v2893
    %2897 = vrot.lane.b32.xlu0 %v2298, 64
    %v2898 = vpop.permute.xlu0 %2897
    %2899 = vrot.lane.b32.xlu0 %v2303, 64
    %v2900 = vpop.permute.xlu0 %2899
    %v2903 = vadd.f32 %v2895, %v2898
    %v2904 = vadd.f32 %v2896, %v2900
    %s2905 = scalar_lea.vmem [#allocation23], 2
    %v2906 = vld [vmem:[%s2905] sm:$0x1]
    %s2907 = scalar_lea.vmem [#allocation25], 2
    %v2908 = vld [vmem:[%s2907] sm:$0x1]
    %v2909 = vsel %vm2144, %v2903, 0.0
    %2910 = vadd.xlane.f32.xlu0 %v2909
    %v2911 = vpop.xlane.xlu0 %2910
    %v2912 = vsel %vm2144, %v2904, 0.0
    %2913 = vadd.xlane.f32.xlu0 %v2912
    %v2914 = vpop.xlane.xlu0 %2913
    %v2915 = vmul.f32 %v2911, %v2408
    %v2916 = vmul.f32 %v2914, %v2408
    %v2917 = vsub.f32 %v2903, %v2915
    %v2918 = vsub.f32 %v2904, %v2916
    %v2919 = vmul.f32 %v2917, %v2917
    %v2920 = vmul.f32 %v2918, %v2918
    %v2921 = vsel %vm2144, %v2919, 0.0
    %2922 = vadd.xlane.f32.xlu0 %v2921
    %v2923 = vpop.xlane.xlu0 %2922
    %v2924 = vsel %vm2144, %v2920, 0.0
    %2925 = vadd.xlane.f32.xlu0 %v2924
    %v2926 = vpop.xlane.xlu0 %2925
    %v2927 = vmul.f32 %v2923, %v2408
    %v2928 = vmul.f32 %v2926, %v2408
    %v2929 = vadd.f32 %v2927, 1e-05
    %v2930 = vadd.f32 %v2928, 1e-05
    %v2931 = vrsqrt.pop %v2929
    %v2932 = vrsqrt.pop %v2930
    %v2933 = vmul.f32 %v2917, %v2931
    %v2934 = vmul.f32 %v2918, %v2932
    %v2936 = vlaneseq
    %v2937 = vshrl.u32 %v2936, 7
    %v2938 = vsub.s32 0, %v2937
    %v2939 = vrot.slane %v2906, %v2938
    %v2941 = vmul.f32 %v2933, %v2939
    %v2942 = vmul.f32 %v2934, %v2939
    %v2944 = vlaneseq
    %v2945 = vshrl.u32 %v2944, 7
    %v2946 = vsub.s32 0, %v2945
    %v2947 = vrot.slane %v2908, %v2946
    %v2949 = vadd.f32 %v2941, %v2947
    %v2950 = vadd.f32 %v2942, %v2947
    %s2951 = scalar_lea.vmem [#allocation26], 64
    %v2952 = vld [vmem:[%s2951] sm:$0xff]
    %v2953 = vld [vmem:[%s2951 + $0x8] sm:$0xff]
    %v2954 = vld [vmem:[%s2951 + $0x10] sm:$0xff]
    %v2955 = vld [vmem:[%s2951 + $0x18] sm:$0xff]
    %s2956 = scalar_lea.vmem [#allocation28], 2
    %v2957 = vld [vmem:[%s2956] sm:$0x1]
    %v2959 = vlaneseq
    %v2960 = vshrl.u32 %v2959, 7
    %v2961 = vsub.s32 0, %v2960
    %v2962 = vrot.slane %v2957, %v2961
    %v2965 = vsel %vm2144, %v2949, 0
    %v2968 = vsel %vm2144, %v2950, 0
    %2970 = vmatprep.subr.mxu0 0.0
    %2971 = vmatpush1.msra.mxu0 %v2952
    %2972 = vmatprep.subr.mxu0 0.0
    %2973 = vmatpush1.msra.mxu0 %v2953
    %2974 = vmatprep.subr.mxu0 0.0
    %2975 = vmatpush1.msra.mxu0 %v2954
    %2976 = vmatprep.subr.mxu0 0.0
    %2977 = vmatpush1.msra.mxu0 %v2955
    %2978 = vmatprep.subr.mxu0 0.0
    %2979 = vmatpush1.msra.mxu0 0.0
    %2980 = vmatprep.subr.mxu0 0.0
    %2981 = vmatpush1.msra.mxu0 0.0
    %2982 = vmatprep.subr.mxu0 0.0
    %2983 = vmatpush1.msra.mxu0 0.0
    %2984 = vmatprep.subr.mxu0 0.0
    %2985 = vmatpush1.msra.mxu0 0.0
    %2986 = vmatprep.subr.mxu0 0.0
    %2987 = vmatpush1.msra.mxu0 0.0
    %2988 = vmatprep.subr.mxu0 0.0
    %2989 = vmatpush1.msra.mxu0 0.0
    %2990 = vmatprep.subr.mxu0 0.0
    %2991 = vmatpush1.msra.mxu0 0.0
    %2992 = vmatprep.subr.mxu0 0.0
    %2993 = vmatpush1.msra.mxu0 0.0
    %2994 = vmatprep.subr.mxu0 0.0
    %2995 = vmatpush1.msra.mxu0 0.0
    %2996 = vmatprep.subr.mxu0 0.0
    %2997 = vmatpush1.msra.mxu0 0.0
    %2998 = vmatprep.subr.mxu0 0.0
    %2999 = vmatpush1.msra.mxu0 0.0
    %3000 = vmatprep.subr.mxu0 0.0
    %3001 = vmatpush1.msra.mxu0 0.0
    %3002 = vmatprep.subr.mxu0 0.0
    %3003 = vmatpush1.msra.mxu0 0.0
    %3004 = vmatprep.subr.mxu0 0.0
    %3005 = vmatpush1.msra.mxu0 0.0
    %3006 = vmatprep.subr.mxu0 0.0
    %3007 = vmatpush1.msra.mxu0 0.0
    %3008 = vmatprep.subr.mxu0 0.0
    %3009 = vmatpush1.msra.mxu0 0.0
    %3010 = vmatprep.subr.mxu0 0.0
    %3011 = vmatpush1.msra.mxu0 0.0
    %3012 = vmatprep.subr.mxu0 0.0
    %3013 = vmatpush1.msra.mxu0 0.0
    %3014 = vmatprep.subr.mxu0 0.0
    %3015 = vmatpush1.msra.mxu0 0.0
    %3016 = vmatprep.subr.mxu0 0.0
    %3017 = vmatpush1.msra.mxu0 0.0
    %3018 = vmatprep.subr.mxu0 0.0
    %3019 = vmatpush1.msra.mxu0 0.0
    %3020 = vmatprep.subr.mxu0 0.0
    %3021 = vmatpush1.msra.mxu0 0.0
    %3022 = vmatprep.subr.mxu0 0.0
    %3023 = vmatpush1.msra.mxu0 0.0
    %3024 = vmatprep.subr.mxu0 0.0
    %3025 = vmatpush1.msra.mxu0 0.0
    %3026 = vmatprep.subr.mxu0 0.0
    %3027 = vmatpush1.msra.mxu0 0.0
    %3028 = vmatprep.subr.mxu0 0.0
    %3029 = vmatpush1.msra.mxu0 0.0
    %3030 = vmatprep.subr.mxu0 0.0
    %3031 = vmatpush1.msra.mxu0 0.0
    %3032 = vmatprep.subr.mxu0 0.0
    %3033 = vmatpush1.msra.mxu0 0.0
    %3034 = vmatprep.mubr.f32.mxu0 0.0
    %3035 = vmatmul.mubr.f32.gmra.mrb[0].mxu0 %v2965
    %v3036 = vpop.f32.mrb[0].mxu0
    %v3037 = vadd.f32 %v2962, %v3036
    %v3038 = vpop.f32.mrb[0].mxu0
    %3039 = vmatprep.mubr.f32.mxu0 0.0
    %3040 = vmatmul.mubr.f32.gmra.mrb[0].mxu0 %v2968
    %v3041 = vpop.f32.mrb[0].mxu0
    %v3042 = vadd.f32 %v2962, %v3041
    %v3043 = vpop.f32.mrb[0].mxu0
    %3044 = vdwg.mxu0
    %v3045 = vmax.f32 %v3037, 0.0
    %v3046 = vmax.f32 %v3042, 0.0
    %s3047 = scalar_lea.vmem %s43, 256
    %v3048 = vld [vmem:[%s3047] sm:$0xff]
    %v3049 = vld [vmem:[%s3047 + $0x8] sm:$0xff]
    %v3050 = vld [vmem:[%s3047 + $0x10] sm:$0xff]
    %v3051 = vld [vmem:[%s3047 + $0x18] sm:$0xff]
    %v3052 = vld [vmem:[%s3047 + $0x20] sm:$0xff]
    %v3053 = vld [vmem:[%s3047 + $0x28] sm:$0xff]
    %v3054 = vld [vmem:[%s3047 + $0x30] sm:$0xff]
    %v3055 = vld [vmem:[%s3047 + $0x38] sm:$0xff]
    %v3056 = vld [vmem:[%s3047 + $0x40] sm:$0xff]
    %v3057 = vld [vmem:[%s3047 + $0x48] sm:$0xff]
    %v3058 = vld [vmem:[%s3047 + $0x50] sm:$0xff]
    %v3059 = vld [vmem:[%s3047 + $0x58] sm:$0xff]
    %v3060 = vld [vmem:[%s3047 + $0x60] sm:$0xff]
    %v3061 = vld [vmem:[%s3047 + $0x68] sm:$0xff]
    %v3062 = vld [vmem:[%s3047 + $0x70] sm:$0xff]
    %v3063 = vld [vmem:[%s3047 + $0x78] sm:$0xff]
    %3064 = vmatprep.subr.mxu0 0.0
    %3065 = vmatpush1.msra.mxu0 %v3048
    %3066 = vmatprep.subr.mxu0 0.0
    %3067 = vmatpush1.msra.mxu0 %v3049
    %3068 = vmatprep.subr.mxu0 0.0
    %3069 = vmatpush1.msra.mxu0 %v3050
    %3070 = vmatprep.subr.mxu0 0.0
    %3071 = vmatpush1.msra.mxu0 %v3051
    %3072 = vmatprep.subr.mxu0 0.0
    %3073 = vmatpush1.msra.mxu0 %v3052
    %3074 = vmatprep.subr.mxu0 0.0
    %3075 = vmatpush1.msra.mxu0 %v3053
    %3076 = vmatprep.subr.mxu0 0.0
    %3077 = vmatpush1.msra.mxu0 %v3054
    %3078 = vmatprep.subr.mxu0 0.0
    %3079 = vmatpush1.msra.mxu0 %v3055
    %3080 = vmatprep.subr.mxu0 0.0
    %3081 = vmatpush1.msra.mxu0 %v3056
    %3082 = vmatprep.subr.mxu0 0.0
    %3083 = vmatpush1.msra.mxu0 %v3057
    %3084 = vmatprep.subr.mxu0 0.0
    %3085 = vmatpush1.msra.mxu0 %v3058
    %3086 = vmatprep.subr.mxu0 0.0
    %3087 = vmatpush1.msra.mxu0 %v3059
    %3088 = vmatprep.subr.mxu0 0.0
    %3089 = vmatpush1.msra.mxu0 %v3060
    %3090 = vmatprep.subr.mxu0 0.0
    %3091 = vmatpush1.msra.mxu0 %v3061
    %3092 = vmatprep.subr.mxu0 0.0
    %3093 = vmatpush1.msra.mxu0 %v3062
    %3094 = vmatprep.subr.mxu0 0.0
    %3095 = vmatpush1.msra.mxu0 %v3063
    %3096 = vmatprep.subr.mxu0 0.0
    %3097 = vmatpush1.msra.mxu0 0.0
    %3098 = vmatprep.subr.mxu0 0.0
    %3099 = vmatpush1.msra.mxu0 0.0
    %3100 = vmatprep.subr.mxu0 0.0
    %3101 = vmatpush1.msra.mxu0 0.0
    %3102 = vmatprep.subr.mxu0 0.0
    %3103 = vmatpush1.msra.mxu0 0.0
    %3104 = vmatprep.subr.mxu0 0.0
    %3105 = vmatpush1.msra.mxu0 0.0
    %3106 = vmatprep.subr.mxu0 0.0
    %3107 = vmatpush1.msra.mxu0 0.0
    %3108 = vmatprep.subr.mxu0 0.0
    %3109 = vmatpush1.msra.mxu0 0.0
    %3110 = vmatprep.subr.mxu0 0.0
    %3111 = vmatpush1.msra.mxu0 0.0
    %3112 = vmatprep.subr.mxu0 0.0
    %3113 = vmatpush1.msra.mxu0 0.0
    %3114 = vmatprep.subr.mxu0 0.0
    %3115 = vmatpush1.msra.mxu0 0.0
    %3116 = vmatprep.subr.mxu0 0.0
    %3117 = vmatpush1.msra.mxu0 0.0
    %3118 = vmatprep.subr.mxu0 0.0
    %3119 = vmatpush1.msra.mxu0 0.0
    %3120 = vmatprep.subr.mxu0 0.0
    %3121 = vmatpush1.msra.mxu0 0.0
    %3122 = vmatprep.subr.mxu0 0.0
    %3123 = vmatpush1.msra.mxu0 0.0
    %3124 = vmatprep.subr.mxu0 0.0
    %3125 = vmatpush1.msra.mxu0 0.0
    %3126 = vmatprep.subr.mxu0 0.0
    %3127 = vmatpush1.msra.mxu0 0.0
    %3128 = vmatprep.mubr.f32.mxu0 0.0
    %3129 = vmatmul.mubr.f32.gmra.mrb[0].mxu0 %v3045
    %v3130 = vpop.f32.mrb[0].mxu0
    %v3131 = vadd.f32 0.0, %v3130
    %v3132 = vpop.f32.mrb[0].mxu0
    %3133 = vmatprep.mubr.f32.mxu0 0.0
    %3134 = vmatmul.mubr.f32.gmra.mrb[0].mxu0 %v3046
    %v3135 = vpop.f32.mrb[0].mxu0
    %v3136 = vadd.f32 0.0, %v3135
    %v3137 = vpop.f32.mrb[0].mxu0
    %3138 = vdwg.mxu0
    %v3139 = vadd.f32 %v2903, %v3131
    %v3140 = vadd.f32 %v2904, %v3136
    %s3141 = scalar_lea.vmem [#allocation29], 2
    %v3142 = vld [vmem:[%s3141] sm:$0x1]
    %v3144 = vlaneseq
    %v3145 = vshrl.u32 %v3144, 7
    %v3146 = vsub.s32 0, %v3145
    %v3147 = vrot.slane %v3142, %v3146
    %v3149 = vadd.f32 %v3139, %v3147
    %v3150 = vadd.f32 %v3140, %v3147
    %3151 = vrot.lane.b32.xlu0 %v2298, 32
    %v3152 = vpop.permute.xlu0 %3151
    %3153 = vrot.lane.b32.xlu0 %v2303, 32
    %v3154 = vpop.permute.xlu0 %3153
    %v3157 = vadd.f32 %v3149, %v3152
    %v3158 = vadd.f32 %v3150, %v3154
    %s3159 = scalar_lea.vmem [#allocation23], 3
    %v3160 = vld [vmem:[%s3159] sm:$0x1]
    %s3161 = scalar_lea.vmem [#allocation25], 3
    %v3162 = vld [vmem:[%s3161] sm:$0x1]
    %v3163 = vsel %vm2144, %v3157, 0.0
    %3164 = vadd.xlane.f32.xlu0 %v3163
    %v3165 = vpop.xlane.xlu0 %3164
    %v3166 = vsel %vm2144, %v3158, 0.0
    %3167 = vadd.xlane.f32.xlu0 %v3166
    %v3168 = vpop.xlane.xlu0 %3167
    %v3169 = vmul.f32 %v3165, %v2408
    %v3170 = vmul.f32 %v3168, %v2408
    %v3171 = vsub.f32 %v3157, %v3169
    %v3172 = vsub.f32 %v3158, %v3170
    %v3173 = vmul.f32 %v3171, %v3171
    %v3174 = vmul.f32 %v3172, %v3172
    %v3175 = vsel %vm2144, %v3173, 0.0
    %3176 = vadd.xlane.f32.xlu0 %v3175
    %v3177 = vpop.xlane.xlu0 %3176
    %v3178 = vsel %vm2144, %v3174, 0.0
    %3179 = vadd.xlane.f32.xlu0 %v3178
    %v3180 = vpop.xlane.xlu0 %3179
    %v3181 = vmul.f32 %v3177, %v2408
    %v3182 = vmul.f32 %v3180, %v2408
    %v3183 = vadd.f32 %v3181, 1e-05
    %v3184 = vadd.f32 %v3182, 1e-05
    %v3185 = vrsqrt.pop %v3183
    %v3186 = vrsqrt.pop %v3184
    %v3187 = vmul.f32 %v3171, %v3185
    %v3188 = vmul.f32 %v3172, %v3186
    %v3190 = vlaneseq
    %v3191 = vshrl.u32 %v3190, 7
    %v3192 = vsub.s32 0, %v3191
    %v3193 = vrot.slane %v3160, %v3192
    %v3195 = vmul.f32 %v3187, %v3193
    %v3196 = vmul.f32 %v3188, %v3193
    %v3198 = vlaneseq
    %v3199 = vshrl.u32 %v3198, 7
    %v3200 = vsub.s32 0, %v3199
    %v3201 = vrot.slane %v3162, %v3200
    %v3203 = vadd.f32 %v3195, %v3201
    %v3204 = vadd.f32 %v3196, %v3201
    %s3205 = scalar_lea.vmem [#allocation26], 96
    %v3206 = vld [vmem:[%s3205] sm:$0xff]
    %v3207 = vld [vmem:[%s3205 + $0x8] sm:$0xff]
    %v3208 = vld [vmem:[%s3205 + $0x10] sm:$0xff]
    %v3209 = vld [vmem:[%s3205 + $0x18] sm:$0xff]
    %s3210 = scalar_lea.vmem [#allocation28], 3
    %v3211 = vld [vmem:[%s3210] sm:$0x1]
    %v3213 = vlaneseq
    %v3214 = vshrl.u32 %v3213, 7
    %v3215 = vsub.s32 0, %v3214
    %v3216 = vrot.slane %v3211, %v3215
    %v3219 = vsel %vm2144, %v3203, 0
    %v3222 = vsel %vm2144, %v3204, 0
    %3224 = vmatprep.subr.mxu0 0.0
    %3225 = vmatpush1.msra.mxu0 %v3206
    %3226 = vmatprep.subr.mxu0 0.0
    %3227 = vmatpush1.msra.mxu0 %v3207
    %3228 = vmatprep.subr.mxu0 0.0
    %3229 = vmatpush1.msra.mxu0 %v3208
    %3230 = vmatprep.subr.mxu0 0.0
    %3231 = vmatpush1.msra.mxu0 %v3209
    %3232 = vmatprep.subr.mxu0 0.0
    %3233 = vmatpush1.msra.mxu0 0.0
    %3234 = vmatprep.subr.mxu0 0.0
    %3235 = vmatpush1.msra.mxu0 0.0
    %3236 = vmatprep.subr.mxu0 0.0
    %3237 = vmatpush1.msra.mxu0 0.0
    %3238 = vmatprep.subr.mxu0 0.0
    %3239 = vmatpush1.msra.mxu0 0.0
    %3240 = vmatprep.subr.mxu0 0.0
    %3241 = vmatpush1.msra.mxu0 0.0
    %3242 = vmatprep.subr.mxu0 0.0
    %3243 = vmatpush1.msra.mxu0 0.0
    %3244 = vmatprep.subr.mxu0 0.0
    %3245 = vmatpush1.msra.mxu0 0.0
    %3246 = vmatprep.subr.mxu0 0.0
    %3247 = vmatpush1.msra.mxu0 0.0
    %3248 = vmatprep.subr.mxu0 0.0
    %3249 = vmatpush1.msra.mxu0 0.0
    %3250 = vmatprep.subr.mxu0 0.0
    %3251 = vmatpush1.msra.mxu0 0.0
    %3252 = vmatprep.subr.mxu0 0.0
    %3253 = vmatpush1.msra.mxu0 0.0
    %3254 = vmatprep.subr.mxu0 0.0
    %3255 = vmatpush1.msra.mxu0 0.0
    %3256 = vmatprep.subr.mxu0 0.0
    %3257 = vmatpush1.msra.mxu0 0.0
    %3258 = vmatprep.subr.mxu0 0.0
    %3259 = vmatpush1.msra.mxu0 0.0
    %3260 = vmatprep.subr.mxu0 0.0
    %3261 = vmatpush1.msra.mxu0 0.0
    %3262 = vmatprep.subr.mxu0 0.0
    %3263 = vmatpush1.msra.mxu0 0.0
    %3264 = vmatprep.subr.mxu0 0.0
    %3265 = vmatpush1.msra.mxu0 0.0
    %3266 = vmatprep.subr.mxu0 0.0
    %3267 = vmatpush1.msra.mxu0 0.0
    %3268 = vmatprep.subr.mxu0 0.0
    %3269 = vmatpush1.msra.mxu0 0.0
    %3270 = vmatprep.subr.mxu0 0.0
    %3271 = vmatpush1.msra.mxu0 0.0
    %3272 = vmatprep.subr.mxu0 0.0
    %3273 = vmatpush1.msra.mxu0 0.0
    %3274 = vmatprep.subr.mxu0 0.0
    %3275 = vmatpush1.msra.mxu0 0.0
    %3276 = vmatprep.subr.mxu0 0.0
    %3277 = vmatpush1.msra.mxu0 0.0
    %3278 = vmatprep.subr.mxu0 0.0
    %3279 = vmatpush1.msra.mxu0 0.0
    %3280 = vmatprep.subr.mxu0 0.0
    %3281 = vmatpush1.msra.mxu0 0.0
    %3282 = vmatprep.subr.mxu0 0.0
    %3283 = vmatpush1.msra.mxu0 0.0
    %3284 = vmatprep.subr.mxu0 0.0
    %3285 = vmatpush1.msra.mxu0 0.0
    %3286 = vmatprep.subr.mxu0 0.0
    %3287 = vmatpush1.msra.mxu0 0.0
    %3288 = vmatprep.mubr.f32.mxu0 0.0
    %3289 = vmatmul.mubr.f32.gmra.mrb[0].mxu0 %v3219
    %v3290 = vpop.f32.mrb[0].mxu0
    %v3291 = vadd.f32 %v3216, %v3290
    %v3292 = vpop.f32.mrb[0].mxu0
    %3293 = vmatprep.mubr.f32.mxu0 0.0
    %3294 = vmatmul.mubr.f32.gmra.mrb[0].mxu0 %v3222
    %v3295 = vpop.f32.mrb[0].mxu0
    %v3296 = vadd.f32 %v3216, %v3295
    %v3297 = vpop.f32.mrb[0].mxu0
    %3298 = vdwg.mxu0
    %v3299 = vmax.f32 %v3291, 0.0
    %v3300 = vmax.f32 %v3296, 0.0
    %s3301 = scalar_lea.vmem %s43, 384
    %v3302 = vld [vmem:[%s3301] sm:$0xff]
    %v3303 = vld [vmem:[%s3301 + $0x8] sm:$0xff]
    %v3304 = vld [vmem:[%s3301 + $0x10] sm:$0xff]
    %v3305 = vld [vmem:[%s3301 + $0x18] sm:$0xff]
    %v3306 = vld [vmem:[%s3301 + $0x20] sm:$0xff]
    %v3307 = vld [vmem:[%s3301 + $0x28] sm:$0xff]
    %v3308 = vld [vmem:[%s3301 + $0x30] sm:$0xff]
    %v3309 = vld [vmem:[%s3301 + $0x38] sm:$0xff]
    %v3310 = vld [vmem:[%s3301 + $0x40] sm:$0xff]
    %v3311 = vld [vmem:[%s3301 + $0x48] sm:$0xff]
    %v3312 = vld [vmem:[%s3301 + $0x50] sm:$0xff]
    %v3313 = vld [vmem:[%s3301 + $0x58] sm:$0xff]
    %v3314 = vld [vmem:[%s3301 + $0x60] sm:$0xff]
    %v3315 = vld [vmem:[%s3301 + $0x68] sm:$0xff]
    %v3316 = vld [vmem:[%s3301 + $0x70] sm:$0xff]
    %v3317 = vld [vmem:[%s3301 + $0x78] sm:$0xff]
    %3318 = vmatprep.subr.mxu0 0.0
    %3319 = vmatpush1.msra.mxu0 %v3302
    %3320 = vmatprep.subr.mxu0 0.0
    %3321 = vmatpush1.msra.mxu0 %v3303
    %3322 = vmatprep.subr.mxu0 0.0
    %3323 = vmatpush1.msra.mxu0 %v3304
    %3324 = vmatprep.subr.mxu0 0.0
    %3325 = vmatpush1.msra.mxu0 %v3305
    %3326 = vmatprep.subr.mxu0 0.0
    %3327 = vmatpush1.msra.mxu0 %v3306
    %3328 = vmatprep.subr.mxu0 0.0
    %3329 = vmatpush1.msra.mxu0 %v3307
    %3330 = vmatprep.subr.mxu0 0.0
    %3331 = vmatpush1.msra.mxu0 %v3308
    %3332 = vmatprep.subr.mxu0 0.0
    %3333 = vmatpush1.msra.mxu0 %v3309
    %3334 = vmatprep.subr.mxu0 0.0
    %3335 = vmatpush1.msra.mxu0 %v3310
    %3336 = vmatprep.subr.mxu0 0.0
    %3337 = vmatpush1.msra.mxu0 %v3311
    %3338 = vmatprep.subr.mxu0 0.0
    %3339 = vmatpush1.msra.mxu0 %v3312
    %3340 = vmatprep.subr.mxu0 0.0
    %3341 = vmatpush1.msra.mxu0 %v3313
    %3342 = vmatprep.subr.mxu0 0.0
    %3343 = vmatpush1.msra.mxu0 %v3314
    %3344 = vmatprep.subr.mxu0 0.0
    %3345 = vmatpush1.msra.mxu0 %v3315
    %3346 = vmatprep.subr.mxu0 0.0
    %3347 = vmatpush1.msra.mxu0 %v3316
    %3348 = vmatprep.subr.mxu0 0.0
    %3349 = vmatpush1.msra.mxu0 %v3317
    %3350 = vmatprep.subr.mxu0 0.0
    %3351 = vmatpush1.msra.mxu0 0.0
    %3352 = vmatprep.subr.mxu0 0.0
    %3353 = vmatpush1.msra.mxu0 0.0
    %3354 = vmatprep.subr.mxu0 0.0
    %3355 = vmatpush1.msra.mxu0 0.0
    %3356 = vmatprep.subr.mxu0 0.0
    %3357 = vmatpush1.msra.mxu0 0.0
    %3358 = vmatprep.subr.mxu0 0.0
    %3359 = vmatpush1.msra.mxu0 0.0
    %3360 = vmatprep.subr.mxu0 0.0
    %3361 = vmatpush1.msra.mxu0 0.0
    %3362 = vmatprep.subr.mxu0 0.0
    %3363 = vmatpush1.msra.mxu0 0.0
    %3364 = vmatprep.subr.mxu0 0.0
    %3365 = vmatpush1.msra.mxu0 0.0
    %3366 = vmatprep.subr.mxu0 0.0
    %3367 = vmatpush1.msra.mxu0 0.0
    %3368 = vmatprep.subr.mxu0 0.0
    %3369 = vmatpush1.msra.mxu0 0.0
    %3370 = vmatprep.subr.mxu0 0.0
    %3371 = vmatpush1.msra.mxu0 0.0
    %3372 = vmatprep.subr.mxu0 0.0
    %3373 = vmatpush1.msra.mxu0 0.0
    %3374 = vmatprep.subr.mxu0 0.0
    %3375 = vmatpush1.msra.mxu0 0.0
    %3376 = vmatprep.subr.mxu0 0.0
    %3377 = vmatpush1.msra.mxu0 0.0
    %3378 = vmatprep.subr.mxu0 0.0
    %3379 = vmatpush1.msra.mxu0 0.0
    %3380 = vmatprep.subr.mxu0 0.0
    %3381 = vmatpush1.msra.mxu0 0.0
    %3382 = vmatprep.mubr.f32.mxu0 0.0
    %3383 = vmatmul.mubr.f32.gmra.mrb[0].mxu0 %v3299
    %v3384 = vpop.f32.mrb[0].mxu0
    %v3385 = vadd.f32 0.0, %v3384
    %v3386 = vpop.f32.mrb[0].mxu0
    %3387 = vmatprep.mubr.f32.mxu0 0.0
    %3388 = vmatmul.mubr.f32.gmra.mrb[0].mxu0 %v3300
    %v3389 = vpop.f32.mrb[0].mxu0
    %v3390 = vadd.f32 0.0, %v3389
    %v3391 = vpop.f32.mrb[0].mxu0
    %3392 = vdwg.mxu0
    %v3393 = vadd.f32 %v3157, %v3385
    %v3394 = vadd.f32 %v3158, %v3390
    %s3395 = scalar_lea.vmem [#allocation29], 3
    %v3396 = vld [vmem:[%s3395] sm:$0x1]
    %v3398 = vlaneseq
    %v3399 = vshrl.u32 %v3398, 7
    %v3400 = vsub.s32 0, %v3399
    %v3401 = vrot.slane %v3396, %v3400
    %v3403 = vadd.f32 %v3393, %v3401
    %v3404 = vadd.f32 %v3394, %v3401
    %v3405 = vld [vmem:[#allocation31] sm:$0x1]
    %v3406 = vld [vmem:[#allocation32] sm:$0x1]
    %v3407 = vsel %vm2144, %v3403, 0.0
    %3408 = vadd.xlane.f32.xlu0 %v3407
    %v3409 = vpop.xlane.xlu0 %3408
    %v3410 = vsel %vm2144, %v3404, 0.0
    %3411 = vadd.xlane.f32.xlu0 %v3410
    %v3412 = vpop.xlane.xlu0 %3411
    %v3413 = vmul.f32 %v3409, %v2408
    %v3414 = vmul.f32 %v3412, %v2408
    %v3415 = vsub.f32 %v3403, %v3413
    %v3416 = vsub.f32 %v3404, %v3414
    %v3417 = vmul.f32 %v3415, %v3415
    %v3418 = vmul.f32 %v3416, %v3416
    %v3419 = vsel %vm2144, %v3417, 0.0
    %3420 = vadd.xlane.f32.xlu0 %v3419
    %v3421 = vpop.xlane.xlu0 %3420
    %v3422 = vsel %vm2144, %v3418, 0.0
    %3423 = vadd.xlane.f32.xlu0 %v3422
    %v3424 = vpop.xlane.xlu0 %3423
    %v3425 = vmul.f32 %v3421, %v2408
    %v3426 = vmul.f32 %v3424, %v2408
    %v3427 = vadd.f32 %v3425, 1e-05
    %v3428 = vadd.f32 %v3426, 1e-05
    %v3429 = vrsqrt.pop %v3427
    %v3430 = vrsqrt.pop %v3428
    %v3431 = vmul.f32 %v3415, %v3429
    %v3432 = vmul.f32 %v3416, %v3430
    %v3434 = vlaneseq
    %v3435 = vshrl.u32 %v3434, 7
    %v3436 = vsub.s32 0, %v3435
    %v3437 = vrot.slane %v3405, %v3436
    %v3439 = vmul.f32 %v3431, %v3437
    %v3440 = vmul.f32 %v3432, %v3437
    %v3442 = vlaneseq
    %v3443 = vshrl.u32 %v3442, 7
    %v3444 = vsub.s32 0, %v3443
    %v3445 = vrot.slane %v3406, %v3444
    %v3447 = vadd.f32 %v3439, %v3445
    %v3448 = vadd.f32 %v3440, %v3445
    %v3449 = vld [vmem:[#allocation34] sm:$0xff]
    %v3450 = vld [vmem:[#allocation34 + $0x8] sm:$0xff]
    %v3451 = vld [vmem:[#allocation34 + $0x10] sm:$0xff]
    %v3452 = vld [vmem:[#allocation34 + $0x18] sm:$0xff]
    %v3453 = vld [vmem:[#allocation34 + $0x20] sm:$0xff]
    %v3454 = vld [vmem:[#allocation34 + $0x28] sm:$0xff]
    %v3455 = vld [vmem:[#allocation34 + $0x30] sm:$0xff]
    %v3456 = vld [vmem:[#allocation34 + $0x38] sm:$0xff]
    %v3458 = vsel %vm2144, %v3447, 0
    %v3461 = vsel %vm2144, %v3448, 0
    %3463 = vmatprep.subr.mxu0 %v3450
    %3464 = vmatpush1.msra.mxu0 %v3449
    %3465 = vmatprep.subr.mxu0 %v3452
    %3466 = vmatpush1.msra.mxu0 %v3451
    %3467 = vmatprep.subr.mxu0 %v3454
    %3468 = vmatpush1.msra.mxu0 %v3453
    %3469 = vmatprep.subr.mxu0 %v3456
    %3470 = vmatpush1.msra.mxu0 %v3455
    %3471 = vmatprep.subr.mxu0 0.0
    %3472 = vmatpush1.msra.mxu0 0.0
    %3473 = vmatprep.subr.mxu0 0.0
    %3474 = vmatpush1.msra.mxu0 0.0
    %3475 = vmatprep.subr.mxu0 0.0
    %3476 = vmatpush1.msra.mxu0 0.0
    %3477 = vmatprep.subr.mxu0 0.0
    %3478 = vmatpush1.msra.mxu0 0.0
    %3479 = vmatprep.subr.mxu0 0.0
    %3480 = vmatpush1.msra.mxu0 0.0
    %3481 = vmatprep.subr.mxu0 0.0
    %3482 = vmatpush1.msra.mxu0 0.0
    %3483 = vmatprep.subr.mxu0 0.0
    %3484 = vmatpush1.msra.mxu0 0.0
    %3485 = vmatprep.subr.mxu0 0.0
    %3486 = vmatpush1.msra.mxu0 0.0
    %3487 = vmatprep.subr.mxu0 0.0
    %3488 = vmatpush1.msra.mxu0 0.0
    %3489 = vmatprep.subr.mxu0 0.0
    %3490 = vmatpush1.msra.mxu0 0.0
    %3491 = vmatprep.subr.mxu0 0.0
    %3492 = vmatpush1.msra.mxu0 0.0
    %3493 = vmatprep.subr.mxu0 0.0
    %3494 = vmatpush1.msra.mxu0 0.0
    %3495 = vmatprep.subr.mxu0 0.0
    %3496 = vmatpush1.msra.mxu0 0.0
    %3497 = vmatprep.subr.mxu0 0.0
    %3498 = vmatpush1.msra.mxu0 0.0
    %3499 = vmatprep.subr.mxu0 0.0
    %3500 = vmatpush1.msra.mxu0 0.0
    %3501 = vmatprep.subr.mxu0 0.0
    %3502 = vmatpush1.msra.mxu0 0.0
    %3503 = vmatprep.subr.mxu0 0.0
    %3504 = vmatpush1.msra.mxu0 0.0
    %3505 = vmatprep.subr.mxu0 0.0
    %3506 = vmatpush1.msra.mxu0 0.0
    %3507 = vmatprep.subr.mxu0 0.0
    %3508 = vmatpush1.msra.mxu0 0.0
    %3509 = vmatprep.subr.mxu0 0.0
    %3510 = vmatpush1.msra.mxu0 0.0
    %3511 = vmatprep.subr.mxu0 0.0
    %3512 = vmatpush1.msra.mxu0 0.0
    %3513 = vmatprep.subr.mxu0 0.0
    %3514 = vmatpush1.msra.mxu0 0.0
    %3515 = vmatprep.subr.mxu0 0.0
    %3516 = vmatpush1.msra.mxu0 0.0
    %3517 = vmatprep.subr.mxu0 0.0
    %3518 = vmatpush1.msra.mxu0 0.0
    %3519 = vmatprep.subr.mxu0 0.0
    %3520 = vmatpush1.msra.mxu0 0.0
    %3521 = vmatprep.subr.mxu0 0.0
    %3522 = vmatpush1.msra.mxu0 0.0
    %3523 = vmatprep.subr.mxu0 0.0
    %3524 = vmatpush1.msra.mxu0 0.0
    %3525 = vmatprep.subr.mxu0 0.0
    %3526 = vmatpush1.msra.mxu0 0.0
    %3527 = vmatprep.mubr.f32.mxu0 0.0
    %3528 = vmatmul.mubr.f32.gmra.mrb[0].mxu0 %v3458
    %v3529 = vpop.f32.mrb[0].mxu0
    %v3530 = vadd.f32 0.0, %v3529
    %v3531 = vpop.f32.mrb[0].mxu0
    %v3532 = vadd.f32 0.0, %v3531
    %3533 = vmatprep.mubr.f32.mxu0 0.0
    %3534 = vmatmul.mubr.f32.gmra.mrb[0].mxu0 %v3461
    %v3535 = vpop.f32.mrb[0].mxu0
    %v3536 = vadd.f32 0.0, %v3535
    %v3537 = vpop.f32.mrb[0].mxu0
    %v3538 = vadd.f32 0.0, %v3537
    %3539 = vdwg.mxu0
    %v3540 = vld [vmem:[%s55] sm:$0xff]
    %v3541 = vld [vmem:[%s55 + $0x8] sm:$0xff]
    %v3542 = vld [vmem:[%s55 + $0x10] sm:$0xff]
    %v3543 = vld [vmem:[%s55 + $0x18] sm:$0xff]
    %v3544 = vmul.f32 %v3530, %v3540
    %v3545 = vmul.f32 %v3532, %v3541
    %v3546 = vmul.f32 %v3536, %v3542
    %v3547 = vmul.f32 %v3538, %v3543
    %v3548 = vld [vmem:[%s57] sm:$0xff]
    %v3549 = vld [vmem:[%s57 + $0x8] sm:$0xff]
    %v3550 = vld [vmem:[%s57 + $0x10] sm:$0xff]
    %v3551 = vld [vmem:[%s57 + $0x18] sm:$0xff]
    %v3552 = vld [vmem:[%s57 + $0x20] sm:$0xff]
    %v3553 = vld [vmem:[%s57 + $0x28] sm:$0xff]
    %v3554 = vld [vmem:[%s57 + $0x30] sm:$0xff]
    %v3555 = vld [vmem:[%s57 + $0x38] sm:$0xff]
    %v3556 = vld [vmem:[%s57 + $0x40] sm:$0xff]
    %v3557 = vld [vmem:[%s57 + $0x48] sm:$0xff]
    %v3558 = vld [vmem:[%s57 + $0x50] sm:$0xff]
    %v3559 = vld [vmem:[%s57 + $0x58] sm:$0xff]
    %v3560 = vld [vmem:[%s57 + $0x60] sm:$0xff]
    %v3561 = vld [vmem:[%s57 + $0x68] sm:$0xff]
    %v3562 = vld [vmem:[%s57 + $0x70] sm:$0xff]
    %v3563 = vld [vmem:[%s57 + $0x78] sm:$0xff]
    %v3564 = vld [vmem:[%s57 + $0x80] sm:$0xff]
    %v3565 = vld [vmem:[%s57 + $0x88] sm:$0xff]
    %v3566 = vld [vmem:[%s57 + $0x90] sm:$0xff]
    %v3567 = vld [vmem:[%s57 + $0x98] sm:$0xff]
    %v3568 = vld [vmem:[%s57 + $0xa0] sm:$0xff]
    %v3569 = vld [vmem:[%s57 + $0xa8] sm:$0xff]
    %v3570 = vld [vmem:[%s57 + $0xb0] sm:$0xff]
    %v3571 = vld [vmem:[%s57 + $0xb8] sm:$0xff]
    %v3572 = vld [vmem:[%s57 + $0xc0] sm:$0xff]
    %v3573 = vld [vmem:[%s57 + $0xc8] sm:$0xff]
    %v3574 = vld [vmem:[%s57 + $0xd0] sm:$0xff]
    %v3575 = vld [vmem:[%s57 + $0xd8] sm:$0xff]
    %v3576 = vld [vmem:[%s57 + $0xe0] sm:$0xff]
    %v3577 = vld [vmem:[%s57 + $0xe8] sm:$0xff]
    %v3578 = vld [vmem:[%s57 + $0xf0] sm:$0xff]
    %v3579 = vld [vmem:[%s57 + $0xf8] sm:$0xff]
    %3580 = vmatprep.subr.mxu0 0.0
    %3581 = vmatpush1.msra.mxu0 %v3548
    %3582 = vmatprep.subr.mxu0 0.0
    %3583 = vmatpush1.msra.mxu0 %v3549
    %3584 = vmatprep.subr.mxu0 0.0
    %3585 = vmatpush1.msra.mxu0 %v3550
    %3586 = vmatprep.subr.mxu0 0.0
    %3587 = vmatpush1.msra.mxu0 %v3551
    %3588 = vmatprep.subr.mxu0 0.0
    %3589 = vmatpush1.msra.mxu0 %v3552
    %3590 = vmatprep.subr.mxu0 0.0
    %3591 = vmatpush1.msra.mxu0 %v3553
    %3592 = vmatprep.subr.mxu0 0.0
    %3593 = vmatpush1.msra.mxu0 %v3554
    %3594 = vmatprep.subr.mxu0 0.0
    %3595 = vmatpush1.msra.mxu0 %v3555
    %3596 = vmatprep.subr.mxu0 0.0
    %3597 = vmatpush1.msra.mxu0 %v3556
    %3598 = vmatprep.subr.mxu0 0.0
    %3599 = vmatpush1.msra.mxu0 %v3557
    %3600 = vmatprep.subr.mxu0 0.0
    %3601 = vmatpush1.msra.mxu0 %v3558
    %3602 = vmatprep.subr.mxu0 0.0
    %3603 = vmatpush1.msra.mxu0 %v3559
    %3604 = vmatprep.subr.mxu0 0.0
    %3605 = vmatpush1.msra.mxu0 %v3560
    %3606 = vmatprep.subr.mxu0 0.0
    %3607 = vmatpush1.msra.mxu0 %v3561
    %3608 = vmatprep.subr.mxu0 0.0
    %3609 = vmatpush1.msra.mxu0 %v3562
    %3610 = vmatprep.subr.mxu0 0.0
    %3611 = vmatpush1.msra.mxu0 %v3563
    %3612 = vmatprep.subr.mxu0 0.0
    %3613 = vmatpush1.msra.mxu0 %v3564
    %3614 = vmatprep.subr.mxu0 0.0
    %3615 = vmatpush1.msra.mxu0 %v3565
    %3616 = vmatprep.subr.mxu0 0.0
    %3617 = vmatpush1.msra.mxu0 %v3566
    %3618 = vmatprep.subr.mxu0 0.0
    %3619 = vmatpush1.msra.mxu0 %v3567
    %3620 = vmatprep.subr.mxu0 0.0
    %3621 = vmatpush1.msra.mxu0 %v3568
    %3622 = vmatprep.subr.mxu0 0.0
    %3623 = vmatpush1.msra.mxu0 %v3569
    %3624 = vmatprep.subr.mxu0 0.0
    %3625 = vmatpush1.msra.mxu0 %v3570
    %3626 = vmatprep.subr.mxu0 0.0
    %3627 = vmatpush1.msra.mxu0 %v3571
    %3628 = vmatprep.subr.mxu0 0.0
    %3629 = vmatpush1.msra.mxu0 %v3572
    %3630 = vmatprep.subr.mxu0 0.0
    %3631 = vmatpush1.msra.mxu0 %v3573
    %3632 = vmatprep.subr.mxu0 0.0
    %3633 = vmatpush1.msra.mxu0 %v3574
    %3634 = vmatprep.subr.mxu0 0.0
    %3635 = vmatpush1.msra.mxu0 %v3575
    %3636 = vmatprep.subr.mxu0 0.0
    %3637 = vmatpush1.msra.mxu0 %v3576
    %3638 = vmatprep.subr.mxu0 0.0
    %3639 = vmatpush1.msra.mxu0 %v3577
    %3640 = vmatprep.subr.mxu0 0.0
    %3641 = vmatpush1.msra.mxu0 %v3578
    %3642 = vmatprep.subr.mxu0 0.0
    %3643 = vmatpush1.msra.mxu0 %v3579
    %3644 = vmatprep.mubr.f32.mxu0 %v3545
    %3645 = vmatmul.mubr.f32.gmra.mrb[0].mxu0 %v3544
    %v3646 = vpop.f32.mrb[0].mxu0
    %v3647 = vadd.f32 0.0, %v3646
    %v3648 = vpop.f32.mrb[0].mxu0
    %3649 = vmatprep.mubr.f32.mxu0 %v3547
    %3650 = vmatmul.mubr.f32.gmra.mrb[0].mxu0 %v3546
    %v3651 = vpop.f32.mrb[0].mxu0
    %v3652 = vadd.f32 0.0, %v3651
    %v3653 = vpop.f32.mrb[0].mxu0
    %3654 = vdwg.mxu0
    %v3655 = vld [vmem:[%s59] sm:$0x3]
    %v3656 = vld [vmem:[#allocation35] sm:$0x1]
    %v3658 = vlaneseq
    %v3659 = vshrl.u32 %v3658, 7
    %v3660 = vsub.s32 0, %v3659
    %v3661 = vrot.slane %v3656, %v3660
    %vm3663 = vcmask 130048
    %v3665 = vsel %vm3663, %v3655, 0
    %3667 = vmatprep.subr.mxu0 0.0
    %3668 = vmatpush1.msra.mxu0 %v3647
    %3669 = vmatprep.subr.mxu0 0.0
    %3670 = vmatpush1.msra.mxu0 %v3652
    %3671 = vmatprep.subr.mxu0 0.0
    %3672 = vmatpush1.msra.mxu0 0.0
    %3673 = vmatprep.subr.mxu0 0.0
    %3674 = vmatpush1.msra.mxu0 0.0
    %3675 = vmatprep.subr.mxu0 0.0
    %3676 = vmatpush1.msra.mxu0 0.0
    %3677 = vmatprep.subr.mxu0 0.0
    %3678 = vmatpush1.msra.mxu0 0.0
    %3679 = vmatprep.subr.mxu0 0.0
    %3680 = vmatpush1.msra.mxu0 0.0
    %3681 = vmatprep.subr.mxu0 0.0
    %3682 = vmatpush1.msra.mxu0 0.0
    %3683 = vmatprep.subr.mxu0 0.0
    %3684 = vmatpush1.msra.mxu0 0.0
    %3685 = vmatprep.subr.mxu0 0.0
    %3686 = vmatpush1.msra.mxu0 0.0
    %3687 = vmatprep.subr.mxu0 0.0
    %3688 = vmatpush1.msra.mxu0 0.0
    %3689 = vmatprep.subr.mxu0 0.0
    %3690 = vmatpush1.msra.mxu0 0.0
    %3691 = vmatprep.subr.mxu0 0.0
    %3692 = vmatpush1.msra.mxu0 0.0
    %3693 = vmatprep.subr.mxu0 0.0
    %3694 = vmatpush1.msra.mxu0 0.0
    %3695 = vmatprep.subr.mxu0 0.0
    %3696 = vmatpush1.msra.mxu0 0.0
    %3697 = vmatprep.subr.mxu0 0.0
    %3698 = vmatpush1.msra.mxu0 0.0
    %3699 = vmatprep.subr.mxu0 0.0
    %3700 = vmatpush1.msra.mxu0 0.0
    %3701 = vmatprep.subr.mxu0 0.0
    %3702 = vmatpush1.msra.mxu0 0.0
    %3703 = vmatprep.subr.mxu0 0.0
    %3704 = vmatpush1.msra.mxu0 0.0
    %3705 = vmatprep.subr.mxu0 0.0
    %3706 = vmatpush1.msra.mxu0 0.0
    %3707 = vmatprep.subr.mxu0 0.0
    %3708 = vmatpush1.msra.mxu0 0.0
    %3709 = vmatprep.subr.mxu0 0.0
    %3710 = vmatpush1.msra.mxu0 0.0
    %3711 = vmatprep.subr.mxu0 0.0
    %3712 = vmatpush1.msra.mxu0 0.0
    %3713 = vmatprep.subr.mxu0 0.0
    %3714 = vmatpush1.msra.mxu0 0.0
    %3715 = vmatprep.subr.mxu0 0.0
    %3716 = vmatpush1.msra.mxu0 0.0
    %3717 = vmatprep.subr.mxu0 0.0
    %3718 = vmatpush1.msra.mxu0 0.0
    %3719 = vmatprep.subr.mxu0 0.0
    %3720 = vmatpush1.msra.mxu0 0.0
    %3721 = vmatprep.subr.mxu0 0.0
    %3722 = vmatpush1.msra.mxu0 0.0
    %3723 = vmatprep.subr.mxu0 0.0
    %3724 = vmatpush1.msra.mxu0 0.0
    %3725 = vmatprep.subr.mxu0 0.0
    %3726 = vmatpush1.msra.mxu0 0.0
    %3727 = vmatprep.subr.mxu0 0.0
    %3728 = vmatpush1.msra.mxu0 0.0
    %3729 = vmatprep.subr.mxu0 0.0
    %3730 = vmatpush1.msra.mxu0 0.0
    %3731 = vmatprep.mubr.f32.mxu0 0.0
    %3732 = vmatmul.mubr.f32.gmra.mrb[0].mxu0 %v3665
    %v3733 = vpop.f32.mrb[0].mxu0
    %v3734 = vadd.f32 %v3661, %v3733
    %v3735 = vpop.f32.mrb[0].mxu0
    %3736 = vdwg.mxu0
    %vm3737 = vcmask 254976
    %3738 = vst.msk [vmem:[#allocation37] sm:$0x3] %vm3737, %v3734
    // Predicated region
    $region210: #{robot_state_vision_encoder.1} parent=1 // pred_check
      _
    $region211: #{robot_state_vision_encoder.1} parent=1 // pred_check_branch
      %3740 = sbr.rel (0) target = $region213
    $region212: #{robot_state_vision_encoder.1} parent=1 // pred_region
      %s3742 = ssub.s32 32, 32
      %3743 = vsyncadd [#allocation4], %s3742
      %s3745 = sshll.u32 [#allocation37], 4
      %s3746 = int_to_ptr.vmem [resolvable:$true] %s3745
      %3748 = dma.vmem_to_hbm [thread:$0]  %s3746, 32, %s61, [#allocation4]
    $region213: #{robot_state_vision_encoder.1} parent=1 // pred_fallthru
      _
    // Predicated region
    $region214: #{robot_state_vision_encoder.1} parent=1 // pred_check
      _
    $region215: #{robot_state_vision_encoder.1} parent=1 // pred_check_branch
      %3750 = sbr.rel (0) target = $region217
    $region216: #{robot_state_vision_encoder.1} parent=1 // pred_region
      %3751 = dma.done [#allocation4], 32
    $region217: #{robot_state_vision_encoder.1} parent=1 // pred_fallthru
      _
    %3752 = vsyncpa [#allocation3], 1
    %3753 = vsyncpa [#allocation6], 1
    %3754 = vsyncpa [#allocation9], 1
    %3755 = vsyncpa [#allocation12], 1
    %3756 = vsyncpa [#allocation15], 1
    %3757 = vsyncpa [#allocation18], 1
    %3758 = vsyncpa [#allocation21], 1
    %3759 = vsyncpa [#allocation24], 1
    %3760 = vsyncpa [#allocation27], 1
    %3761 = vsyncpa [#allocation30], 1
    %3762 = vsyncpa [#allocation33], 1
    %3763 = vsyncpa [#allocation36], 1
    %3764 = vsyncpa [#allocation4], 1

</llo_original>
